<compile_context>
chip_gen: v6e
topology: v6e:2x2x1
jax: 0.10.0
libtpu: 0.0.40
codegen_flags: <defaults>
</compile_context>

<pallas_src>
import math

import numpy as np
import jax
import jax.numpy as jnp
from jax.experimental import pallas as pl
from jax.experimental.pallas import tpu as pltpu

# ----------------------------- model configuration --------------------------
IMAGE = 16          # image_size
PATCH = 8           # patch_size
CHANNELS = 4        # channels
NUM_PATCHES = (IMAGE // PATCH) * (IMAGE // PATCH)   # 4
PATCH_DIM = CHANNELS * PATCH * PATCH                # 256
DIM = 32            # dim (== HEADS * DIM_HEAD, required by Attention1 reshape)
DEPTH = 2
HEADS = 4
DIM_HEAD = 8
MLP_DIM = 64
NUM_CLASSES = 10
BATCH = 2
SEQ = NUM_PATCHES + 1                               # 5 (cls + patches)
S_PAD = 8                                           # padded seq: B*S_PAD multiple of 8
LN_EPS = 1e-5
ATTN_SCALE = 1.0 / math.sqrt(DIM_HEAD)
INV_SQRT2 = 1.0 / math.sqrt(2.0)
NEG_INF = -1e30
# dropout / emb_dropout are 0.0 -> identity at inference.

# ------------------------------ in-kernel helpers ----------------------------


def _erf(x):
    # Abramowitz & Stegun 7.1.26 (|err| < 1.5e-7); kept (instead of lax.erf) to
    # guarantee a Mosaic lowering. exp() runs on the EUP slot; constants hoisted.
    a1, a2, a3, a4, a5 = 0.254829592, -0.284496736, 1.421413741, -1.453152027, 1.061405429
    p = 0.3275911
    ax = jnp.abs(x)
    t = 1.0 / (1.0 + p * ax)
    poly = ((((a5 * t + a4) * t + a3) * t + a2) * t + a1) * t
    y = 1.0 - poly * jnp.exp(-ax * ax)
    return jnp.where(x >= 0, y, -y)


def _gelu(x):
    # exact (erf-based) GELU like torch.nn.GELU()
    return 0.5 * x * (1.0 + _erf(x * INV_SQRT2))


def _layernorm(x, g, b):
    # PyTorch LayerNorm semantics: biased variance, eps = 1e-5
    mu = jnp.mean(x, axis=-1, keepdims=True)
    d = x - mu
    var = jnp.mean(d * d, axis=-1, keepdims=True)
    return d * jax.lax.rsqrt(var + LN_EPS) * g + b


# ------------------------------ fused ViT kernel -----------------------------


def _vit_kernel(
    patches_ref,           # (B*S_PAD, PATCH_DIM)  zero rows at cls/pad slots
    base_ref,              # (B*S_PAD, DIM)        cls+pos / pos+patch_bias / zeros
    bias_ref,              # (B*S_PAD, B*S_PAD)    additive attention mask (0 / -1e30)
    sel_ref,               # (B, B*S_PAD)          one-hot rows selecting cls tokens
    patch_w_ref,           # (PATCH_DIM, DIM)
    ln1g_ref, ln1b_ref,    # (DEPTH, 1, DIM)
    wqkv_ref, bqkv_ref,    # (DEPTH, DIM, 3*DIM), (DEPTH, 1, 3*DIM)
    wo_ref, bo_ref,        # (DEPTH, DIM, DIM),   (DEPTH, 1, DIM)
    ln2g_ref, ln2b_ref,    # (DEPTH, 1, DIM)
    w1_ref, b1_ref,        # (DEPTH, DIM, MLP_DIM), (DEPTH, 1, MLP_DIM)
    w2_ref, b2_ref,        # (DEPTH, MLP_DIM, DIM), (DEPTH, 1, DIM)
    hlng_ref, hlnb_ref,    # (1, DIM)
    hw_ref, hb_ref,        # (DIM, NUM_CLASSES), (1, NUM_CLASSES)
    out_ref,               # (B, NUM_CLASSES)
):
    f32 = jnp.float32

    # patch embedding + cls token + positional embedding (pad rows stay exactly 0:
    # their patch rows are zero and their `base` rows are zero)
    x = base_ref[...] + jnp.dot(
        patches_ref[...], patch_w_ref[...], preferred_element_type=f32)   # (16, 32)
    bias = bias_ref[...]

    for l in range(DEPTH):
        # ---------------- PreNorm + multi-head self-attention ----------------
        h = _layernorm(x, ln1g_ref[l], ln1b_ref[l])
        qkv = jnp.dot(h, wqkv_ref[l], preferred_element_type=f32) + bqkv_ref[l]  # (16, 96)
        wo = wo_ref[l]                                                    # (32, 32)
        attn = bo_ref[l]                                                  # bias; broadcasts
        for hd in range(HEADS):
            lo = hd * DIM_HEAD
            q_h = qkv[:, lo:lo + DIM_HEAD]                                # (16, 8)
            k_h = qkv[:, DIM + lo:DIM + lo + DIM_HEAD]                    # (16, 8)
            v_h = qkv[:, 2 * DIM + lo:2 * DIM + lo + DIM_HEAD]            # (16, 8)
            s = jax.lax.dot_general(q_h, k_h, (((1,), (1,)), ((), ())),
                                    preferred_element_type=f32)           # (16, 16)
            s = s * ATTN_SCALE + bias          # mask pad keys / cross-batch keys
            s = s - jnp.max(s, axis=-1, keepdims=True)
            p = jnp.exp(s)
            p = p / jnp.sum(p, axis=-1, keepdims=True)
            o_h = jnp.dot(p, v_h, preferred_element_type=f32)             # (16, 8)
            # accumulate head directly into the out-projection (== concat-heads @ Wo)
            attn = attn + jnp.dot(o_h, wo[lo:lo + DIM_HEAD, :],
                                  preferred_element_type=f32)             # (16, 32)
        x = attn + x                                                      # residual

        # ---------------- PreNorm + MLP (Linear -> GELU -> Linear) -----------
        h = _layernorm(x, ln2g_ref[l], ln2b_ref[l])
        h = _gelu(jnp.dot(h, w1_ref[l], preferred_element_type=f32) + b1_ref[l])
        h = jnp.dot(h, w2_ref[l], preferred_element_type=f32) + b2_ref[l]
        x = h + x                                                         # residual

    # ---------------- cls pooling + mlp_head (LayerNorm -> Linear) -----------
    xc = jnp.dot(sel_ref[...], x, preferred_element_type=f32)             # (B, 32)
    xc = _layernorm(xc, hlng_ref[...], hlnb_ref[...])
    logits = jnp.dot(xc, hw_ref[...], preferred_element_type=f32) + hb_ref[...]
    out_ref[...] = logits.astype(out_ref.dtype)


# ------------------------------ wrapper --------------------------------------


def _full_spec(shape):
    nd = len(shape)
    return pl.BlockSpec(shape, lambda i, _nd=nd: (0,) * _nd)


def vit_forward(img, params):
    B = img.shape[0]
    R = B * S_PAD

    # glue: rearrange 'b c (h p1) (w p2) -> b (h w) (p1 p2 c)'  (no compute)
    x = img.reshape(B, CHANNELS, IMAGE // PATCH, PATCH, IMAGE // PATCH, PATCH)
    x = jnp.transpose(x, (0, 2, 4, 3, 5, 1))
    patches = x.reshape(B, NUM_PATCHES, PATCH_DIM)

    # padded patch rows: zeros at the cls slot (s=0) and pad slots (s >= SEQ)
    patches_padded = jnp.zeros((B, S_PAD, PATCH_DIM), jnp.float32)
    patches_padded = patches_padded.at[:, 1:1 + NUM_PATCHES, :].set(patches)
    patches_padded = patches_padded.reshape(R, PATCH_DIM)

    # residual "base": cls_token + pos[0] at s=0, pos[s] + patch_bias at patch slots, 0 at pads
    pos = params["pos_embedding"][0]                        # (SEQ, DIM)
    cls = params["cls_token"][0, 0]                         # (DIM,)
    base = jnp.zeros((S_PAD, DIM), jnp.float32)
    base = base.at[0].set(cls + pos[0])
    base = base.at[1:1 + NUM_PATCHES].set(pos[1:1 + NUM_PATCHES] + params["patch_b"][None, :])
    base = jnp.broadcast_to(base[None], (B, S_PAD, DIM)).reshape(R, DIM)

    # additive attention mask: (b,s) may attend (b',s') iff b == b' and s' < SEQ
    ridx = np.arange(R)
    same_batch = (ridx[:, None] // S_PAD) == (ridx[None, :] // S_PAD)
    key_valid = (ridx[None, :] % S_PAD) < SEQ
    attn_bias = jnp.asarray(np.where(same_batch & key_valid, 0.0, NEG_INF), dtype=jnp.float32)

    # one-hot selector extracting the cls row of every batch element
    sel = np.zeros((B, R), np.float32)
    sel[np.arange(B), np.arange(B) * S_PAD] = 1.0
    cls_sel = jnp.asarray(sel)

    # stack per-layer weights (with fused QKV) so the kernel indexes a layer axis
    L = params["layers"]
    ln1_g = jnp.stack([lyr["ln1_g"].reshape(1, DIM) for lyr in L])
    ln1_b = jnp.stack([lyr["ln1_b"].reshape(1, DIM) for lyr in L])
    wqkv = jnp.stack([jnp.concatenate([lyr["wq"], lyr["wk"], lyr["wv"]], axis=1) for lyr in L])
    bqkv = jnp.stack([jnp.concatenate([lyr["bq"], lyr["bk"], lyr["bv"]]).reshape(1, 3 * DIM)
                      for lyr in L])
    wo = jnp.stack([lyr["wo"] for lyr in L])
    bo = jnp.stack([lyr["bo"].reshape(1, DIM) for lyr in L])
    ln2_g = jnp.stack([lyr["ln2_g"].reshape(1, DIM) for lyr in L])
    ln2_b = jnp.stack([lyr["ln2_b"].reshape(1, DIM) for lyr in L])
    w1 = jnp.stack([lyr["w1"] for lyr in L])
    b1 = jnp.stack([lyr["b1"].reshape(1, MLP_DIM) for lyr in L])
    w2 = jnp.stack([lyr["w2"] for lyr in L])
    b2 = jnp.stack([lyr["b2"].reshape(1, DIM) for lyr in L])

    ops = [
        patches_padded, base, attn_bias, cls_sel, params["patch_w"],
        ln1_g, ln1_b, wqkv, bqkv, wo, bo, ln2_g, ln2_b, w1, b1, w2, b2,
        params["head_ln_g"].reshape(1, DIM), params["head_ln_b"].reshape(1, DIM),
        params["head_w"], params["head_b"].reshape(1, NUM_CLASSES),
    ]

    return pl.pallas_call(
        _vit_kernel,
        out_shape=jax.ShapeDtypeStruct((B, NUM_CLASSES), jnp.float32),
        grid=(1,),
        in_specs=[_full_spec(o.shape) for o in ops],
        out_specs=_full_spec((B, NUM_CLASSES)),
        compiler_params=pltpu.CompilerParams(dimension_semantics=("arbitrary",)),
    )(*ops)


# ------------------------------ pure-JAX reference ---------------------------


def vit_reference(img, params):
    B = img.shape[0]
    x = img.reshape(B, CHANNELS, IMAGE // PATCH, PATCH, IMAGE // PATCH, PATCH)
    x = jnp.transpose(x, (0, 2, 4, 3, 5, 1)).reshape(B, NUM_PATCHES, PATCH_DIM)
    x = x @ params["patch_w"] + params["patch_b"]
    cls = jnp.broadcast_to(params["cls_token"], (B, 1, DIM))
    x = jnp.concatenate([cls, x], axis=1) + params["pos_embedding"][:, :SEQ]

    def ln(v, g, b):
        mu = v.mean(-1, keepdims=True)
        var = ((v - mu) ** 2).mean(-1, keepdims=True)
        return (v - mu) / jnp.sqrt(var + LN_EPS) * g + b

    for lyr in params["layers"]:
        h = ln(x, lyr["ln1_g"], lyr["ln1_b"])
        q = (h @ lyr["wq"] + lyr["bq"]).reshape(B, SEQ, HEADS, DIM_HEAD).transpose(0, 2, 1, 3)
        k = (h @ lyr["wk"] + lyr["bk"]).reshape(B, SEQ, HEADS, DIM_HEAD).transpose(0, 2, 1, 3)
        v = (h @ lyr["wv"] + lyr["bv"]).reshape(B, SEQ, HEADS, DIM_HEAD).transpose(0, 2, 1, 3)
        s = jnp.einsum("bhqd,bhkd->bhqk", q, k) * ATTN_SCALE
        p = jax.nn.softmax(s, axis=-1)
        o = jnp.einsum("bhqk,bhkd->bhqd", p, v).transpose(0, 2, 1, 3).reshape(B, SEQ, DIM)
        x = o @ lyr["wo"] + lyr["bo"] + x
        h = ln(x, lyr["ln2_g"], lyr["ln2_b"])
        h = jax.nn.gelu(h @ lyr["w1"] + lyr["b1"], approximate=False)
        x = h @ lyr["w2"] + lyr["b2"] + x

    x = x[:, 0]
    x = ln(x, params["head_ln_g"], params["head_ln_b"])
    return x @ params["head_w"] + params["head_b"]


# ------------------------------ parameters -----------------------------------


def init_params(key):
    keys = iter(jax.random.split(key, 128))

    def nrm(shape, scale=0.02):
        return scale * jax.random.normal(next(keys), shape, dtype=jnp.float32)

    params = {
        "patch_w": nrm((PATCH_DIM, DIM)),
        "patch_b": nrm((DIM,)),
        "pos_embedding": nrm((1, NUM_PATCHES + 1, DIM), 1.0),   # torch.randn
        "cls_token": nrm((1, 1, DIM), 1.0),                     # torch.randn
        "layers": [],
        "head_ln_g": jnp.ones((DIM,), jnp.float32),
        "head_ln_b": jnp.zeros((DIM,), jnp.float32),
        "head_w": nrm((DIM, NUM_CLASSES)),
        "head_b": nrm((NUM_CLASSES,)),
    }
    for _ in range(DEPTH):
        params["layers"].append(
            {
                "ln1_g": jnp.ones((DIM,), jnp.float32),
                "ln1_b": jnp.zeros((DIM,), jnp.float32),
                "wq": nrm((DIM, DIM)), "bq": nrm((DIM,)),
                "wk": nrm((DIM, DIM)), "bk": nrm((DIM,)),
                "wv": nrm((DIM, DIM)), "bv": nrm((DIM,)),
                "wo": nrm((DIM, DIM)), "bo": nrm((DIM,)),
                "ln2_g": jnp.ones((DIM,), jnp.float32),
                "ln2_b": jnp.zeros((DIM,), jnp.float32),
                "w1": nrm((DIM, MLP_DIM)), "b1": nrm((MLP_DIM,)),
                "w2": nrm((MLP_DIM, DIM)), "b2": nrm((DIM,)),
            }
        )
    return params


# --------------------------------- main ---------------------------------------

if __name__ == "__main__":
    key = jax.random.PRNGKey(0)
    pkey, xkey = jax.random.split(key)
    params = init_params(pkey)
    img = jax.random.normal(xkey, (BATCH, CHANNELS, IMAGE, IMAGE), dtype=jnp.float32)

    fwd = jax.jit(vit_forward)
    out = jax.block_until_ready(fwd(img, params))

    assert out.shape == (BATCH, NUM_CLASSES), out.shape
    assert bool(jnp.all(jnp.isfinite(out)))

    ref = jax.jit(vit_reference)(img, params)
    max_err = float(jnp.max(jnp.abs(out - ref)))
    assert max_err < 5e-3, f"mismatch vs reference: {max_err}"

    print("KERNEL_OK")
</pallas_src>

<mosaic_0001>
module attributes {stable_mosaic.version = 11 : i64} {
  func.func @_vit_kernel(%arg0: i32, %arg1: memref<16x256xf32, #tpu.memory_space<vmem>>, %arg2: memref<16x32xf32, #tpu.memory_space<vmem>>, %arg3: memref<16x16xf32, #tpu.memory_space<vmem>>, %arg4: memref<2x16xf32, #tpu.memory_space<vmem>>, %arg5: memref<256x32xf32, #tpu.memory_space<vmem>>, %arg6: memref<2x1x32xf32, #tpu.memory_space<vmem>>, %arg7: memref<2x1x32xf32, #tpu.memory_space<vmem>>, %arg8: memref<2x32x96xf32, #tpu.memory_space<vmem>>, %arg9: memref<2x1x96xf32, #tpu.memory_space<vmem>>, %arg10: memref<2x32x32xf32, #tpu.memory_space<vmem>>, %arg11: memref<2x1x32xf32, #tpu.memory_space<vmem>>, %arg12: memref<2x1x32xf32, #tpu.memory_space<vmem>>, %arg13: memref<2x1x32xf32, #tpu.memory_space<vmem>>, %arg14: memref<2x32x64xf32, #tpu.memory_space<vmem>>, %arg15: memref<2x1x64xf32, #tpu.memory_space<vmem>>, %arg16: memref<2x64x32xf32, #tpu.memory_space<vmem>>, %arg17: memref<2x1x32xf32, #tpu.memory_space<vmem>>, %arg18: memref<1x32xf32, #tpu.memory_space<vmem>>, %arg19: memref<1x32xf32, #tpu.memory_space<vmem>>, %arg20: memref<32x10xf32, #tpu.memory_space<vmem>>, %arg21: memref<1x10xf32, #tpu.memory_space<vmem>>, %arg22: memref<2x10xf32, #tpu.memory_space<vmem>>) attributes {dimension_semantics = [#tpu.dimension_semantics<arbitrary>], iteration_bounds = array<i64: 1>, scalar_prefetch = 0 : i64, scratch_operands = 0 : i64, tpu.core_type = #tpu.core_type<tc>, window_params = [{pipeline_mode = #tpu.pipeline_mode<synchronous>, transform_indices = @transform_0, window_bounds = array<i64: 16, 256>}, {pipeline_mode = #tpu.pipeline_mode<synchronous>, transform_indices = @transform_1, window_bounds = array<i64: 16, 32>}, {pipeline_mode = #tpu.pipeline_mode<synchronous>, transform_indices = @transform_2, window_bounds = array<i64: 16, 16>}, {pipeline_mode = #tpu.pipeline_mode<synchronous>, transform_indices = @transform_3, window_bounds = array<i64: 2, 16>}, {pipeline_mode = #tpu.pipeline_mode<synchronous>, transform_indices = @transform_4, window_bounds = array<i64: 256, 32>}, {pipeline_mode = #tpu.pipeline_mode<synchronous>, transform_indices = @transform_5, window_bounds = array<i64: 2, 1, 32>}, {pipeline_mode = #tpu.pipeline_mode<synchronous>, transform_indices = @transform_6, window_bounds = array<i64: 2, 1, 32>}, {pipeline_mode = #tpu.pipeline_mode<synchronous>, transform_indices = @transform_7, window_bounds = array<i64: 2, 32, 96>}, {pipeline_mode = #tpu.pipeline_mode<synchronous>, transform_indices = @transform_8, window_bounds = array<i64: 2, 1, 96>}, {pipeline_mode = #tpu.pipeline_mode<synchronous>, transform_indices = @transform_9, window_bounds = array<i64: 2, 32, 32>}, {pipeline_mode = #tpu.pipeline_mode<synchronous>, transform_indices = @transform_10, window_bounds = array<i64: 2, 1, 32>}, {pipeline_mode = #tpu.pipeline_mode<synchronous>, transform_indices = @transform_11, window_bounds = array<i64: 2, 1, 32>}, {pipeline_mode = #tpu.pipeline_mode<synchronous>, transform_indices = @transform_12, window_bounds = array<i64: 2, 1, 32>}, {pipeline_mode = #tpu.pipeline_mode<synchronous>, transform_indices = @transform_13, window_bounds = array<i64: 2, 32, 64>}, {pipeline_mode = #tpu.pipeline_mode<synchronous>, transform_indices = @transform_14, window_bounds = array<i64: 2, 1, 64>}, {pipeline_mode = #tpu.pipeline_mode<synchronous>, transform_indices = @transform_15, window_bounds = array<i64: 2, 64, 32>}, {pipeline_mode = #tpu.pipeline_mode<synchronous>, transform_indices = @transform_16, window_bounds = array<i64: 2, 1, 32>}, {pipeline_mode = #tpu.pipeline_mode<synchronous>, transform_indices = @transform_17, window_bounds = array<i64: 1, 32>}, {pipeline_mode = #tpu.pipeline_mode<synchronous>, transform_indices = @transform_18, window_bounds = array<i64: 1, 32>}, {pipeline_mode = #tpu.pipeline_mode<synchronous>, transform_indices = @transform_19, window_bounds = array<i64: 32, 10>}, {pipeline_mode = #tpu.pipeline_mode<synchronous>, transform_indices = @transform_20, window_bounds = array<i64: 1, 10>}, {pipeline_mode = #tpu.pipeline_mode<synchronous>, transform_indices = @transform_21, window_bounds = array<i64: 2, 10>}]} {
    %c0 = arith.constant 0 : index
    %c0_0 = arith.constant 0 : index
    %0 = vector.load %arg2[%c0, %c0_0] : memref<16x32xf32, #tpu.memory_space<vmem>>, vector<16x32xf32>
    %c0_1 = arith.constant 0 : index
    %c0_2 = arith.constant 0 : index
    %1 = vector.load %arg1[%c0_1, %c0_2] : memref<16x256xf32, #tpu.memory_space<vmem>>, vector<16x256xf32>
    %c0_3 = arith.constant 0 : index
    %c0_4 = arith.constant 0 : index
    %2 = vector.load %arg5[%c0_3, %c0_4] : memref<256x32xf32, #tpu.memory_space<vmem>>, vector<256x32xf32>
    %cst = arith.constant dense<0.000000e+00> : vector<16x32xf32>
    %3 = tpu.matmul %1, %2, %cst {dimension_numbers = #tpu.dot_dimension_numbers<[1], [0], [0], [1], [0, 0, 1, 1], [], []>} : vector<16x256xf32>, vector<256x32xf32>, vector<16x32xf32> -> vector<16x32xf32>
    %4 = arith.addf %0, %3 : vector<16x32xf32>
    %c0_5 = arith.constant 0 : index
    %c0_6 = arith.constant 0 : index
    %5 = vector.load %arg3[%c0_5, %c0_6] : memref<16x16xf32, #tpu.memory_space<vmem>>, vector<16x16xf32>
    %c0_7 = arith.constant 0 : index
    %c0_8 = arith.constant 0 : index
    %c0_9 = arith.constant 0 : index
    %6 = vector.load %arg6[%c0_7, %c0_8, %c0_9] : memref<2x1x32xf32, #tpu.memory_space<vmem>>, vector<1x1x32xf32>
    %7 = vector.shape_cast %6 : vector<1x1x32xf32> to vector<1x32xf32>
    %c0_10 = arith.constant 0 : index
    %c0_11 = arith.constant 0 : index
    %c0_12 = arith.constant 0 : index
    %8 = vector.load %arg7[%c0_10, %c0_11, %c0_12] : memref<2x1x32xf32, #tpu.memory_space<vmem>>, vector<1x1x32xf32>
    %9 = vector.shape_cast %8 : vector<1x1x32xf32> to vector<1x32xf32>
    %cst_13 = arith.constant dense<0.000000e+00> : vector<16xf32>
    %10 = vector.multi_reduction <add>, %4, %cst_13 [1] : vector<16x32xf32> to vector<16xf32>
    %11 = vector.shape_cast %10 : vector<16xf32> to vector<16x1xf32>
    %cst_14 = arith.constant 3.200000e+01 : f32
    %12 = vector.broadcast %cst_14 : f32 to vector<16x1xf32>
    %13 = arith.divf %11, %12 : vector<16x1xf32>
    %14 = vector.broadcast %13 : vector<16x1xf32> to vector<16x32xf32>
    %15 = arith.subf %4, %14 : vector<16x32xf32>
    %16 = arith.mulf %15, %15 : vector<16x32xf32>
    %cst_15 = arith.constant dense<0.000000e+00> : vector<16xf32>
    %17 = vector.multi_reduction <add>, %16, %cst_15 [1] : vector<16x32xf32> to vector<16xf32>
    %18 = vector.shape_cast %17 : vector<16xf32> to vector<16x1xf32>
    %cst_16 = arith.constant 3.200000e+01 : f32
    %19 = vector.broadcast %cst_16 : f32 to vector<16x1xf32>
    %20 = arith.divf %18, %19 : vector<16x1xf32>
    %cst_17 = arith.constant 9.99999974E-6 : f32
    %21 = vector.broadcast %cst_17 : f32 to vector<16x1xf32>
    %22 = arith.addf %20, %21 : vector<16x1xf32>
    %23 = math.rsqrt %22 : vector<16x1xf32>
    %24 = vector.broadcast %23 : vector<16x1xf32> to vector<16x32xf32>
    %25 = arith.mulf %15, %24 : vector<16x32xf32>
    %26 = vector.broadcast %7 : vector<1x32xf32> to vector<16x32xf32>
    %27 = arith.mulf %25, %26 : vector<16x32xf32>
    %28 = vector.broadcast %9 : vector<1x32xf32> to vector<16x32xf32>
    %29 = arith.addf %27, %28 : vector<16x32xf32>
    %c0_18 = arith.constant 0 : index
    %c0_19 = arith.constant 0 : index
    %c0_20 = arith.constant 0 : index
    %30 = vector.load %arg8[%c0_18, %c0_19, %c0_20] : memref<2x32x96xf32, #tpu.memory_space<vmem>>, vector<1x32x96xf32>
    %31 = vector.shape_cast %30 : vector<1x32x96xf32> to vector<32x96xf32>
    %cst_21 = arith.constant dense<0.000000e+00> : vector<16x96xf32>
    %32 = tpu.matmul %29, %31, %cst_21 {dimension_numbers = #tpu.dot_dimension_numbers<[1], [0], [0], [1], [0, 0, 1, 1], [], []>} : vector<16x32xf32>, vector<32x96xf32>, vector<16x96xf32> -> vector<16x96xf32>
    %c0_22 = arith.constant 0 : index
    %c0_23 = arith.constant 0 : index
    %c0_24 = arith.constant 0 : index
    %33 = vector.load %arg9[%c0_22, %c0_23, %c0_24] : memref<2x1x96xf32, #tpu.memory_space<vmem>>, vector<1x1x96xf32>
    %34 = vector.shape_cast %33 : vector<1x1x96xf32> to vector<1x96xf32>
    %35 = vector.broadcast %34 : vector<1x96xf32> to vector<16x96xf32>
    %36 = arith.addf %32, %35 : vector<16x96xf32>
    %c0_25 = arith.constant 0 : index
    %c0_26 = arith.constant 0 : index
    %c0_27 = arith.constant 0 : index
    %37 = vector.load %arg10[%c0_25, %c0_26, %c0_27] : memref<2x32x32xf32, #tpu.memory_space<vmem>>, vector<1x32x32xf32>
    %38 = vector.shape_cast %37 : vector<1x32x32xf32> to vector<32x32xf32>
    %c0_28 = arith.constant 0 : index
    %c0_29 = arith.constant 0 : index
    %c0_30 = arith.constant 0 : index
    %39 = vector.load %arg11[%c0_28, %c0_29, %c0_30] : memref<2x1x32xf32, #tpu.memory_space<vmem>>, vector<1x1x32xf32>
    %40 = vector.shape_cast %39 : vector<1x1x32xf32> to vector<1x32xf32>
    %41 = vector.extract_strided_slice %36 {offsets = [0, 0], sizes = [16, 8], strides = [1, 1]} : vector<16x96xf32> to vector<16x8xf32>
    %42 = vector.extract_strided_slice %36 {offsets = [0, 32], sizes = [16, 8], strides = [1, 1]} : vector<16x96xf32> to vector<16x8xf32>
    %43 = vector.extract_strided_slice %36 {offsets = [0, 64], sizes = [16, 8], strides = [1, 1]} : vector<16x96xf32> to vector<16x8xf32>
    %cst_31 = arith.constant dense<0.000000e+00> : vector<16x16xf32>
    %44 = tpu.matmul %41, %42, %cst_31 {dimension_numbers = #tpu.dot_dimension_numbers<[1], [1], [0], [0], [0, 0, 1, 0], [], []>} : vector<16x8xf32>, vector<16x8xf32>, vector<16x16xf32> -> vector<16x16xf32>
    %cst_32 = arith.constant 0.353553385 : f32
    %45 = vector.broadcast %cst_32 : f32 to vector<16x16xf32>
    %46 = arith.mulf %44, %45 : vector<16x16xf32>
    %47 = arith.addf %46, %5 : vector<16x16xf32>
    %cst_33 = arith.constant dense<0xFF800000> : vector<16xf32>
    %48 = vector.multi_reduction <maximumf>, %47, %cst_33 [1] : vector<16x16xf32> to vector<16xf32>
    %49 = vector.shape_cast %48 : vector<16xf32> to vector<16x1xf32>
    %50 = vector.broadcast %49 : vector<16x1xf32> to vector<16x16xf32>
    %51 = arith.subf %47, %50 : vector<16x16xf32>
    %52 = math.exp %51 : vector<16x16xf32>
    %cst_34 = arith.constant dense<0.000000e+00> : vector<16xf32>
    %53 = vector.multi_reduction <add>, %52, %cst_34 [1] : vector<16x16xf32> to vector<16xf32>
    %54 = vector.shape_cast %53 : vector<16xf32> to vector<16x1xf32>
    %55 = vector.broadcast %54 : vector<16x1xf32> to vector<16x16xf32>
    %56 = arith.divf %52, %55 : vector<16x16xf32>
    %cst_35 = arith.constant dense<0.000000e+00> : vector<16x8xf32>
    %57 = tpu.matmul %56, %43, %cst_35 {dimension_numbers = #tpu.dot_dimension_numbers<[1], [0], [0], [1], [0, 0, 1, 1], [], []>} : vector<16x16xf32>, vector<16x8xf32>, vector<16x8xf32> -> vector<16x8xf32>
    %58 = vector.extract_strided_slice %38 {offsets = [0, 0], sizes = [8, 32], strides = [1, 1]} : vector<32x32xf32> to vector<8x32xf32>
    %cst_36 = arith.constant dense<0.000000e+00> : vector<16x32xf32>
    %59 = tpu.matmul %57, %58, %cst_36 {dimension_numbers = #tpu.dot_dimension_numbers<[1], [0], [0], [1], [0, 0, 1, 1], [], []>} : vector<16x8xf32>, vector<8x32xf32>, vector<16x32xf32> -> vector<16x32xf32>
    %60 = vector.broadcast %40 : vector<1x32xf32> to vector<16x32xf32>
    %61 = arith.addf %60, %59 : vector<16x32xf32>
    %62 = vector.extract_strided_slice %36 {offsets = [0, 8], sizes = [16, 8], strides = [1, 1]} : vector<16x96xf32> to vector<16x8xf32>
    %63 = vector.extract_strided_slice %36 {offsets = [0, 40], sizes = [16, 8], strides = [1, 1]} : vector<16x96xf32> to vector<16x8xf32>
    %64 = vector.extract_strided_slice %36 {offsets = [0, 72], sizes = [16, 8], strides = [1, 1]} : vector<16x96xf32> to vector<16x8xf32>
    %cst_37 = arith.constant dense<0.000000e+00> : vector<16x16xf32>
    %65 = tpu.matmul %62, %63, %cst_37 {dimension_numbers = #tpu.dot_dimension_numbers<[1], [1], [0], [0], [0, 0, 1, 0], [], []>} : vector<16x8xf32>, vector<16x8xf32>, vector<16x16xf32> -> vector<16x16xf32>
    %cst_38 = arith.constant 0.353553385 : f32
    %66 = vector.broadcast %cst_38 : f32 to vector<16x16xf32>
    %67 = arith.mulf %65, %66 : vector<16x16xf32>
    %68 = arith.addf %67, %5 : vector<16x16xf32>
    %cst_39 = arith.constant dense<0xFF800000> : vector<16xf32>
    %69 = vector.multi_reduction <maximumf>, %68, %cst_39 [1] : vector<16x16xf32> to vector<16xf32>
    %70 = vector.shape_cast %69 : vector<16xf32> to vector<16x1xf32>
    %71 = vector.broadcast %70 : vector<16x1xf32> to vector<16x16xf32>
    %72 = arith.subf %68, %71 : vector<16x16xf32>
    %73 = math.exp %72 : vector<16x16xf32>
    %cst_40 = arith.constant dense<0.000000e+00> : vector<16xf32>
    %74 = vector.multi_reduction <add>, %73, %cst_40 [1] : vector<16x16xf32> to vector<16xf32>
    %75 = vector.shape_cast %74 : vector<16xf32> to vector<16x1xf32>
    %76 = vector.broadcast %75 : vector<16x1xf32> to vector<16x16xf32>
    %77 = arith.divf %73, %76 : vector<16x16xf32>
    %cst_41 = arith.constant dense<0.000000e+00> : vector<16x8xf32>
    %78 = tpu.matmul %77, %64, %cst_41 {dimension_numbers = #tpu.dot_dimension_numbers<[1], [0], [0], [1], [0, 0, 1, 1], [], []>} : vector<16x16xf32>, vector<16x8xf32>, vector<16x8xf32> -> vector<16x8xf32>
    %79 = vector.extract_strided_slice %38 {offsets = [8, 0], sizes = [8, 32], strides = [1, 1]} : vector<32x32xf32> to vector<8x32xf32>
    %cst_42 = arith.constant dense<0.000000e+00> : vector<16x32xf32>
    %80 = tpu.matmul %78, %79, %cst_42 {dimension_numbers = #tpu.dot_dimension_numbers<[1], [0], [0], [1], [0, 0, 1, 1], [], []>} : vector<16x8xf32>, vector<8x32xf32>, vector<16x32xf32> -> vector<16x32xf32>
    %81 = arith.addf %61, %80 : vector<16x32xf32>
    %82 = vector.extract_strided_slice %36 {offsets = [0, 16], sizes = [16, 8], strides = [1, 1]} : vector<16x96xf32> to vector<16x8xf32>
    %83 = vector.extract_strided_slice %36 {offsets = [0, 48], sizes = [16, 8], strides = [1, 1]} : vector<16x96xf32> to vector<16x8xf32>
    %84 = vector.extract_strided_slice %36 {offsets = [0, 80], sizes = [16, 8], strides = [1, 1]} : vector<16x96xf32> to vector<16x8xf32>
    %cst_43 = arith.constant dense<0.000000e+00> : vector<16x16xf32>
    %85 = tpu.matmul %82, %83, %cst_43 {dimension_numbers = #tpu.dot_dimension_numbers<[1], [1], [0], [0], [0, 0, 1, 0], [], []>} : vector<16x8xf32>, vector<16x8xf32>, vector<16x16xf32> -> vector<16x16xf32>
    %cst_44 = arith.constant 0.353553385 : f32
    %86 = vector.broadcast %cst_44 : f32 to vector<16x16xf32>
    %87 = arith.mulf %85, %86 : vector<16x16xf32>
    %88 = arith.addf %87, %5 : vector<16x16xf32>
    %cst_45 = arith.constant dense<0xFF800000> : vector<16xf32>
    %89 = vector.multi_reduction <maximumf>, %88, %cst_45 [1] : vector<16x16xf32> to vector<16xf32>
    %90 = vector.shape_cast %89 : vector<16xf32> to vector<16x1xf32>
    %91 = vector.broadcast %90 : vector<16x1xf32> to vector<16x16xf32>
    %92 = arith.subf %88, %91 : vector<16x16xf32>
    %93 = math.exp %92 : vector<16x16xf32>
    %cst_46 = arith.constant dense<0.000000e+00> : vector<16xf32>
    %94 = vector.multi_reduction <add>, %93, %cst_46 [1] : vector<16x16xf32> to vector<16xf32>
    %95 = vector.shape_cast %94 : vector<16xf32> to vector<16x1xf32>
    %96 = vector.broadcast %95 : vector<16x1xf32> to vector<16x16xf32>
    %97 = arith.divf %93, %96 : vector<16x16xf32>
    %cst_47 = arith.constant dense<0.000000e+00> : vector<16x8xf32>
    %98 = tpu.matmul %97, %84, %cst_47 {dimension_numbers = #tpu.dot_dimension_numbers<[1], [0], [0], [1], [0, 0, 1, 1], [], []>} : vector<16x16xf32>, vector<16x8xf32>, vector<16x8xf32> -> vector<16x8xf32>
    %99 = vector.extract_strided_slice %38 {offsets = [16, 0], sizes = [8, 32], strides = [1, 1]} : vector<32x32xf32> to vector<8x32xf32>
    %cst_48 = arith.constant dense<0.000000e+00> : vector<16x32xf32>
    %100 = tpu.matmul %98, %99, %cst_48 {dimension_numbers = #tpu.dot_dimension_numbers<[1], [0], [0], [1], [0, 0, 1, 1], [], []>} : vector<16x8xf32>, vector<8x32xf32>, vector<16x32xf32> -> vector<16x32xf32>
    %101 = arith.addf %81, %100 : vector<16x32xf32>
    %102 = vector.extract_strided_slice %36 {offsets = [0, 24], sizes = [16, 8], strides = [1, 1]} : vector<16x96xf32> to vector<16x8xf32>
    %103 = vector.extract_strided_slice %36 {offsets = [0, 56], sizes = [16, 8], strides = [1, 1]} : vector<16x96xf32> to vector<16x8xf32>
    %104 = vector.extract_strided_slice %36 {offsets = [0, 88], sizes = [16, 8], strides = [1, 1]} : vector<16x96xf32> to vector<16x8xf32>
    %cst_49 = arith.constant dense<0.000000e+00> : vector<16x16xf32>
    %105 = tpu.matmul %102, %103, %cst_49 {dimension_numbers = #tpu.dot_dimension_numbers<[1], [1], [0], [0], [0, 0, 1, 0], [], []>} : vector<16x8xf32>, vector<16x8xf32>, vector<16x16xf32> -> vector<16x16xf32>
    %cst_50 = arith.constant 0.353553385 : f32
    %106 = vector.broadcast %cst_50 : f32 to vector<16x16xf32>
    %107 = arith.mulf %105, %106 : vector<16x16xf32>
    %108 = arith.addf %107, %5 : vector<16x16xf32>
    %cst_51 = arith.constant dense<0xFF800000> : vector<16xf32>
    %109 = vector.multi_reduction <maximumf>, %108, %cst_51 [1] : vector<16x16xf32> to vector<16xf32>
    %110 = vector.shape_cast %109 : vector<16xf32> to vector<16x1xf32>
    %111 = vector.broadcast %110 : vector<16x1xf32> to vector<16x16xf32>
    %112 = arith.subf %108, %111 : vector<16x16xf32>
    %113 = math.exp %112 : vector<16x16xf32>
    %cst_52 = arith.constant dense<0.000000e+00> : vector<16xf32>
    %114 = vector.multi_reduction <add>, %113, %cst_52 [1] : vector<16x16xf32> to vector<16xf32>
    %115 = vector.shape_cast %114 : vector<16xf32> to vector<16x1xf32>
    %116 = vector.broadcast %115 : vector<16x1xf32> to vector<16x16xf32>
    %117 = arith.divf %113, %116 : vector<16x16xf32>
    %cst_53 = arith.constant dense<0.000000e+00> : vector<16x8xf32>
    %118 = tpu.matmul %117, %104, %cst_53 {dimension_numbers = #tpu.dot_dimension_numbers<[1], [0], [0], [1], [0, 0, 1, 1], [], []>} : vector<16x16xf32>, vector<16x8xf32>, vector<16x8xf32> -> vector<16x8xf32>
    %119 = vector.extract_strided_slice %38 {offsets = [24, 0], sizes = [8, 32], strides = [1, 1]} : vector<32x32xf32> to vector<8x32xf32>
    %cst_54 = arith.constant dense<0.000000e+00> : vector<16x32xf32>
    %120 = tpu.matmul %118, %119, %cst_54 {dimension_numbers = #tpu.dot_dimension_numbers<[1], [0], [0], [1], [0, 0, 1, 1], [], []>} : vector<16x8xf32>, vector<8x32xf32>, vector<16x32xf32> -> vector<16x32xf32>
    %121 = arith.addf %101, %120 : vector<16x32xf32>
    %122 = arith.addf %121, %4 : vector<16x32xf32>
    %c0_55 = arith.constant 0 : index
    %c0_56 = arith.constant 0 : index
    %c0_57 = arith.constant 0 : index
    %123 = vector.load %arg12[%c0_55, %c0_56, %c0_57] : memref<2x1x32xf32, #tpu.memory_space<vmem>>, vector<1x1x32xf32>
    %124 = vector.shape_cast %123 : vector<1x1x32xf32> to vector<1x32xf32>
    %c0_58 = arith.constant 0 : index
    %c0_59 = arith.constant 0 : index
    %c0_60 = arith.constant 0 : index
    %125 = vector.load %arg13[%c0_58, %c0_59, %c0_60] : memref<2x1x32xf32, #tpu.memory_space<vmem>>, vector<1x1x32xf32>
    %126 = vector.shape_cast %125 : vector<1x1x32xf32> to vector<1x32xf32>
    %cst_61 = arith.constant dense<0.000000e+00> : vector<16xf32>
    %127 = vector.multi_reduction <add>, %122, %cst_61 [1] : vector<16x32xf32> to vector<16xf32>
    %128 = vector.shape_cast %127 : vector<16xf32> to vector<16x1xf32>
    %cst_62 = arith.constant 3.200000e+01 : f32
    %129 = vector.broadcast %cst_62 : f32 to vector<16x1xf32>
    %130 = arith.divf %128, %129 : vector<16x1xf32>
    %131 = vector.broadcast %130 : vector<16x1xf32> to vector<16x32xf32>
    %132 = arith.subf %122, %131 : vector<16x32xf32>
    %133 = arith.mulf %132, %132 : vector<16x32xf32>
    %cst_63 = arith.constant dense<0.000000e+00> : vector<16xf32>
    %134 = vector.multi_reduction <add>, %133, %cst_63 [1] : vector<16x32xf32> to vector<16xf32>
    %135 = vector.shape_cast %134 : vector<16xf32> to vector<16x1xf32>
    %cst_64 = arith.constant 3.200000e+01 : f32
    %136 = vector.broadcast %cst_64 : f32 to vector<16x1xf32>
    %137 = arith.divf %135, %136 : vector<16x1xf32>
    %cst_65 = arith.constant 9.99999974E-6 : f32
    %138 = vector.broadcast %cst_65 : f32 to vector<16x1xf32>
    %139 = arith.addf %137, %138 : vector<16x1xf32>
    %140 = math.rsqrt %139 : vector<16x1xf32>
    %141 = vector.broadcast %140 : vector<16x1xf32> to vector<16x32xf32>
    %142 = arith.mulf %132, %141 : vector<16x32xf32>
    %143 = vector.broadcast %124 : vector<1x32xf32> to vector<16x32xf32>
    %144 = arith.mulf %142, %143 : vector<16x32xf32>
    %145 = vector.broadcast %126 : vector<1x32xf32> to vector<16x32xf32>
    %146 = arith.addf %144, %145 : vector<16x32xf32>
    %c0_66 = arith.constant 0 : index
    %c0_67 = arith.constant 0 : index
    %c0_68 = arith.constant 0 : index
    %147 = vector.load %arg14[%c0_66, %c0_67, %c0_68] : memref<2x32x64xf32, #tpu.memory_space<vmem>>, vector<1x32x64xf32>
    %148 = vector.shape_cast %147 : vector<1x32x64xf32> to vector<32x64xf32>
    %cst_69 = arith.constant dense<0.000000e+00> : vector<16x64xf32>
    %149 = tpu.matmul %146, %148, %cst_69 {dimension_numbers = #tpu.dot_dimension_numbers<[1], [0], [0], [1], [0, 0, 1, 1], [], []>} : vector<16x32xf32>, vector<32x64xf32>, vector<16x64xf32> -> vector<16x64xf32>
    %c0_70 = arith.constant 0 : index
    %c0_71 = arith.constant 0 : index
    %c0_72 = arith.constant 0 : index
    %150 = vector.load %arg15[%c0_70, %c0_71, %c0_72] : memref<2x1x64xf32, #tpu.memory_space<vmem>>, vector<1x1x64xf32>
    %151 = vector.shape_cast %150 : vector<1x1x64xf32> to vector<1x64xf32>
    %152 = vector.broadcast %151 : vector<1x64xf32> to vector<16x64xf32>
    %153 = arith.addf %149, %152 : vector<16x64xf32>
    %cst_73 = arith.constant 5.000000e-01 : f32
    %154 = vector.broadcast %cst_73 : f32 to vector<16x64xf32>
    %155 = arith.mulf %154, %153 : vector<16x64xf32>
    %cst_74 = arith.constant 0.707106769 : f32
    %156 = vector.broadcast %cst_74 : f32 to vector<16x64xf32>
    %157 = arith.mulf %153, %156 : vector<16x64xf32>
    %158 = math.absf %157 : vector<16x64xf32>
    %cst_75 = arith.constant 0.327591091 : f32
    %159 = vector.broadcast %cst_75 : f32 to vector<16x64xf32>
    %160 = arith.mulf %159, %158 : vector<16x64xf32>
    %cst_76 = arith.constant 1.000000e+00 : f32
    %161 = vector.broadcast %cst_76 : f32 to vector<16x64xf32>
    %162 = arith.addf %161, %160 : vector<16x64xf32>
    %cst_77 = arith.constant 1.000000e+00 : f32
    %163 = vector.broadcast %cst_77 : f32 to vector<16x64xf32>
    %164 = arith.divf %163, %162 : vector<16x64xf32>
    %cst_78 = arith.constant 1.06140542 : f32
    %165 = vector.broadcast %cst_78 : f32 to vector<16x64xf32>
    %166 = arith.mulf %165, %164 : vector<16x64xf32>
    %cst_79 = arith.constant -1.45315206 : f32
    %167 = vector.broadcast %cst_79 : f32 to vector<16x64xf32>
    %168 = arith.addf %166, %167 : vector<16x64xf32>
    %169 = arith.mulf %168, %164 : vector<16x64xf32>
    %cst_80 = arith.constant 1.42141378 : f32
    %170 = vector.broadcast %cst_80 : f32 to vector<16x64xf32>
    %171 = arith.addf %169, %170 : vector<16x64xf32>
    %172 = arith.mulf %171, %164 : vector<16x64xf32>
    %cst_81 = arith.constant -0.284496725 : f32
    %173 = vector.broadcast %cst_81 : f32 to vector<16x64xf32>
    %174 = arith.addf %172, %173 : vector<16x64xf32>
    %175 = arith.mulf %174, %164 : vector<16x64xf32>
    %cst_82 = arith.constant 0.254829586 : f32
    %176 = vector.broadcast %cst_82 : f32 to vector<16x64xf32>
    %177 = arith.addf %175, %176 : vector<16x64xf32>
    %178 = arith.mulf %177, %164 : vector<16x64xf32>
    %cst_83 = arith.constant 0.000000e+00 : f32
    %179 = vector.broadcast %cst_83 : f32 to vector<16x64xf32>
    %180 = arith.subf %179, %158 : vector<16x64xf32>
    %181 = arith.mulf %180, %158 : vector<16x64xf32>
    %182 = math.exp %181 : vector<16x64xf32>
    %183 = arith.mulf %178, %182 : vector<16x64xf32>
    %cst_84 = arith.constant 1.000000e+00 : f32
    %184 = vector.broadcast %cst_84 : f32 to vector<16x64xf32>
    %185 = arith.subf %184, %183 : vector<16x64xf32>
    %cst_85 = arith.constant 0.000000e+00 : f32
    %186 = vector.broadcast %cst_85 : f32 to vector<16x64xf32>
    %187 = arith.cmpf oge, %157, %186 : vector<16x64xf32>
    %cst_86 = arith.constant 0.000000e+00 : f32
    %188 = vector.broadcast %cst_86 : f32 to vector<16x64xf32>
    %189 = arith.subf %188, %185 : vector<16x64xf32>
    %190 = arith.select %187, %185, %189 : vector<16x64xi1>, vector<16x64xf32>
    %cst_87 = arith.constant 1.000000e+00 : f32
    %191 = vector.broadcast %cst_87 : f32 to vector<16x64xf32>
    %192 = arith.addf %191, %190 : vector<16x64xf32>
    %193 = arith.mulf %155, %192 : vector<16x64xf32>
    %c0_88 = arith.constant 0 : index
    %c0_89 = arith.constant 0 : index
    %c0_90 = arith.constant 0 : index
    %194 = vector.load %arg16[%c0_88, %c0_89, %c0_90] : memref<2x64x32xf32, #tpu.memory_space<vmem>>, vector<1x64x32xf32>
    %195 = vector.shape_cast %194 : vector<1x64x32xf32> to vector<64x32xf32>
    %cst_91 = arith.constant dense<0.000000e+00> : vector<16x32xf32>
    %196 = tpu.matmul %193, %195, %cst_91 {dimension_numbers = #tpu.dot_dimension_numbers<[1], [0], [0], [1], [0, 0, 1, 1], [], []>} : vector<16x64xf32>, vector<64x32xf32>, vector<16x32xf32> -> vector<16x32xf32>
    %c0_92 = arith.constant 0 : index
    %c0_93 = arith.constant 0 : index
    %c0_94 = arith.constant 0 : index
    %197 = vector.load %arg17[%c0_92, %c0_93, %c0_94] : memref<2x1x32xf32, #tpu.memory_space<vmem>>, vector<1x1x32xf32>
    %198 = vector.shape_cast %197 : vector<1x1x32xf32> to vector<1x32xf32>
    %199 = vector.broadcast %198 : vector<1x32xf32> to vector<16x32xf32>
    %200 = arith.addf %196, %199 : vector<16x32xf32>
    %201 = arith.addf %200, %122 : vector<16x32xf32>
    %c1 = arith.constant 1 : index
    %c0_95 = arith.constant 0 : index
    %c0_96 = arith.constant 0 : index
    %202 = vector.load %arg6[%c1, %c0_95, %c0_96] : memref<2x1x32xf32, #tpu.memory_space<vmem>>, vector<1x1x32xf32>
    %203 = vector.shape_cast %202 : vector<1x1x32xf32> to vector<1x32xf32>
    %c1_97 = arith.constant 1 : index
    %c0_98 = arith.constant 0 : index
    %c0_99 = arith.constant 0 : index
    %204 = vector.load %arg7[%c1_97, %c0_98, %c0_99] : memref<2x1x32xf32, #tpu.memory_space<vmem>>, vector<1x1x32xf32>
    %205 = vector.shape_cast %204 : vector<1x1x32xf32> to vector<1x32xf32>
    %cst_100 = arith.constant dense<0.000000e+00> : vector<16xf32>
    %206 = vector.multi_reduction <add>, %201, %cst_100 [1] : vector<16x32xf32> to vector<16xf32>
    %207 = vector.shape_cast %206 : vector<16xf32> to vector<16x1xf32>
    %cst_101 = arith.constant 3.200000e+01 : f32
    %208 = vector.broadcast %cst_101 : f32 to vector<16x1xf32>
    %209 = arith.divf %207, %208 : vector<16x1xf32>
    %210 = vector.broadcast %209 : vector<16x1xf32> to vector<16x32xf32>
    %211 = arith.subf %201, %210 : vector<16x32xf32>
    %212 = arith.mulf %211, %211 : vector<16x32xf32>
    %cst_102 = arith.constant dense<0.000000e+00> : vector<16xf32>
    %213 = vector.multi_reduction <add>, %212, %cst_102 [1] : vector<16x32xf32> to vector<16xf32>
    %214 = vector.shape_cast %213 : vector<16xf32> to vector<16x1xf32>
    %cst_103 = arith.constant 3.200000e+01 : f32
    %215 = vector.broadcast %cst_103 : f32 to vector<16x1xf32>
    %216 = arith.divf %214, %215 : vector<16x1xf32>
    %cst_104 = arith.constant 9.99999974E-6 : f32
    %217 = vector.broadcast %cst_104 : f32 to vector<16x1xf32>
    %218 = arith.addf %216, %217 : vector<16x1xf32>
    %219 = math.rsqrt %218 : vector<16x1xf32>
    %220 = vector.broadcast %219 : vector<16x1xf32> to vector<16x32xf32>
    %221 = arith.mulf %211, %220 : vector<16x32xf32>
    %222 = vector.broadcast %203 : vector<1x32xf32> to vector<16x32xf32>
    %223 = arith.mulf %221, %222 : vector<16x32xf32>
    %224 = vector.broadcast %205 : vector<1x32xf32> to vector<16x32xf32>
    %225 = arith.addf %223, %224 : vector<16x32xf32>
    %c1_105 = arith.constant 1 : index
    %c0_106 = arith.constant 0 : index
    %c0_107 = arith.constant 0 : index
    %226 = vector.load %arg8[%c1_105, %c0_106, %c0_107] : memref<2x32x96xf32, #tpu.memory_space<vmem>>, vector<1x32x96xf32>
    %227 = vector.shape_cast %226 : vector<1x32x96xf32> to vector<32x96xf32>
    %cst_108 = arith.constant dense<0.000000e+00> : vector<16x96xf32>
    %228 = tpu.matmul %225, %227, %cst_108 {dimension_numbers = #tpu.dot_dimension_numbers<[1], [0], [0], [1], [0, 0, 1, 1], [], []>} : vector<16x32xf32>, vector<32x96xf32>, vector<16x96xf32> -> vector<16x96xf32>
    %c1_109 = arith.constant 1 : index
    %c0_110 = arith.constant 0 : index
    %c0_111 = arith.constant 0 : index
    %229 = vector.load %arg9[%c1_109, %c0_110, %c0_111] : memref<2x1x96xf32, #tpu.memory_space<vmem>>, vector<1x1x96xf32>
    %230 = vector.shape_cast %229 : vector<1x1x96xf32> to vector<1x96xf32>
    %231 = vector.broadcast %230 : vector<1x96xf32> to vector<16x96xf32>
    %232 = arith.addf %228, %231 : vector<16x96xf32>
    %c1_112 = arith.constant 1 : index
    %c0_113 = arith.constant 0 : index
    %c0_114 = arith.constant 0 : index
    %233 = vector.load %arg10[%c1_112, %c0_113, %c0_114] : memref<2x32x32xf32, #tpu.memory_space<vmem>>, vector<1x32x32xf32>
    %234 = vector.shape_cast %233 : vector<1x32x32xf32> to vector<32x32xf32>
    %c1_115 = arith.constant 1 : index
    %c0_116 = arith.constant 0 : index
    %c0_117 = arith.constant 0 : index
    %235 = vector.load %arg11[%c1_115, %c0_116, %c0_117] : memref<2x1x32xf32, #tpu.memory_space<vmem>>, vector<1x1x32xf32>
    %236 = vector.shape_cast %235 : vector<1x1x32xf32> to vector<1x32xf32>
    %237 = vector.extract_strided_slice %232 {offsets = [0, 0], sizes = [16, 8], strides = [1, 1]} : vector<16x96xf32> to vector<16x8xf32>
    %238 = vector.extract_strided_slice %232 {offsets = [0, 32], sizes = [16, 8], strides = [1, 1]} : vector<16x96xf32> to vector<16x8xf32>
    %239 = vector.extract_strided_slice %232 {offsets = [0, 64], sizes = [16, 8], strides = [1, 1]} : vector<16x96xf32> to vector<16x8xf32>
    %cst_118 = arith.constant dense<0.000000e+00> : vector<16x16xf32>
    %240 = tpu.matmul %237, %238, %cst_118 {dimension_numbers = #tpu.dot_dimension_numbers<[1], [1], [0], [0], [0, 0, 1, 0], [], []>} : vector<16x8xf32>, vector<16x8xf32>, vector<16x16xf32> -> vector<16x16xf32>
    %cst_119 = arith.constant 0.353553385 : f32
    %241 = vector.broadcast %cst_119 : f32 to vector<16x16xf32>
    %242 = arith.mulf %240, %241 : vector<16x16xf32>
    %243 = arith.addf %242, %5 : vector<16x16xf32>
    %cst_120 = arith.constant dense<0xFF800000> : vector<16xf32>
    %244 = vector.multi_reduction <maximumf>, %243, %cst_120 [1] : vector<16x16xf32> to vector<16xf32>
    %245 = vector.shape_cast %244 : vector<16xf32> to vector<16x1xf32>
    %246 = vector.broadcast %245 : vector<16x1xf32> to vector<16x16xf32>
    %247 = arith.subf %243, %246 : vector<16x16xf32>
    %248 = math.exp %247 : vector<16x16xf32>
    %cst_121 = arith.constant dense<0.000000e+00> : vector<16xf32>
    %249 = vector.multi_reduction <add>, %248, %cst_121 [1] : vector<16x16xf32> to vector<16xf32>
    %250 = vector.shape_cast %249 : vector<16xf32> to vector<16x1xf32>
    %251 = vector.broadcast %250 : vector<16x1xf32> to vector<16x16xf32>
    %252 = arith.divf %248, %251 : vector<16x16xf32>
    %cst_122 = arith.constant dense<0.000000e+00> : vector<16x8xf32>
    %253 = tpu.matmul %252, %239, %cst_122 {dimension_numbers = #tpu.dot_dimension_numbers<[1], [0], [0], [1], [0, 0, 1, 1], [], []>} : vector<16x16xf32>, vector<16x8xf32>, vector<16x8xf32> -> vector<16x8xf32>
    %254 = vector.extract_strided_slice %234 {offsets = [0, 0], sizes = [8, 32], strides = [1, 1]} : vector<32x32xf32> to vector<8x32xf32>
    %cst_123 = arith.constant dense<0.000000e+00> : vector<16x32xf32>
    %255 = tpu.matmul %253, %254, %cst_123 {dimension_numbers = #tpu.dot_dimension_numbers<[1], [0], [0], [1], [0, 0, 1, 1], [], []>} : vector<16x8xf32>, vector<8x32xf32>, vector<16x32xf32> -> vector<16x32xf32>
    %256 = vector.broadcast %236 : vector<1x32xf32> to vector<16x32xf32>
    %257 = arith.addf %256, %255 : vector<16x32xf32>
    %258 = vector.extract_strided_slice %232 {offsets = [0, 8], sizes = [16, 8], strides = [1, 1]} : vector<16x96xf32> to vector<16x8xf32>
    %259 = vector.extract_strided_slice %232 {offsets = [0, 40], sizes = [16, 8], strides = [1, 1]} : vector<16x96xf32> to vector<16x8xf32>
    %260 = vector.extract_strided_slice %232 {offsets = [0, 72], sizes = [16, 8], strides = [1, 1]} : vector<16x96xf32> to vector<16x8xf32>
    %cst_124 = arith.constant dense<0.000000e+00> : vector<16x16xf32>
    %261 = tpu.matmul %258, %259, %cst_124 {dimension_numbers = #tpu.dot_dimension_numbers<[1], [1], [0], [0], [0, 0, 1, 0], [], []>} : vector<16x8xf32>, vector<16x8xf32>, vector<16x16xf32> -> vector<16x16xf32>
    %cst_125 = arith.constant 0.353553385 : f32
    %262 = vector.broadcast %cst_125 : f32 to vector<16x16xf32>
    %263 = arith.mulf %261, %262 : vector<16x16xf32>
    %264 = arith.addf %263, %5 : vector<16x16xf32>
    %cst_126 = arith.constant dense<0xFF800000> : vector<16xf32>
    %265 = vector.multi_reduction <maximumf>, %264, %cst_126 [1] : vector<16x16xf32> to vector<16xf32>
    %266 = vector.shape_cast %265 : vector<16xf32> to vector<16x1xf32>
    %267 = vector.broadcast %266 : vector<16x1xf32> to vector<16x16xf32>
    %268 = arith.subf %264, %267 : vector<16x16xf32>
    %269 = math.exp %268 : vector<16x16xf32>
    %cst_127 = arith.constant dense<0.000000e+00> : vector<16xf32>
    %270 = vector.multi_reduction <add>, %269, %cst_127 [1] : vector<16x16xf32> to vector<16xf32>
    %271 = vector.shape_cast %270 : vector<16xf32> to vector<16x1xf32>
    %272 = vector.broadcast %271 : vector<16x1xf32> to vector<16x16xf32>
    %273 = arith.divf %269, %272 : vector<16x16xf32>
    %cst_128 = arith.constant dense<0.000000e+00> : vector<16x8xf32>
    %274 = tpu.matmul %273, %260, %cst_128 {dimension_numbers = #tpu.dot_dimension_numbers<[1], [0], [0], [1], [0, 0, 1, 1], [], []>} : vector<16x16xf32>, vector<16x8xf32>, vector<16x8xf32> -> vector<16x8xf32>
    %275 = vector.extract_strided_slice %234 {offsets = [8, 0], sizes = [8, 32], strides = [1, 1]} : vector<32x32xf32> to vector<8x32xf32>
    %cst_129 = arith.constant dense<0.000000e+00> : vector<16x32xf32>
    %276 = tpu.matmul %274, %275, %cst_129 {dimension_numbers = #tpu.dot_dimension_numbers<[1], [0], [0], [1], [0, 0, 1, 1], [], []>} : vector<16x8xf32>, vector<8x32xf32>, vector<16x32xf32> -> vector<16x32xf32>
    %277 = arith.addf %257, %276 : vector<16x32xf32>
    %278 = vector.extract_strided_slice %232 {offsets = [0, 16], sizes = [16, 8], strides = [1, 1]} : vector<16x96xf32> to vector<16x8xf32>
    %279 = vector.extract_strided_slice %232 {offsets = [0, 48], sizes = [16, 8], strides = [1, 1]} : vector<16x96xf32> to vector<16x8xf32>
    %280 = vector.extract_strided_slice %232 {offsets = [0, 80], sizes = [16, 8], strides = [1, 1]} : vector<16x96xf32> to vector<16x8xf32>
    %cst_130 = arith.constant dense<0.000000e+00> : vector<16x16xf32>
    %281 = tpu.matmul %278, %279, %cst_130 {dimension_numbers = #tpu.dot_dimension_numbers<[1], [1], [0], [0], [0, 0, 1, 0], [], []>} : vector<16x8xf32>, vector<16x8xf32>, vector<16x16xf32> -> vector<16x16xf32>
    %cst_131 = arith.constant 0.353553385 : f32
    %282 = vector.broadcast %cst_131 : f32 to vector<16x16xf32>
    %283 = arith.mulf %281, %282 : vector<16x16xf32>
    %284 = arith.addf %283, %5 : vector<16x16xf32>
    %cst_132 = arith.constant dense<0xFF800000> : vector<16xf32>
    %285 = vector.multi_reduction <maximumf>, %284, %cst_132 [1] : vector<16x16xf32> to vector<16xf32>
    %286 = vector.shape_cast %285 : vector<16xf32> to vector<16x1xf32>
    %287 = vector.broadcast %286 : vector<16x1xf32> to vector<16x16xf32>
    %288 = arith.subf %284, %287 : vector<16x16xf32>
    %289 = math.exp %288 : vector<16x16xf32>
    %cst_133 = arith.constant dense<0.000000e+00> : vector<16xf32>
    %290 = vector.multi_reduction <add>, %289, %cst_133 [1] : vector<16x16xf32> to vector<16xf32>
    %291 = vector.shape_cast %290 : vector<16xf32> to vector<16x1xf32>
    %292 = vector.broadcast %291 : vector<16x1xf32> to vector<16x16xf32>
    %293 = arith.divf %289, %292 : vector<16x16xf32>
    %cst_134 = arith.constant dense<0.000000e+00> : vector<16x8xf32>
    %294 = tpu.matmul %293, %280, %cst_134 {dimension_numbers = #tpu.dot_dimension_numbers<[1], [0], [0], [1], [0, 0, 1, 1], [], []>} : vector<16x16xf32>, vector<16x8xf32>, vector<16x8xf32> -> vector<16x8xf32>
    %295 = vector.extract_strided_slice %234 {offsets = [16, 0], sizes = [8, 32], strides = [1, 1]} : vector<32x32xf32> to vector<8x32xf32>
    %cst_135 = arith.constant dense<0.000000e+00> : vector<16x32xf32>
    %296 = tpu.matmul %294, %295, %cst_135 {dimension_numbers = #tpu.dot_dimension_numbers<[1], [0], [0], [1], [0, 0, 1, 1], [], []>} : vector<16x8xf32>, vector<8x32xf32>, vector<16x32xf32> -> vector<16x32xf32>
    %297 = arith.addf %277, %296 : vector<16x32xf32>
    %298 = vector.extract_strided_slice %232 {offsets = [0, 24], sizes = [16, 8], strides = [1, 1]} : vector<16x96xf32> to vector<16x8xf32>
    %299 = vector.extract_strided_slice %232 {offsets = [0, 56], sizes = [16, 8], strides = [1, 1]} : vector<16x96xf32> to vector<16x8xf32>
    %300 = vector.extract_strided_slice %232 {offsets = [0, 88], sizes = [16, 8], strides = [1, 1]} : vector<16x96xf32> to vector<16x8xf32>
    %cst_136 = arith.constant dense<0.000000e+00> : vector<16x16xf32>
    %301 = tpu.matmul %298, %299, %cst_136 {dimension_numbers = #tpu.dot_dimension_numbers<[1], [1], [0], [0], [0, 0, 1, 0], [], []>} : vector<16x8xf32>, vector<16x8xf32>, vector<16x16xf32> -> vector<16x16xf32>
    %cst_137 = arith.constant 0.353553385 : f32
    %302 = vector.broadcast %cst_137 : f32 to vector<16x16xf32>
    %303 = arith.mulf %301, %302 : vector<16x16xf32>
    %304 = arith.addf %303, %5 : vector<16x16xf32>
    %cst_138 = arith.constant dense<0xFF800000> : vector<16xf32>
    %305 = vector.multi_reduction <maximumf>, %304, %cst_138 [1] : vector<16x16xf32> to vector<16xf32>
    %306 = vector.shape_cast %305 : vector<16xf32> to vector<16x1xf32>
    %307 = vector.broadcast %306 : vector<16x1xf32> to vector<16x16xf32>
    %308 = arith.subf %304, %307 : vector<16x16xf32>
    %309 = math.exp %308 : vector<16x16xf32>
    %cst_139 = arith.constant dense<0.000000e+00> : vector<16xf32>
    %310 = vector.multi_reduction <add>, %309, %cst_139 [1] : vector<16x16xf32> to vector<16xf32>
    %311 = vector.shape_cast %310 : vector<16xf32> to vector<16x1xf32>
    %312 = vector.broadcast %311 : vector<16x1xf32> to vector<16x16xf32>
    %313 = arith.divf %309, %312 : vector<16x16xf32>
    %cst_140 = arith.constant dense<0.000000e+00> : vector<16x8xf32>
    %314 = tpu.matmul %313, %300, %cst_140 {dimension_numbers = #tpu.dot_dimension_numbers<[1], [0], [0], [1], [0, 0, 1, 1], [], []>} : vector<16x16xf32>, vector<16x8xf32>, vector<16x8xf32> -> vector<16x8xf32>
    %315 = vector.extract_strided_slice %234 {offsets = [24, 0], sizes = [8, 32], strides = [1, 1]} : vector<32x32xf32> to vector<8x32xf32>
    %cst_141 = arith.constant dense<0.000000e+00> : vector<16x32xf32>
    %316 = tpu.matmul %314, %315, %cst_141 {dimension_numbers = #tpu.dot_dimension_numbers<[1], [0], [0], [1], [0, 0, 1, 1], [], []>} : vector<16x8xf32>, vector<8x32xf32>, vector<16x32xf32> -> vector<16x32xf32>
    %317 = arith.addf %297, %316 : vector<16x32xf32>
    %318 = arith.addf %317, %201 : vector<16x32xf32>
    %c1_142 = arith.constant 1 : index
    %c0_143 = arith.constant 0 : index
    %c0_144 = arith.constant 0 : index
    %319 = vector.load %arg12[%c1_142, %c0_143, %c0_144] : memref<2x1x32xf32, #tpu.memory_space<vmem>>, vector<1x1x32xf32>
    %320 = vector.shape_cast %319 : vector<1x1x32xf32> to vector<1x32xf32>
    %c1_145 = arith.constant 1 : index
    %c0_146 = arith.constant 0 : index
    %c0_147 = arith.constant 0 : index
    %321 = vector.load %arg13[%c1_145, %c0_146, %c0_147] : memref<2x1x32xf32, #tpu.memory_space<vmem>>, vector<1x1x32xf32>
    %322 = vector.shape_cast %321 : vector<1x1x32xf32> to vector<1x32xf32>
    %cst_148 = arith.constant dense<0.000000e+00> : vector<16xf32>
    %323 = vector.multi_reduction <add>, %318, %cst_148 [1] : vector<16x32xf32> to vector<16xf32>
    %324 = vector.shape_cast %323 : vector<16xf32> to vector<16x1xf32>
    %cst_149 = arith.constant 3.200000e+01 : f32
    %325 = vector.broadcast %cst_149 : f32 to vector<16x1xf32>
    %326 = arith.divf %324, %325 : vector<16x1xf32>
    %327 = vector.broadcast %326 : vector<16x1xf32> to vector<16x32xf32>
    %328 = arith.subf %318, %327 : vector<16x32xf32>
    %329 = arith.mulf %328, %328 : vector<16x32xf32>
    %cst_150 = arith.constant dense<0.000000e+00> : vector<16xf32>
    %330 = vector.multi_reduction <add>, %329, %cst_150 [1] : vector<16x32xf32> to vector<16xf32>
    %331 = vector.shape_cast %330 : vector<16xf32> to vector<16x1xf32>
    %cst_151 = arith.constant 3.200000e+01 : f32
    %332 = vector.broadcast %cst_151 : f32 to vector<16x1xf32>
    %333 = arith.divf %331, %332 : vector<16x1xf32>
    %cst_152 = arith.constant 9.99999974E-6 : f32
    %334 = vector.broadcast %cst_152 : f32 to vector<16x1xf32>
    %335 = arith.addf %333, %334 : vector<16x1xf32>
    %336 = math.rsqrt %335 : vector<16x1xf32>
    %337 = vector.broadcast %336 : vector<16x1xf32> to vector<16x32xf32>
    %338 = arith.mulf %328, %337 : vector<16x32xf32>
    %339 = vector.broadcast %320 : vector<1x32xf32> to vector<16x32xf32>
    %340 = arith.mulf %338, %339 : vector<16x32xf32>
    %341 = vector.broadcast %322 : vector<1x32xf32> to vector<16x32xf32>
    %342 = arith.addf %340, %341 : vector<16x32xf32>
    %c1_153 = arith.constant 1 : index
    %c0_154 = arith.constant 0 : index
    %c0_155 = arith.constant 0 : index
    %343 = vector.load %arg14[%c1_153, %c0_154, %c0_155] : memref<2x32x64xf32, #tpu.memory_space<vmem>>, vector<1x32x64xf32>
    %344 = vector.shape_cast %343 : vector<1x32x64xf32> to vector<32x64xf32>
    %cst_156 = arith.constant dense<0.000000e+00> : vector<16x64xf32>
    %345 = tpu.matmul %342, %344, %cst_156 {dimension_numbers = #tpu.dot_dimension_numbers<[1], [0], [0], [1], [0, 0, 1, 1], [], []>} : vector<16x32xf32>, vector<32x64xf32>, vector<16x64xf32> -> vector<16x64xf32>
    %c1_157 = arith.constant 1 : index
    %c0_158 = arith.constant 0 : index
    %c0_159 = arith.constant 0 : index
    %346 = vector.load %arg15[%c1_157, %c0_158, %c0_159] : memref<2x1x64xf32, #tpu.memory_space<vmem>>, vector<1x1x64xf32>
    %347 = vector.shape_cast %346 : vector<1x1x64xf32> to vector<1x64xf32>
    %348 = vector.broadcast %347 : vector<1x64xf32> to vector<16x64xf32>
    %349 = arith.addf %345, %348 : vector<16x64xf32>
    %cst_160 = arith.constant 5.000000e-01 : f32
    %350 = vector.broadcast %cst_160 : f32 to vector<16x64xf32>
    %351 = arith.mulf %350, %349 : vector<16x64xf32>
    %cst_161 = arith.constant 0.707106769 : f32
    %352 = vector.broadcast %cst_161 : f32 to vector<16x64xf32>
    %353 = arith.mulf %349, %352 : vector<16x64xf32>
    %354 = math.absf %353 : vector<16x64xf32>
    %cst_162 = arith.constant 0.327591091 : f32
    %355 = vector.broadcast %cst_162 : f32 to vector<16x64xf32>
    %356 = arith.mulf %355, %354 : vector<16x64xf32>
    %cst_163 = arith.constant 1.000000e+00 : f32
    %357 = vector.broadcast %cst_163 : f32 to vector<16x64xf32>
    %358 = arith.addf %357, %356 : vector<16x64xf32>
    %cst_164 = arith.constant 1.000000e+00 : f32
    %359 = vector.broadcast %cst_164 : f32 to vector<16x64xf32>
    %360 = arith.divf %359, %358 : vector<16x64xf32>
    %cst_165 = arith.constant 1.06140542 : f32
    %361 = vector.broadcast %cst_165 : f32 to vector<16x64xf32>
    %362 = arith.mulf %361, %360 : vector<16x64xf32>
    %cst_166 = arith.constant -1.45315206 : f32
    %363 = vector.broadcast %cst_166 : f32 to vector<16x64xf32>
    %364 = arith.addf %362, %363 : vector<16x64xf32>
    %365 = arith.mulf %364, %360 : vector<16x64xf32>
    %cst_167 = arith.constant 1.42141378 : f32
    %366 = vector.broadcast %cst_167 : f32 to vector<16x64xf32>
    %367 = arith.addf %365, %366 : vector<16x64xf32>
    %368 = arith.mulf %367, %360 : vector<16x64xf32>
    %cst_168 = arith.constant -0.284496725 : f32
    %369 = vector.broadcast %cst_168 : f32 to vector<16x64xf32>
    %370 = arith.addf %368, %369 : vector<16x64xf32>
    %371 = arith.mulf %370, %360 : vector<16x64xf32>
    %cst_169 = arith.constant 0.254829586 : f32
    %372 = vector.broadcast %cst_169 : f32 to vector<16x64xf32>
    %373 = arith.addf %371, %372 : vector<16x64xf32>
    %374 = arith.mulf %373, %360 : vector<16x64xf32>
    %cst_170 = arith.constant 0.000000e+00 : f32
    %375 = vector.broadcast %cst_170 : f32 to vector<16x64xf32>
    %376 = arith.subf %375, %354 : vector<16x64xf32>
    %377 = arith.mulf %376, %354 : vector<16x64xf32>
    %378 = math.exp %377 : vector<16x64xf32>
    %379 = arith.mulf %374, %378 : vector<16x64xf32>
    %cst_171 = arith.constant 1.000000e+00 : f32
    %380 = vector.broadcast %cst_171 : f32 to vector<16x64xf32>
    %381 = arith.subf %380, %379 : vector<16x64xf32>
    %cst_172 = arith.constant 0.000000e+00 : f32
    %382 = vector.broadcast %cst_172 : f32 to vector<16x64xf32>
    %383 = arith.cmpf oge, %353, %382 : vector<16x64xf32>
    %cst_173 = arith.constant 0.000000e+00 : f32
    %384 = vector.broadcast %cst_173 : f32 to vector<16x64xf32>
    %385 = arith.subf %384, %381 : vector<16x64xf32>
    %386 = arith.select %383, %381, %385 : vector<16x64xi1>, vector<16x64xf32>
    %cst_174 = arith.constant 1.000000e+00 : f32
    %387 = vector.broadcast %cst_174 : f32 to vector<16x64xf32>
    %388 = arith.addf %387, %386 : vector<16x64xf32>
    %389 = arith.mulf %351, %388 : vector<16x64xf32>
    %c1_175 = arith.constant 1 : index
    %c0_176 = arith.constant 0 : index
    %c0_177 = arith.constant 0 : index
    %390 = vector.load %arg16[%c1_175, %c0_176, %c0_177] : memref<2x64x32xf32, #tpu.memory_space<vmem>>, vector<1x64x32xf32>
    %391 = vector.shape_cast %390 : vector<1x64x32xf32> to vector<64x32xf32>
    %cst_178 = arith.constant dense<0.000000e+00> : vector<16x32xf32>
    %392 = tpu.matmul %389, %391, %cst_178 {dimension_numbers = #tpu.dot_dimension_numbers<[1], [0], [0], [1], [0, 0, 1, 1], [], []>} : vector<16x64xf32>, vector<64x32xf32>, vector<16x32xf32> -> vector<16x32xf32>
    %c1_179 = arith.constant 1 : index
    %c0_180 = arith.constant 0 : index
    %c0_181 = arith.constant 0 : index
    %393 = vector.load %arg17[%c1_179, %c0_180, %c0_181] : memref<2x1x32xf32, #tpu.memory_space<vmem>>, vector<1x1x32xf32>
    %394 = vector.shape_cast %393 : vector<1x1x32xf32> to vector<1x32xf32>
    %395 = vector.broadcast %394 : vector<1x32xf32> to vector<16x32xf32>
    %396 = arith.addf %392, %395 : vector<16x32xf32>
    %397 = arith.addf %396, %318 : vector<16x32xf32>
    %c0_182 = arith.constant 0 : index
    %c0_183 = arith.constant 0 : index
    %398 = vector.load %arg4[%c0_182, %c0_183] : memref<2x16xf32, #tpu.memory_space<vmem>>, vector<2x16xf32>
    %cst_184 = arith.constant dense<0.000000e+00> : vector<2x32xf32>
    %399 = tpu.matmul %398, %397, %cst_184 {dimension_numbers = #tpu.dot_dimension_numbers<[1], [0], [0], [1], [0, 0, 1, 1], [], []>} : vector<2x16xf32>, vector<16x32xf32>, vector<2x32xf32> -> vector<2x32xf32>
    %c0_185 = arith.constant 0 : index
    %c0_186 = arith.constant 0 : index
    %400 = vector.load %arg18[%c0_185, %c0_186] : memref<1x32xf32, #tpu.memory_space<vmem>>, vector<1x32xf32>
    %c0_187 = arith.constant 0 : index
    %c0_188 = arith.constant 0 : index
    %401 = vector.load %arg19[%c0_187, %c0_188] : memref<1x32xf32, #tpu.memory_space<vmem>>, vector<1x32xf32>
    %cst_189 = arith.constant dense<0.000000e+00> : vector<2xf32>
    %402 = vector.multi_reduction <add>, %399, %cst_189 [1] : vector<2x32xf32> to vector<2xf32>
    %403 = vector.shape_cast %402 : vector<2xf32> to vector<2x1xf32>
    %cst_190 = arith.constant 3.200000e+01 : f32
    %404 = vector.broadcast %cst_190 : f32 to vector<2x1xf32>
    %405 = arith.divf %403, %404 : vector<2x1xf32>
    %406 = vector.broadcast %405 : vector<2x1xf32> to vector<2x32xf32>
    %407 = arith.subf %399, %406 : vector<2x32xf32>
    %408 = arith.mulf %407, %407 : vector<2x32xf32>
    %cst_191 = arith.constant dense<0.000000e+00> : vector<2xf32>
    %409 = vector.multi_reduction <add>, %408, %cst_191 [1] : vector<2x32xf32> to vector<2xf32>
    %410 = vector.shape_cast %409 : vector<2xf32> to vector<2x1xf32>
    %cst_192 = arith.constant 3.200000e+01 : f32
    %411 = vector.broadcast %cst_192 : f32 to vector<2x1xf32>
    %412 = arith.divf %410, %411 : vector<2x1xf32>
    %cst_193 = arith.constant 9.99999974E-6 : f32
    %413 = vector.broadcast %cst_193 : f32 to vector<2x1xf32>
    %414 = arith.addf %412, %413 : vector<2x1xf32>
    %415 = math.rsqrt %414 : vector<2x1xf32>
    %416 = vector.broadcast %415 : vector<2x1xf32> to vector<2x32xf32>
    %417 = arith.mulf %407, %416 : vector<2x32xf32>
    %418 = vector.broadcast %400 : vector<1x32xf32> to vector<2x32xf32>
    %419 = arith.mulf %417, %418 : vector<2x32xf32>
    %420 = vector.broadcast %401 : vector<1x32xf32> to vector<2x32xf32>
    %421 = arith.addf %419, %420 : vector<2x32xf32>
    %c0_194 = arith.constant 0 : index
    %c0_195 = arith.constant 0 : index
    %422 = vector.load %arg20[%c0_194, %c0_195] : memref<32x10xf32, #tpu.memory_space<vmem>>, vector<32x10xf32>
    %cst_196 = arith.constant dense<0.000000e+00> : vector<2x10xf32>
    %423 = tpu.matmul %421, %422, %cst_196 {dimension_numbers = #tpu.dot_dimension_numbers<[1], [0], [0], [1], [0, 0, 1, 1], [], []>} : vector<2x32xf32>, vector<32x10xf32>, vector<2x10xf32> -> vector<2x10xf32>
    %c0_197 = arith.constant 0 : index
    %c0_198 = arith.constant 0 : index
    %424 = vector.load %arg21[%c0_197, %c0_198] : memref<1x10xf32, #tpu.memory_space<vmem>>, vector<1x10xf32>
    %425 = vector.broadcast %424 : vector<1x10xf32> to vector<2x10xf32>
    %426 = arith.addf %423, %425 : vector<2x10xf32>
    %c0_199 = arith.constant 0 : index
    %c0_200 = arith.constant 0 : index
    %427 = vector.load %arg22[%c0_199, %c0_200] : memref<2x10xf32, #tpu.memory_space<vmem>>, vector<2x10xf32>
    tpu.vector_store %arg22[%c0_199, %c0_200], %426 {strides = array<i32>} : memref<2x10xf32, #tpu.memory_space<vmem>>, vector<2x10xf32>,
    return
  }
  func.func @transform_0(%arg0: i32) -> (i32, i32) {
    %c0_i32 = arith.constant 0 : i32
    %c0_i32_0 = arith.constant 0 : i32
    %c0_i32_1 = arith.constant 0 : i32
    return %c0_i32, %c0_i32_0 : i32, i32
  }
  func.func @transform_1(%arg0: i32) -> (i32, i32) {
    %c0_i32 = arith.constant 0 : i32
    %c0_i32_0 = arith.constant 0 : i32
    %c0_i32_1 = arith.constant 0 : i32
    return %c0_i32, %c0_i32_0 : i32, i32
  }
  func.func @transform_2(%arg0: i32) -> (i32, i32) {
    %c0_i32 = arith.constant 0 : i32
    %c0_i32_0 = arith.constant 0 : i32
    %c0_i32_1 = arith.constant 0 : i32
    return %c0_i32, %c0_i32_0 : i32, i32
  }
  func.func @transform_3(%arg0: i32) -> (i32, i32) {
    %c0_i32 = arith.constant 0 : i32
    %c0_i32_0 = arith.constant 0 : i32
    %c0_i32_1 = arith.constant 0 : i32
    return %c0_i32, %c0_i32_0 : i32, i32
  }
  func.func @transform_4(%arg0: i32) -> (i32, i32) {
    %c0_i32 = arith.constant 0 : i32
    %c0_i32_0 = arith.constant 0 : i32
    %c0_i32_1 = arith.constant 0 : i32
    return %c0_i32, %c0_i32_0 : i32, i32
  }
  func.func @transform_5(%arg0: i32) -> (i32, i32, i32) {
    %c0_i32 = arith.constant 0 : i32
    %c0_i32_0 = arith.constant 0 : i32
    %c0_i32_1 = arith.constant 0 : i32
    %c0_i32_2 = arith.constant 0 : i32
    return %c0_i32, %c0_i32_0, %c0_i32_1 : i32, i32, i32
  }
  func.func @transform_6(%arg0: i32) -> (i32, i32, i32) {
    %c0_i32 = arith.constant 0 : i32
    %c0_i32_0 = arith.constant 0 : i32
    %c0_i32_1 = arith.constant 0 : i32
    %c0_i32_2 = arith.constant 0 : i32
    return %c0_i32, %c0_i32_0, %c0_i32_1 : i32, i32, i32
  }
  func.func @transform_7(%arg0: i32) -> (i32, i32, i32) {
    %c0_i32 = arith.constant 0 : i32
    %c0_i32_0 = arith.constant 0 : i32
    %c0_i32_1 = arith.constant 0 : i32
    %c0_i32_2 = arith.constant 0 : i32
    return %c0_i32, %c0_i32_0, %c0_i32_1 : i32, i32, i32
  }
  func.func @transform_8(%arg0: i32) -> (i32, i32, i32) {
    %c0_i32 = arith.constant 0 : i32
    %c0_i32_0 = arith.constant 0 : i32
    %c0_i32_1 = arith.constant 0 : i32
    %c0_i32_2 = arith.constant 0 : i32
    return %c0_i32, %c0_i32_0, %c0_i32_1 : i32, i32, i32
  }
  func.func @transform_9(%arg0: i32) -> (i32, i32, i32) {
    %c0_i32 = arith.constant 0 : i32
    %c0_i32_0 = arith.constant 0 : i32
    %c0_i32_1 = arith.constant 0 : i32
    %c0_i32_2 = arith.constant 0 : i32
    return %c0_i32, %c0_i32_0, %c0_i32_1 : i32, i32, i32
  }
  func.func @transform_10(%arg0: i32) -> (i32, i32, i32) {
    %c0_i32 = arith.constant 0 : i32
    %c0_i32_0 = arith.constant 0 : i32
    %c0_i32_1 = arith.constant 0 : i32
    %c0_i32_2 = arith.constant 0 : i32
    return %c0_i32, %c0_i32_0, %c0_i32_1 : i32, i32, i32
  }
  func.func @transform_11(%arg0: i32) -> (i32, i32, i32) {
    %c0_i32 = arith.constant 0 : i32
    %c0_i32_0 = arith.constant 0 : i32
    %c0_i32_1 = arith.constant 0 : i32
    %c0_i32_2 = arith.constant 0 : i32
    return %c0_i32, %c0_i32_0, %c0_i32_1 : i32, i32, i32
  }
  func.func @transform_12(%arg0: i32) -> (i32, i32, i32) {
    %c0_i32 = arith.constant 0 : i32
    %c0_i32_0 = arith.constant 0 : i32
    %c0_i32_1 = arith.constant 0 : i32
    %c0_i32_2 = arith.constant 0 : i32
    return %c0_i32, %c0_i32_0, %c0_i32_1 : i32, i32, i32
  }
  func.func @transform_13(%arg0: i32) -> (i32, i32, i32) {
    %c0_i32 = arith.constant 0 : i32
    %c0_i32_0 = arith.constant 0 : i32
    %c0_i32_1 = arith.constant 0 : i32
    %c0_i32_2 = arith.constant 0 : i32
    return %c0_i32, %c0_i32_0, %c0_i32_1 : i32, i32, i32
  }
  func.func @transform_14(%arg0: i32) -> (i32, i32, i32) {
    %c0_i32 = arith.constant 0 : i32
    %c0_i32_0 = arith.constant 0 : i32
    %c0_i32_1 = arith.constant 0 : i32
    %c0_i32_2 = arith.constant 0 : i32
    return %c0_i32, %c0_i32_0, %c0_i32_1 : i32, i32, i32
  }
  func.func @transform_15(%arg0: i32) -> (i32, i32, i32) {
    %c0_i32 = arith.constant 0 : i32
    %c0_i32_0 = arith.constant 0 : i32
    %c0_i32_1 = arith.constant 0 : i32
    %c0_i32_2 = arith.constant 0 : i32
    return %c0_i32, %c0_i32_0, %c0_i32_1 : i32, i32, i32
  }
  func.func @transform_16(%arg0: i32) -> (i32, i32, i32) {
    %c0_i32 = arith.constant 0 : i32
    %c0_i32_0 = arith.constant 0 : i32
    %c0_i32_1 = arith.constant 0 : i32
    %c0_i32_2 = arith.constant 0 : i32
    return %c0_i32, %c0_i32_0, %c0_i32_1 : i32, i32, i32
  }
  func.func @transform_17(%arg0: i32) -> (i32, i32) {
    %c0_i32 = arith.constant 0 : i32
    %c0_i32_0 = arith.constant 0 : i32
    %c0_i32_1 = arith.constant 0 : i32
    return %c0_i32, %c0_i32_0 : i32, i32
  }
  func.func @transform_18(%arg0: i32) -> (i32, i32) {
    %c0_i32 = arith.constant 0 : i32
    %c0_i32_0 = arith.constant 0 : i32
    %c0_i32_1 = arith.constant 0 : i32
    return %c0_i32, %c0_i32_0 : i32, i32
  }
  func.func @transform_19(%arg0: i32) -> (i32, i32) {
    %c0_i32 = arith.constant 0 : i32
    %c0_i32_0 = arith.constant 0 : i32
    %c0_i32_1 = arith.constant 0 : i32
    return %c0_i32, %c0_i32_0 : i32, i32
  }
  func.func @transform_20(%arg0: i32) -> (i32, i32) {
    %c0_i32 = arith.constant 0 : i32
    %c0_i32_0 = arith.constant 0 : i32
    %c0_i32_1 = arith.constant 0 : i32
    return %c0_i32, %c0_i32_0 : i32, i32
  }
  func.func @transform_21(%arg0: i32) -> (i32, i32) {
    %c0_i32 = arith.constant 0 : i32
    %c0_i32_0 = arith.constant 0 : i32
    %c0_i32_1 = arith.constant 0 : i32
    return %c0_i32, %c0_i32_0 : i32, i32
  }
}

</mosaic_0001>

<llo_original>
// kernel: vit_forward.1
$region0: #{vit_forward.1}
  #allocation0 [shape = 'u32[]', space=smem, size = 0x4, offset = 0x4, fixed_abs, tag = 'smem constant byte address 0x4 - core index']
  #allocation1 [shape = 'u32[144,128]{1,0:T(1,128)}', space=vmem, size = 0x12000, scoped, tag = 'internal scratch']
  %s0 = inlined_call_operand.vmem [shape: f32[16,256], index: 0, kind: input, shape index: {}]
  %s1 = inlined_call_operand.vmem [shape: f32[16,32], index: 1, kind: input, shape index: {}]
  %s2 = inlined_call_operand.vmem [shape: f32[16,16], index: 2, kind: input, shape index: {}]
  %s3 = inlined_call_operand.vmem [shape: f32[2,16], index: 3, kind: input, shape index: {}]
  %s4 = inlined_call_operand.vmem [shape: f32[256,32], index: 4, kind: input, shape index: {}]
  %s5 = inlined_call_operand.vmem [shape: f32[2,1,32], index: 5, kind: input, shape index: {}]
  %s6 = inlined_call_operand.vmem [shape: f32[2,1,32], index: 6, kind: input, shape index: {}]
  %s7 = inlined_call_operand.vmem [shape: f32[2,32,96], index: 7, kind: input, shape index: {}]
  %s8 = inlined_call_operand.vmem [shape: f32[2,1,96], index: 8, kind: input, shape index: {}]
  %s9 = inlined_call_operand.vmem [shape: f32[2,32,32], index: 9, kind: input, shape index: {}]
  %s10 = inlined_call_operand.vmem [shape: f32[2,1,32], index: 10, kind: input, shape index: {}]
  %s11 = inlined_call_operand.vmem [shape: f32[2,1,32], index: 11, kind: input, shape index: {}]
  %s12 = inlined_call_operand.vmem [shape: f32[2,1,32], index: 12, kind: input, shape index: {}]
  %s13 = inlined_call_operand.vmem [shape: f32[2,32,64], index: 13, kind: input, shape index: {}]
  %s14 = inlined_call_operand.vmem [shape: f32[2,1,64], index: 14, kind: input, shape index: {}]
  %s15 = inlined_call_operand.vmem [shape: f32[2,64,32], index: 15, kind: input, shape index: {}]
  %s16 = inlined_call_operand.vmem [shape: f32[2,1,32], index: 16, kind: input, shape index: {}]
  %s17 = inlined_call_operand.vmem [shape: f32[1,32], index: 17, kind: input, shape index: {}]
  %s18 = inlined_call_operand.vmem [shape: f32[1,32], index: 18, kind: input, shape index: {}]
  %s19 = inlined_call_operand.vmem [shape: f32[32,10], index: 19, kind: input, shape index: {}]
  %s20 = inlined_call_operand.vmem [shape: f32[1,10], index: 20, kind: input, shape index: {}]
  %s21 = inlined_call_operand.hbm [shape: f32[2,10], index: 21, kind: output, shape index: {}]
  %s22 = sld [smem:[#allocation0]]
  $region94: #{vit_forward.1} parent=0
    _
  %s24 = ssub.s32 1, %s22
  %s25 = scalar_select 0, %s24, %s22
  $region1: #{vit_forward.1} parent=0
    #allocation2 [shape = 'u8[1024]{0}', space=vmem, size = 0x400, scoped, tag = 'output window, operand 0, single buffered']
    #allocation3 [shape = 's32[1]{0}', space=sflag, size = 0x4, scoped, tag = 'scoped memory for vit_forward.1']
    %26 = vsyncpa [#allocation3], 0
    // Predicated region
    $region2: #{vit_forward.1} parent=1 // pred_check
      _
    $region3: #{vit_forward.1} parent=1 // pred_check_branch
      %28 = sbr.rel (0) target = $region5
    $region4: #{vit_forward.1} parent=1 // pred_region
      _
    $region5: #{vit_forward.1} parent=1 // pred_fallthru
      _
    // Predicated region
    $region6: #{vit_forward.1} parent=1 // pred_check
      _
    $region7: #{vit_forward.1} parent=1 // pred_check_branch
      %30 = sbr.rel (0) target = $region9
    $region8: #{vit_forward.1} parent=1 // pred_region
      _
    $region9: #{vit_forward.1} parent=1 // pred_fallthru
      _
    // Predicated region
    $region10: #{vit_forward.1} parent=1 // pred_check
      _
    $region11: #{vit_forward.1} parent=1 // pred_check_branch
      %32 = sbr.rel (0) target = $region13
    $region12: #{vit_forward.1} parent=1 // pred_region
      _
    $region13: #{vit_forward.1} parent=1 // pred_fallthru
      _
    // Predicated region
    $region14: #{vit_forward.1} parent=1 // pred_check
      _
    $region15: #{vit_forward.1} parent=1 // pred_check_branch
      %34 = sbr.rel (0) target = $region17
    $region16: #{vit_forward.1} parent=1 // pred_region
      _
    $region17: #{vit_forward.1} parent=1 // pred_fallthru
      _
    // Predicated region
    $region18: #{vit_forward.1} parent=1 // pred_check
      _
    $region19: #{vit_forward.1} parent=1 // pred_check_branch
      %36 = sbr.rel (0) target = $region21
    $region20: #{vit_forward.1} parent=1 // pred_region
      _
    $region21: #{vit_forward.1} parent=1 // pred_fallthru
      _
    // Predicated region
    $region22: #{vit_forward.1} parent=1 // pred_check
      _
    $region23: #{vit_forward.1} parent=1 // pred_check_branch
      %38 = sbr.rel (0) target = $region25
    $region24: #{vit_forward.1} parent=1 // pred_region
      _
    $region25: #{vit_forward.1} parent=1 // pred_fallthru
      _
    // Predicated region
    $region26: #{vit_forward.1} parent=1 // pred_check
      _
    $region27: #{vit_forward.1} parent=1 // pred_check_branch
      %40 = sbr.rel (0) target = $region29
    $region28: #{vit_forward.1} parent=1 // pred_region
      _
    $region29: #{vit_forward.1} parent=1 // pred_fallthru
      _
    // Predicated region
    $region30: #{vit_forward.1} parent=1 // pred_check
      _
    $region31: #{vit_forward.1} parent=1 // pred_check_branch
      %42 = sbr.rel (0) target = $region33
    $region32: #{vit_forward.1} parent=1 // pred_region
      _
    $region33: #{vit_forward.1} parent=1 // pred_fallthru
      _
    // Predicated region
    $region34: #{vit_forward.1} parent=1 // pred_check
      _
    $region35: #{vit_forward.1} parent=1 // pred_check_branch
      %44 = sbr.rel (0) target = $region37
    $region36: #{vit_forward.1} parent=1 // pred_region
      _
    $region37: #{vit_forward.1} parent=1 // pred_fallthru
      _
    // Predicated region
    $region38: #{vit_forward.1} parent=1 // pred_check
      _
    $region39: #{vit_forward.1} parent=1 // pred_check_branch
      %46 = sbr.rel (0) target = $region41
    $region40: #{vit_forward.1} parent=1 // pred_region
      _
    $region41: #{vit_forward.1} parent=1 // pred_fallthru
      _
    // Predicated region
    $region42: #{vit_forward.1} parent=1 // pred_check
      _
    $region43: #{vit_forward.1} parent=1 // pred_check_branch
      %48 = sbr.rel (0) target = $region45
    $region44: #{vit_forward.1} parent=1 // pred_region
      _
    $region45: #{vit_forward.1} parent=1 // pred_fallthru
      _
    // Predicated region
    $region46: #{vit_forward.1} parent=1 // pred_check
      _
    $region47: #{vit_forward.1} parent=1 // pred_check_branch
      %50 = sbr.rel (0) target = $region49
    $region48: #{vit_forward.1} parent=1 // pred_region
      _
    $region49: #{vit_forward.1} parent=1 // pred_fallthru
      _
    // Predicated region
    $region50: #{vit_forward.1} parent=1 // pred_check
      _
    $region51: #{vit_forward.1} parent=1 // pred_check_branch
      %52 = sbr.rel (0) target = $region53
    $region52: #{vit_forward.1} parent=1 // pred_region
      _
    $region53: #{vit_forward.1} parent=1 // pred_fallthru
      _
    // Predicated region
    $region54: #{vit_forward.1} parent=1 // pred_check
      _
    $region55: #{vit_forward.1} parent=1 // pred_check_branch
      %54 = sbr.rel (0) target = $region57
    $region56: #{vit_forward.1} parent=1 // pred_region
      _
    $region57: #{vit_forward.1} parent=1 // pred_fallthru
      _
    // Predicated region
    $region58: #{vit_forward.1} parent=1 // pred_check
      _
    $region59: #{vit_forward.1} parent=1 // pred_check_branch
      %56 = sbr.rel (0) target = $region61
    $region60: #{vit_forward.1} parent=1 // pred_region
      _
    $region61: #{vit_forward.1} parent=1 // pred_fallthru
      _
    // Predicated region
    $region62: #{vit_forward.1} parent=1 // pred_check
      _
    $region63: #{vit_forward.1} parent=1 // pred_check_branch
      %58 = sbr.rel (0) target = $region65
    $region64: #{vit_forward.1} parent=1 // pred_region
      _
    $region65: #{vit_forward.1} parent=1 // pred_fallthru
      _
    // Predicated region
    $region66: #{vit_forward.1} parent=1 // pred_check
      _
    $region67: #{vit_forward.1} parent=1 // pred_check_branch
      %60 = sbr.rel (0) target = $region69
    $region68: #{vit_forward.1} parent=1 // pred_region
      _
    $region69: #{vit_forward.1} parent=1 // pred_fallthru
      _
    // Predicated region
    $region70: #{vit_forward.1} parent=1 // pred_check
      _
    $region71: #{vit_forward.1} parent=1 // pred_check_branch
      %62 = sbr.rel (0) target = $region73
    $region72: #{vit_forward.1} parent=1 // pred_region
      _
    $region73: #{vit_forward.1} parent=1 // pred_fallthru
      _
    // Predicated region
    $region74: #{vit_forward.1} parent=1 // pred_check
      _
    $region75: #{vit_forward.1} parent=1 // pred_check_branch
      %64 = sbr.rel (0) target = $region77
    $region76: #{vit_forward.1} parent=1 // pred_region
      _
    $region77: #{vit_forward.1} parent=1 // pred_fallthru
      _
    // Predicated region
    $region78: #{vit_forward.1} parent=1 // pred_check
      _
    $region79: #{vit_forward.1} parent=1 // pred_check_branch
      %66 = sbr.rel (0) target = $region81
    $region80: #{vit_forward.1} parent=1 // pred_region
      _
    $region81: #{vit_forward.1} parent=1 // pred_fallthru
      _
    // Predicated region
    $region82: #{vit_forward.1} parent=1 // pred_check
      _
    $region83: #{vit_forward.1} parent=1 // pred_check_branch
      %68 = sbr.rel (0) target = $region85
    $region84: #{vit_forward.1} parent=1 // pred_region
      _
    $region85: #{vit_forward.1} parent=1 // pred_fallthru
      _
    %v69 = vld [vmem:[%s1] sm:$0xff]
    %v70 = vld [vmem:[%s1 + $0x8] sm:$0xff]
    %v71 = vld [vmem:[%s0] sm:$0xff]
    %v72 = vld [vmem:[%s0 + $0x8] sm:$0xff]
    %v73 = vld [vmem:[%s0 + $0x10] sm:$0xff]
    %v74 = vld [vmem:[%s0 + $0x18] sm:$0xff]
    %v75 = vld [vmem:[%s4] sm:$0xff]
    %v76 = vld [vmem:[%s4 + $0x8] sm:$0xff]
    %v77 = vld [vmem:[%s4 + $0x10] sm:$0xff]
    %v78 = vld [vmem:[%s4 + $0x18] sm:$0xff]
    %v79 = vld [vmem:[%s4 + $0x20] sm:$0xff]
    %v80 = vld [vmem:[%s4 + $0x28] sm:$0xff]
    %v81 = vld [vmem:[%s4 + $0x30] sm:$0xff]
    %v82 = vld [vmem:[%s4 + $0x38] sm:$0xff]
    %v83 = vld [vmem:[%s4 + $0x40] sm:$0xff]
    %v84 = vld [vmem:[%s4 + $0x48] sm:$0xff]
    %v85 = vld [vmem:[%s4 + $0x50] sm:$0xff]
    %v86 = vld [vmem:[%s4 + $0x58] sm:$0xff]
    %v87 = vld [vmem:[%s4 + $0x60] sm:$0xff]
    %v88 = vld [vmem:[%s4 + $0x68] sm:$0xff]
    %v89 = vld [vmem:[%s4 + $0x70] sm:$0xff]
    %v90 = vld [vmem:[%s4 + $0x78] sm:$0xff]
    %v91 = vld [vmem:[%s4 + $0x80] sm:$0xff]
    %v92 = vld [vmem:[%s4 + $0x88] sm:$0xff]
    %v93 = vld [vmem:[%s4 + $0x90] sm:$0xff]
    %v94 = vld [vmem:[%s4 + $0x98] sm:$0xff]
    %v95 = vld [vmem:[%s4 + $0xa0] sm:$0xff]
    %v96 = vld [vmem:[%s4 + $0xa8] sm:$0xff]
    %v97 = vld [vmem:[%s4 + $0xb0] sm:$0xff]
    %v98 = vld [vmem:[%s4 + $0xb8] sm:$0xff]
    %v99 = vld [vmem:[%s4 + $0xc0] sm:$0xff]
    %v100 = vld [vmem:[%s4 + $0xc8] sm:$0xff]
    %v101 = vld [vmem:[%s4 + $0xd0] sm:$0xff]
    %v102 = vld [vmem:[%s4 + $0xd8] sm:$0xff]
    %v103 = vld [vmem:[%s4 + $0xe0] sm:$0xff]
    %v104 = vld [vmem:[%s4 + $0xe8] sm:$0xff]
    %v105 = vld [vmem:[%s4 + $0xf0] sm:$0xff]
    %v106 = vld [vmem:[%s4 + $0xf8] sm:$0xff]
    %107 = vmatprep.subr.mxu0 0.0
    %108 = vmatpush1.msra.mxu0 %v90
    %109 = vmatprep.subr.mxu0 0.0
    %110 = vmatpush1.msra.mxu0 %v89
    %111 = vmatprep.subr.mxu0 0.0
    %112 = vmatpush1.msra.mxu0 %v88
    %113 = vmatprep.subr.mxu0 0.0
    %114 = vmatpush1.msra.mxu0 %v87
    %115 = vmatprep.subr.mxu0 0.0
    %116 = vmatpush1.msra.mxu0 %v86
    %117 = vmatprep.subr.mxu0 0.0
    %118 = vmatpush1.msra.mxu0 %v85
    %119 = vmatprep.subr.mxu0 0.0
    %120 = vmatpush1.msra.mxu0 %v84
    %121 = vmatprep.subr.mxu0 0.0
    %122 = vmatpush1.msra.mxu0 %v83
    %123 = vmatprep.subr.mxu0 0.0
    %124 = vmatpush1.msra.mxu0 %v82
    %125 = vmatprep.subr.mxu0 0.0
    %126 = vmatpush1.msra.mxu0 %v81
    %127 = vmatprep.subr.mxu0 0.0
    %128 = vmatpush1.msra.mxu0 %v80
    %129 = vmatprep.subr.mxu0 0.0
    %130 = vmatpush1.msra.mxu0 %v79
    %131 = vmatprep.subr.mxu0 0.0
    %132 = vmatpush1.msra.mxu0 %v78
    %133 = vmatprep.subr.mxu0 0.0
    %134 = vmatpush1.msra.mxu0 %v77
    %135 = vmatprep.subr.mxu0 0.0
    %136 = vmatpush1.msra.mxu0 %v76
    %137 = vmatprep.subr.mxu0 0.0
    %138 = vmatpush1.msra.mxu0 %v75
    %139 = vmatprep.subr.mxu0 0.0
    %140 = vmatpush2.msra.mxu0 %v106
    %141 = vmatprep.subr.mxu0 0.0
    %142 = vmatpush2.msra.mxu0 %v105
    %143 = vmatprep.subr.mxu0 0.0
    %144 = vmatpush2.msra.mxu0 %v104
    %145 = vmatprep.subr.mxu0 0.0
    %146 = vmatpush2.msra.mxu0 %v103
    %147 = vmatprep.subr.mxu0 0.0
    %148 = vmatpush2.msra.mxu0 %v102
    %149 = vmatprep.subr.mxu0 0.0
    %150 = vmatpush2.msra.mxu0 %v101
    %151 = vmatprep.subr.mxu0 0.0
    %152 = vmatpush2.msra.mxu0 %v100
    %153 = vmatprep.subr.mxu0 0.0
    %154 = vmatpush2.msra.mxu0 %v99
    %155 = vmatprep.subr.mxu0 0.0
    %156 = vmatpush2.msra.mxu0 %v98
    %157 = vmatprep.subr.mxu0 0.0
    %158 = vmatpush2.msra.mxu0 %v97
    %159 = vmatprep.subr.mxu0 0.0
    %160 = vmatpush2.msra.mxu0 %v96
    %161 = vmatprep.subr.mxu0 0.0
    %162 = vmatpush2.msra.mxu0 %v95
    %163 = vmatprep.subr.mxu0 0.0
    %164 = vmatpush2.msra.mxu0 %v94
    %165 = vmatprep.subr.mxu0 0.0
    %166 = vmatpush2.msra.mxu0 %v93
    %167 = vmatprep.subr.mxu0 0.0
    %168 = vmatpush2.msra.mxu0 %v92
    %169 = vmatprep.subr.mxu0 0.0
    %170 = vmatpush2.msra.mxu0 %v91
    %171 = vmatprep.mubr.f32.mxu0 %v72
    %172 = vmatmul.mubr.f32.gmra.mxu0 %v71
    %v173 = vpop.f32.mrf.mxu0
    %v174 = vadd.f32 0.0, %v173
    %v175 = vpop.f32.mrf.mxu0
    %176 = vmatprep.mubr.f32.mxu0 %v74
    %177 = vmatmul.mubr.f32.gmra.mxu0 %v73
    %v178 = vpop.f32.mrf.mxu0
    %v179 = vadd.f32 0.0, %v178
    %v180 = vpop.f32.mrf.mxu0
    %181 = vdwg.mxu0
    %v182 = vadd.f32 %v69, %v174
    %v183 = vadd.f32 %v70, %v179
    %v184 = vld [vmem:[%s2] sm:$0xff]
    %v185 = vld [vmem:[%s2 + $0x8] sm:$0xff]
    %v186 = vld [vmem:[%s5] sm:$0x1]
    %v187 = vld [vmem:[%s6] sm:$0x1]
    %vm188 = vcmask 261120
    %v189 = vsel %vm188, %v182, 0.0
    %190 = vadd.xlane.f32.xlu0 %v189
    %v191 = vpop.xlane.xlu0 %190
    %v192 = vsel %vm188, %v183, 0.0
    %193 = vadd.xlane.f32.xlu0 %v192
    %v194 = vpop.xlane.xlu0 %193
    %v195 = vrcp.pop 32.0
    %v196 = vmul.f32 %v191, %v195
    %v197 = vmul.f32 %v194, %v195
    %v198 = vsub.f32 %v182, %v196
    %v199 = vsub.f32 %v183, %v197
    %v200 = vmul.f32 %v198, %v198
    %v201 = vmul.f32 %v199, %v199
    %v202 = vsel %vm188, %v200, 0.0
    %203 = vadd.xlane.f32.xlu0 %v202
    %v204 = vpop.xlane.xlu0 %203
    %v205 = vsel %vm188, %v201, 0.0
    %206 = vadd.xlane.f32.xlu0 %v205
    %v207 = vpop.xlane.xlu0 %206
    %v208 = vmul.f32 %v204, %v195
    %v209 = vmul.f32 %v207, %v195
    %v210 = vadd.f32 %v208, 1e-05
    %v211 = vadd.f32 %v209, 1e-05
    %v212 = vrsqrt.pop %v210
    %v213 = vrsqrt.pop %v211
    %v214 = vmul.f32 %v198, %v212
    %v215 = vmul.f32 %v199, %v213
    %v217 = vlaneseq
    %v218 = vshrl.u32 %v217, 7
    %v219 = vsub.s32 0, %v218
    %v220 = vrot.slane %v186, %v219
    %v222 = vmul.f32 %v214, %v220
    %v223 = vmul.f32 %v215, %v220
    %v225 = vlaneseq
    %v226 = vshrl.u32 %v225, 7
    %v227 = vsub.s32 0, %v226
    %v228 = vrot.slane %v187, %v227
    %v230 = vadd.f32 %v222, %v228
    %v231 = vadd.f32 %v223, %v228
    %v232 = vld [vmem:[%s7] sm:$0xff]
    %v233 = vld [vmem:[%s7 + $0x8] sm:$0xff]
    %v234 = vld [vmem:[%s7 + $0x10] sm:$0xff]
    %v235 = vld [vmem:[%s7 + $0x18] sm:$0xff]
    %v236 = vld [vmem:[%s8] sm:$0x1]
    %v238 = vlaneseq
    %v239 = vshrl.u32 %v238, 7
    %v240 = vsub.s32 0, %v239
    %v241 = vrot.slane %v236, %v240
    %v244 = vsel %vm188, %v230, 0
    %v247 = vsel %vm188, %v231, 0
    %249 = vmatprep.subr.mxu0 0.0
    %250 = vmatpush1.msra.mxu0 0.0
    %251 = vmatprep.subr.mxu0 0.0
    %252 = vmatpush1.msra.mxu0 0.0
    %253 = vmatprep.subr.mxu0 0.0
    %254 = vmatpush1.msra.mxu0 0.0
    %255 = vmatprep.subr.mxu0 0.0
    %256 = vmatpush1.msra.mxu0 0.0
    %257 = vmatprep.subr.mxu0 0.0
    %258 = vmatpush1.msra.mxu0 0.0
    %259 = vmatprep.subr.mxu0 0.0
    %260 = vmatpush1.msra.mxu0 0.0
    %261 = vmatprep.subr.mxu0 0.0
    %262 = vmatpush1.msra.mxu0 0.0
    %263 = vmatprep.subr.mxu0 0.0
    %264 = vmatpush1.msra.mxu0 0.0
    %265 = vmatprep.subr.mxu0 0.0
    %266 = vmatpush1.msra.mxu0 0.0
    %267 = vmatprep.subr.mxu0 0.0
    %268 = vmatpush1.msra.mxu0 0.0
    %269 = vmatprep.subr.mxu0 0.0
    %270 = vmatpush1.msra.mxu0 0.0
    %271 = vmatprep.subr.mxu0 0.0
    %272 = vmatpush1.msra.mxu0 0.0
    %273 = vmatprep.subr.mxu0 0.0
    %274 = vmatpush1.msra.mxu0 %v235
    %275 = vmatprep.subr.mxu0 0.0
    %276 = vmatpush1.msra.mxu0 %v234
    %277 = vmatprep.subr.mxu0 0.0
    %278 = vmatpush1.msra.mxu0 %v233
    %279 = vmatprep.subr.mxu0 0.0
    %280 = vmatpush1.msra.mxu0 %v232
    %281 = vmatprep.subr.mxu0 0.0
    %282 = vmatpush2.msra.mxu0 0.0
    %283 = vmatprep.subr.mxu0 0.0
    %284 = vmatpush2.msra.mxu0 0.0
    %285 = vmatprep.subr.mxu0 0.0
    %286 = vmatpush2.msra.mxu0 0.0
    %287 = vmatprep.subr.mxu0 0.0
    %288 = vmatpush2.msra.mxu0 0.0
    %289 = vmatprep.subr.mxu0 0.0
    %290 = vmatpush2.msra.mxu0 0.0
    %291 = vmatprep.subr.mxu0 0.0
    %292 = vmatpush2.msra.mxu0 0.0
    %293 = vmatprep.subr.mxu0 0.0
    %294 = vmatpush2.msra.mxu0 0.0
    %295 = vmatprep.subr.mxu0 0.0
    %296 = vmatpush2.msra.mxu0 0.0
    %297 = vmatprep.subr.mxu0 0.0
    %298 = vmatpush2.msra.mxu0 0.0
    %299 = vmatprep.subr.mxu0 0.0
    %300 = vmatpush2.msra.mxu0 0.0
    %301 = vmatprep.subr.mxu0 0.0
    %302 = vmatpush2.msra.mxu0 0.0
    %303 = vmatprep.subr.mxu0 0.0
    %304 = vmatpush2.msra.mxu0 0.0
    %305 = vmatprep.subr.mxu0 0.0
    %306 = vmatpush2.msra.mxu0 0.0
    %307 = vmatprep.subr.mxu0 0.0
    %308 = vmatpush2.msra.mxu0 0.0
    %309 = vmatprep.subr.mxu0 0.0
    %310 = vmatpush2.msra.mxu0 0.0
    %311 = vmatprep.subr.mxu0 0.0
    %312 = vmatpush2.msra.mxu0 0.0
    %313 = vmatprep.mubr.f32.mxu0 0.0
    %314 = vmatmul.mubr.f32.gmra.mxu0 %v244
    %v315 = vpop.f32.mrf.mxu0
    %v316 = vadd.f32 %v241, %v315
    %v317 = vpop.f32.mrf.mxu0
    %318 = vmatprep.mubr.f32.mxu0 0.0
    %319 = vmatmul.mubr.f32.gmra.mxu0 %v247
    %v320 = vpop.f32.mrf.mxu0
    %v321 = vadd.f32 %v241, %v320
    %v322 = vpop.f32.mrf.mxu0
    %323 = vdwg.mxu0
    %v324 = vld [vmem:[%s9] sm:$0xff]
    %v325 = vld [vmem:[%s9 + $0x8] sm:$0xff]
    %v326 = vld [vmem:[%s9 + $0x10] sm:$0xff]
    %v327 = vld [vmem:[%s9 + $0x18] sm:$0xff]
    %v328 = vld [vmem:[%s10] sm:$0x1]
    %331 = vrot.lane.b32.xlu0 %v316, 96
    %v332 = vpop.permute.xlu0 %331
    %333 = vrot.lane.b32.xlu0 %v321, 96
    %v334 = vpop.permute.xlu0 %333
    %vm335 = vcmask 64512
    %v336 = vsel %vm335, %v316, 0
    %v338 = vsel %vm335, %v321, 0
    %v340 = vsel %vm335, %v332, 0
    %v342 = vsel %vm335, %v334, 0
    %344 = vmatprep.subr.mxu0 0.0
    %345 = vmatpush1.xpose.msra.mxu0 0.0
    %346 = vmatprep.subr.mxu0 0.0
    %347 = vmatpush1.xpose.msra.mxu0 0.0
    %348 = vmatprep.subr.mxu0 0.0
    %349 = vmatpush1.xpose.msra.mxu0 0.0
    %350 = vmatprep.subr.mxu0 0.0
    %351 = vmatpush1.xpose.msra.mxu0 0.0
    %352 = vmatprep.subr.mxu0 0.0
    %353 = vmatpush1.xpose.msra.mxu0 0.0
    %354 = vmatprep.subr.mxu0 0.0
    %355 = vmatpush1.xpose.msra.mxu0 0.0
    %356 = vmatprep.subr.mxu0 0.0
    %357 = vmatpush1.xpose.msra.mxu0 0.0
    %358 = vmatprep.subr.mxu0 0.0
    %359 = vmatpush1.xpose.msra.mxu0 0.0
    %360 = vmatprep.subr.mxu0 0.0
    %361 = vmatpush1.xpose.msra.mxu0 0.0
    %362 = vmatprep.subr.mxu0 0.0
    %363 = vmatpush1.xpose.msra.mxu0 0.0
    %364 = vmatprep.subr.mxu0 0.0
    %365 = vmatpush1.xpose.msra.mxu0 0.0
    %366 = vmatprep.subr.mxu0 0.0
    %367 = vmatpush1.xpose.msra.mxu0 0.0
    %368 = vmatprep.subr.mxu0 0.0
    %369 = vmatpush1.xpose.msra.mxu0 0.0
    %370 = vmatprep.subr.mxu0 0.0
    %371 = vmatpush1.xpose.msra.mxu0 0.0
    %372 = vmatprep.subr.mxu0 0.0
    %373 = vmatpush1.xpose.msra.mxu0 %v342
    %374 = vmatprep.subr.mxu0 0.0
    %375 = vmatpush1.xpose.msra.mxu0 %v340
    %376 = vmatprep.subr.mxu0 0.0
    %377 = vmatpush2.xpose.msra.mxu0 0.0
    %378 = vmatprep.subr.mxu0 0.0
    %379 = vmatpush2.xpose.msra.mxu0 0.0
    %380 = vmatprep.subr.mxu0 0.0
    %381 = vmatpush2.xpose.msra.mxu0 0.0
    %382 = vmatprep.subr.mxu0 0.0
    %383 = vmatpush2.xpose.msra.mxu0 0.0
    %384 = vmatprep.subr.mxu0 0.0
    %385 = vmatpush2.xpose.msra.mxu0 0.0
    %386 = vmatprep.subr.mxu0 0.0
    %387 = vmatpush2.xpose.msra.mxu0 0.0
    %388 = vmatprep.subr.mxu0 0.0
    %389 = vmatpush2.xpose.msra.mxu0 0.0
    %390 = vmatprep.subr.mxu0 0.0
    %391 = vmatpush2.xpose.msra.mxu0 0.0
    %392 = vmatprep.subr.mxu0 0.0
    %393 = vmatpush2.xpose.msra.mxu0 0.0
    %394 = vmatprep.subr.mxu0 0.0
    %395 = vmatpush2.xpose.msra.mxu0 0.0
    %396 = vmatprep.subr.mxu0 0.0
    %397 = vmatpush2.xpose.msra.mxu0 0.0
    %398 = vmatprep.subr.mxu0 0.0
    %399 = vmatpush2.xpose.msra.mxu0 0.0
    %400 = vmatprep.subr.mxu0 0.0
    %401 = vmatpush2.xpose.msra.mxu0 0.0
    %402 = vmatprep.subr.mxu0 0.0
    %403 = vmatpush2.xpose.msra.mxu0 0.0
    %404 = vmatprep.subr.mxu0 0.0
    %405 = vmatpush2.xpose.msra.mxu0 0.0
    %406 = vmatprep.subr.mxu0 0.0
    %407 = vmatpush2.xpose.msra.mxu0 0.0
    %408 = vmatprep.mubr.f32.mxu0 0.0
    %409 = vmatmul.mubr.f32.gmra.mxu0 %v336
    %v410 = vpop.f32.mrf.mxu0
    %v411 = vadd.f32 0.0, %v410
    %v412 = vpop.f32.mrf.mxu0
    %413 = vmatprep.mubr.f32.mxu0 0.0
    %414 = vmatmul.mubr.f32.gmra.mxu0 %v338
    %v415 = vpop.f32.mrf.mxu0
    %v416 = vadd.f32 0.0, %v415
    %v417 = vpop.f32.mrf.mxu0
    %418 = vdwg.mxu0
    %v419 = vmul.f32 %v411, 0.35355338
    %v420 = vmul.f32 %v416, 0.35355338
    %v421 = vadd.f32 %v419, %v184
    %v422 = vadd.f32 %v420, %v185
    %vm423 = vcmask 130048
    %v424 = vsel %vm423, %v421, -inf
    %425 = vmax.xlane.f32.xlu0 %v424
    %v426 = vpop.xlane.xlu0 %425
    %v427 = vsel %vm423, %v422, -inf
    %428 = vmax.xlane.f32.xlu0 %v427
    %v429 = vpop.xlane.xlu0 %428
    %v430 = vsub.f32 %v421, %v426
    %v431 = vsub.f32 %v422, %v429
    %v432 = vmul.f32 %v430, 1.442695
    %v433 = vpow.pop %v432
    %v434 = vmul.f32 %v431, 1.442695
    %v435 = vpow.pop %v434
    %v436 = vsel %vm423, %v433, 0.0
    %437 = vadd.xlane.f32.xlu0 %v436
    %v438 = vpop.xlane.xlu0 %437
    %v439 = vsel %vm423, %v435, 0.0
    %440 = vadd.xlane.f32.xlu0 %v439
    %v441 = vpop.xlane.xlu0 %440
    %v442 = vrcp.pop %v438
    %v443 = vmul.f32 %v433, %v442
    %v444 = vrcp.pop %v441
    %v445 = vmul.f32 %v435, %v444
    %446 = vrot.lane.b32.xlu0 %v316, 64
    %v447 = vpop.permute.xlu0 %446
    %448 = vrot.lane.b32.xlu0 %v321, 64
    %v449 = vpop.permute.xlu0 %448
    %v453 = vsel %vm423, %v443, 0
    %v456 = vsel %vm423, %v445, 0
    %458 = vmatprep.subr.mxu0 0.0
    %459 = vmatpush1.msra.mxu0 0.0
    %460 = vmatprep.subr.mxu0 0.0
    %461 = vmatpush1.msra.mxu0 0.0
    %462 = vmatprep.subr.mxu0 0.0
    %463 = vmatpush1.msra.mxu0 0.0
    %464 = vmatprep.subr.mxu0 0.0
    %465 = vmatpush1.msra.mxu0 0.0
    %466 = vmatprep.subr.mxu0 0.0
    %467 = vmatpush1.msra.mxu0 0.0
    %468 = vmatprep.subr.mxu0 0.0
    %469 = vmatpush1.msra.mxu0 0.0
    %470 = vmatprep.subr.mxu0 0.0
    %471 = vmatpush1.msra.mxu0 0.0
    %472 = vmatprep.subr.mxu0 0.0
    %473 = vmatpush1.msra.mxu0 0.0
    %474 = vmatprep.subr.mxu0 0.0
    %475 = vmatpush1.msra.mxu0 0.0
    %476 = vmatprep.subr.mxu0 0.0
    %477 = vmatpush1.msra.mxu0 0.0
    %478 = vmatprep.subr.mxu0 0.0
    %479 = vmatpush1.msra.mxu0 0.0
    %480 = vmatprep.subr.mxu0 0.0
    %481 = vmatpush1.msra.mxu0 0.0
    %482 = vmatprep.subr.mxu0 0.0
    %483 = vmatpush1.msra.mxu0 0.0
    %484 = vmatprep.subr.mxu0 0.0
    %485 = vmatpush1.msra.mxu0 0.0
    %486 = vmatprep.subr.mxu0 0.0
    %487 = vmatpush1.msra.mxu0 %v449
    %488 = vmatprep.subr.mxu0 0.0
    %489 = vmatpush1.msra.mxu0 %v447
    %490 = vmatprep.subr.mxu0 0.0
    %491 = vmatpush2.msra.mxu0 0.0
    %492 = vmatprep.subr.mxu0 0.0
    %493 = vmatpush2.msra.mxu0 0.0
    %494 = vmatprep.subr.mxu0 0.0
    %495 = vmatpush2.msra.mxu0 0.0
    %496 = vmatprep.subr.mxu0 0.0
    %497 = vmatpush2.msra.mxu0 0.0
    %498 = vmatprep.subr.mxu0 0.0
    %499 = vmatpush2.msra.mxu0 0.0
    %500 = vmatprep.subr.mxu0 0.0
    %501 = vmatpush2.msra.mxu0 0.0
    %502 = vmatprep.subr.mxu0 0.0
    %503 = vmatpush2.msra.mxu0 0.0
    %504 = vmatprep.subr.mxu0 0.0
    %505 = vmatpush2.msra.mxu0 0.0
    %506 = vmatprep.subr.mxu0 0.0
    %507 = vmatpush2.msra.mxu0 0.0
    %508 = vmatprep.subr.mxu0 0.0
    %509 = vmatpush2.msra.mxu0 0.0
    %510 = vmatprep.subr.mxu0 0.0
    %511 = vmatpush2.msra.mxu0 0.0
    %512 = vmatprep.subr.mxu0 0.0
    %513 = vmatpush2.msra.mxu0 0.0
    %514 = vmatprep.subr.mxu0 0.0
    %515 = vmatpush2.msra.mxu0 0.0
    %516 = vmatprep.subr.mxu0 0.0
    %517 = vmatpush2.msra.mxu0 0.0
    %518 = vmatprep.subr.mxu0 0.0
    %519 = vmatpush2.msra.mxu0 0.0
    %520 = vmatprep.subr.mxu0 0.0
    %521 = vmatpush2.msra.mxu0 0.0
    %522 = vmatprep.mubr.f32.mxu0 0.0
    %523 = vmatmul.mubr.f32.gmra.mxu0 %v453
    %v524 = vpop.f32.mrf.mxu0
    %v525 = vadd.f32 0.0, %v524
    %v526 = vpop.f32.mrf.mxu0
    %527 = vmatprep.mubr.f32.mxu0 0.0
    %528 = vmatmul.mubr.f32.gmra.mxu0 %v456
    %v529 = vpop.f32.mrf.mxu0
    %v530 = vadd.f32 0.0, %v529
    %v531 = vpop.f32.mrf.mxu0
    %532 = vdwg.mxu0
    %v534 = vsel %vm335, %v525, 0
    %v537 = vsel %vm335, %v530, 0
    %539 = vmatprep.subr.mxu0 0.0
    %540 = vmatpush1.msra.mxu0 0.0
    %541 = vmatprep.subr.mxu0 0.0
    %542 = vmatpush1.msra.mxu0 0.0
    %543 = vmatprep.subr.mxu0 0.0
    %544 = vmatpush1.msra.mxu0 0.0
    %545 = vmatprep.subr.mxu0 0.0
    %546 = vmatpush1.msra.mxu0 0.0
    %547 = vmatprep.subr.mxu0 0.0
    %548 = vmatpush1.msra.mxu0 0.0
    %549 = vmatprep.subr.mxu0 0.0
    %550 = vmatpush1.msra.mxu0 0.0
    %551 = vmatprep.subr.mxu0 0.0
    %552 = vmatpush1.msra.mxu0 0.0
    %553 = vmatprep.subr.mxu0 0.0
    %554 = vmatpush1.msra.mxu0 0.0
    %555 = vmatprep.subr.mxu0 0.0
    %556 = vmatpush1.msra.mxu0 0.0
    %557 = vmatprep.subr.mxu0 0.0
    %558 = vmatpush1.msra.mxu0 0.0
    %559 = vmatprep.subr.mxu0 0.0
    %560 = vmatpush1.msra.mxu0 0.0
    %561 = vmatprep.subr.mxu0 0.0
    %562 = vmatpush1.msra.mxu0 0.0
    %563 = vmatprep.subr.mxu0 0.0
    %564 = vmatpush1.msra.mxu0 0.0
    %565 = vmatprep.subr.mxu0 0.0
    %566 = vmatpush1.msra.mxu0 0.0
    %567 = vmatprep.subr.mxu0 0.0
    %568 = vmatpush1.msra.mxu0 0.0
    %569 = vmatprep.subr.mxu0 0.0
    %570 = vmatpush1.msra.mxu0 %v324
    %571 = vmatprep.subr.mxu0 0.0
    %572 = vmatpush2.msra.mxu0 0.0
    %573 = vmatprep.subr.mxu0 0.0
    %574 = vmatpush2.msra.mxu0 0.0
    %575 = vmatprep.subr.mxu0 0.0
    %576 = vmatpush2.msra.mxu0 0.0
    %577 = vmatprep.subr.mxu0 0.0
    %578 = vmatpush2.msra.mxu0 0.0
    %579 = vmatprep.subr.mxu0 0.0
    %580 = vmatpush2.msra.mxu0 0.0
    %581 = vmatprep.subr.mxu0 0.0
    %582 = vmatpush2.msra.mxu0 0.0
    %583 = vmatprep.subr.mxu0 0.0
    %584 = vmatpush2.msra.mxu0 0.0
    %585 = vmatprep.subr.mxu0 0.0
    %586 = vmatpush2.msra.mxu0 0.0
    %587 = vmatprep.subr.mxu0 0.0
    %588 = vmatpush2.msra.mxu0 0.0
    %589 = vmatprep.subr.mxu0 0.0
    %590 = vmatpush2.msra.mxu0 0.0
    %591 = vmatprep.subr.mxu0 0.0
    %592 = vmatpush2.msra.mxu0 0.0
    %593 = vmatprep.subr.mxu0 0.0
    %594 = vmatpush2.msra.mxu0 0.0
    %595 = vmatprep.subr.mxu0 0.0
    %596 = vmatpush2.msra.mxu0 0.0
    %597 = vmatprep.subr.mxu0 0.0
    %598 = vmatpush2.msra.mxu0 0.0
    %599 = vmatprep.subr.mxu0 0.0
    %600 = vmatpush2.msra.mxu0 0.0
    %601 = vmatprep.subr.mxu0 0.0
    %602 = vmatpush2.msra.mxu0 0.0
    %603 = vmatprep.mubr.f32.mxu0 0.0
    %604 = vmatmul.mubr.f32.gmra.mxu0 %v534
    %v605 = vpop.f32.mrf.mxu0
    %v606 = vadd.f32 0.0, %v605
    %v607 = vpop.f32.mrf.mxu0
    %608 = vmatprep.mubr.f32.mxu0 0.0
    %609 = vmatmul.mubr.f32.gmra.mxu0 %v537
    %v610 = vpop.f32.mrf.mxu0
    %v611 = vadd.f32 0.0, %v610
    %v612 = vpop.f32.mrf.mxu0
    %613 = vdwg.mxu0
    %v615 = vlaneseq
    %v616 = vshrl.u32 %v615, 7
    %v617 = vsub.s32 0, %v616
    %v618 = vrot.slane %v328, %v617
    %v620 = vadd.f32 %v618, %v606
    %v621 = vadd.f32 %v618, %v611
    %622 = vrot.lane.b32.xlu0 %v316, 120
    %v623 = vpop.permute.xlu0 %622
    %624 = vrot.lane.b32.xlu0 %v321, 120
    %v625 = vpop.permute.xlu0 %624
    %626 = vrot.lane.b32.xlu0 %v316, 88
    %v627 = vpop.permute.xlu0 %626
    %628 = vrot.lane.b32.xlu0 %v321, 88
    %v629 = vpop.permute.xlu0 %628
    %v630 = vsel %vm335, %v623, 0
    %v632 = vsel %vm335, %v625, 0
    %v634 = vsel %vm335, %v627, 0
    %v636 = vsel %vm335, %v629, 0
    %638 = vmatprep.subr.mxu0 0.0
    %639 = vmatpush1.xpose.msra.mxu0 0.0
    %640 = vmatprep.subr.mxu0 0.0
    %641 = vmatpush1.xpose.msra.mxu0 0.0
    %642 = vmatprep.subr.mxu0 0.0
    %643 = vmatpush1.xpose.msra.mxu0 0.0
    %644 = vmatprep.subr.mxu0 0.0
    %645 = vmatpush1.xpose.msra.mxu0 0.0
    %646 = vmatprep.subr.mxu0 0.0
    %647 = vmatpush1.xpose.msra.mxu0 0.0
    %648 = vmatprep.subr.mxu0 0.0
    %649 = vmatpush1.xpose.msra.mxu0 0.0
    %650 = vmatprep.subr.mxu0 0.0
    %651 = vmatpush1.xpose.msra.mxu0 0.0
    %652 = vmatprep.subr.mxu0 0.0
    %653 = vmatpush1.xpose.msra.mxu0 0.0
    %654 = vmatprep.subr.mxu0 0.0
    %655 = vmatpush1.xpose.msra.mxu0 0.0
    %656 = vmatprep.subr.mxu0 0.0
    %657 = vmatpush1.xpose.msra.mxu0 0.0
    %658 = vmatprep.subr.mxu0 0.0
    %659 = vmatpush1.xpose.msra.mxu0 0.0
    %660 = vmatprep.subr.mxu0 0.0
    %661 = vmatpush1.xpose.msra.mxu0 0.0
    %662 = vmatprep.subr.mxu0 0.0
    %663 = vmatpush1.xpose.msra.mxu0 0.0
    %664 = vmatprep.subr.mxu0 0.0
    %665 = vmatpush1.xpose.msra.mxu0 0.0
    %666 = vmatprep.subr.mxu0 0.0
    %667 = vmatpush1.xpose.msra.mxu0 %v636
    %668 = vmatprep.subr.mxu0 0.0
    %669 = vmatpush1.xpose.msra.mxu0 %v634
    %670 = vmatprep.subr.mxu0 0.0
    %671 = vmatpush2.xpose.msra.mxu0 0.0
    %672 = vmatprep.subr.mxu0 0.0
    %673 = vmatpush2.xpose.msra.mxu0 0.0
    %674 = vmatprep.subr.mxu0 0.0
    %675 = vmatpush2.xpose.msra.mxu0 0.0
    %676 = vmatprep.subr.mxu0 0.0
    %677 = vmatpush2.xpose.msra.mxu0 0.0
    %678 = vmatprep.subr.mxu0 0.0
    %679 = vmatpush2.xpose.msra.mxu0 0.0
    %680 = vmatprep.subr.mxu0 0.0
    %681 = vmatpush2.xpose.msra.mxu0 0.0
    %682 = vmatprep.subr.mxu0 0.0
    %683 = vmatpush2.xpose.msra.mxu0 0.0
    %684 = vmatprep.subr.mxu0 0.0
    %685 = vmatpush2.xpose.msra.mxu0 0.0
    %686 = vmatprep.subr.mxu0 0.0
    %687 = vmatpush2.xpose.msra.mxu0 0.0
    %688 = vmatprep.subr.mxu0 0.0
    %689 = vmatpush2.xpose.msra.mxu0 0.0
    %690 = vmatprep.subr.mxu0 0.0
    %691 = vmatpush2.xpose.msra.mxu0 0.0
    %692 = vmatprep.subr.mxu0 0.0
    %693 = vmatpush2.xpose.msra.mxu0 0.0
    %694 = vmatprep.subr.mxu0 0.0
    %695 = vmatpush2.xpose.msra.mxu0 0.0
    %696 = vmatprep.subr.mxu0 0.0
    %697 = vmatpush2.xpose.msra.mxu0 0.0
    %698 = vmatprep.subr.mxu0 0.0
    %699 = vmatpush2.xpose.msra.mxu0 0.0
    %700 = vmatprep.subr.mxu0 0.0
    %701 = vmatpush2.xpose.msra.mxu0 0.0
    %702 = vmatprep.mubr.f32.mxu0 0.0
    %703 = vmatmul.mubr.f32.gmra.mxu0 %v630
    %v704 = vpop.f32.mrf.mxu0
    %v705 = vadd.f32 0.0, %v704
    %v706 = vpop.f32.mrf.mxu0
    %707 = vmatprep.mubr.f32.mxu0 0.0
    %708 = vmatmul.mubr.f32.gmra.mxu0 %v632
    %v709 = vpop.f32.mrf.mxu0
    %v710 = vadd.f32 0.0, %v709
    %v711 = vpop.f32.mrf.mxu0
    %712 = vdwg.mxu0
    %v713 = vmul.f32 %v705, 0.35355338
    %v714 = vmul.f32 %v710, 0.35355338
    %v715 = vadd.f32 %v713, %v184
    %v716 = vadd.f32 %v714, %v185
    %v717 = vsel %vm423, %v715, -inf
    %718 = vmax.xlane.f32.xlu0 %v717
    %v719 = vpop.xlane.xlu0 %718
    %v720 = vsel %vm423, %v716, -inf
    %721 = vmax.xlane.f32.xlu0 %v720
    %v722 = vpop.xlane.xlu0 %721
    %v723 = vsub.f32 %v715, %v719
    %v724 = vsub.f32 %v716, %v722
    %v725 = vmul.f32 %v723, 1.442695
    %v726 = vpow.pop %v725
    %v727 = vmul.f32 %v724, 1.442695
    %v728 = vpow.pop %v727
    %v729 = vsel %vm423, %v726, 0.0
    %730 = vadd.xlane.f32.xlu0 %v729
    %v731 = vpop.xlane.xlu0 %730
    %v732 = vsel %vm423, %v728, 0.0
    %733 = vadd.xlane.f32.xlu0 %v732
    %v734 = vpop.xlane.xlu0 %733
    %v735 = vrcp.pop %v731
    %v736 = vmul.f32 %v726, %v735
    %v737 = vrcp.pop %v734
    %v738 = vmul.f32 %v728, %v737
    %739 = vrot.lane.b32.xlu0 %v316, 56
    %v740 = vpop.permute.xlu0 %739
    %741 = vrot.lane.b32.xlu0 %v321, 56
    %v742 = vpop.permute.xlu0 %741
    %v746 = vsel %vm423, %v736, 0
    %v749 = vsel %vm423, %v738, 0
    %751 = vmatprep.subr.mxu0 0.0
    %752 = vmatpush1.msra.mxu0 0.0
    %753 = vmatprep.subr.mxu0 0.0
    %754 = vmatpush1.msra.mxu0 0.0
    %755 = vmatprep.subr.mxu0 0.0
    %756 = vmatpush1.msra.mxu0 0.0
    %757 = vmatprep.subr.mxu0 0.0
    %758 = vmatpush1.msra.mxu0 0.0
    %759 = vmatprep.subr.mxu0 0.0
    %760 = vmatpush1.msra.mxu0 0.0
    %761 = vmatprep.subr.mxu0 0.0
    %762 = vmatpush1.msra.mxu0 0.0
    %763 = vmatprep.subr.mxu0 0.0
    %764 = vmatpush1.msra.mxu0 0.0
    %765 = vmatprep.subr.mxu0 0.0
    %766 = vmatpush1.msra.mxu0 0.0
    %767 = vmatprep.subr.mxu0 0.0
    %768 = vmatpush1.msra.mxu0 0.0
    %769 = vmatprep.subr.mxu0 0.0
    %770 = vmatpush1.msra.mxu0 0.0
    %771 = vmatprep.subr.mxu0 0.0
    %772 = vmatpush1.msra.mxu0 0.0
    %773 = vmatprep.subr.mxu0 0.0
    %774 = vmatpush1.msra.mxu0 0.0
    %775 = vmatprep.subr.mxu0 0.0
    %776 = vmatpush1.msra.mxu0 0.0
    %777 = vmatprep.subr.mxu0 0.0
    %778 = vmatpush1.msra.mxu0 0.0
    %779 = vmatprep.subr.mxu0 0.0
    %780 = vmatpush1.msra.mxu0 %v742
    %781 = vmatprep.subr.mxu0 0.0
    %782 = vmatpush1.msra.mxu0 %v740
    %783 = vmatprep.subr.mxu0 0.0
    %784 = vmatpush2.msra.mxu0 0.0
    %785 = vmatprep.subr.mxu0 0.0
    %786 = vmatpush2.msra.mxu0 0.0
    %787 = vmatprep.subr.mxu0 0.0
    %788 = vmatpush2.msra.mxu0 0.0
    %789 = vmatprep.subr.mxu0 0.0
    %790 = vmatpush2.msra.mxu0 0.0
    %791 = vmatprep.subr.mxu0 0.0
    %792 = vmatpush2.msra.mxu0 0.0
    %793 = vmatprep.subr.mxu0 0.0
    %794 = vmatpush2.msra.mxu0 0.0
    %795 = vmatprep.subr.mxu0 0.0
    %796 = vmatpush2.msra.mxu0 0.0
    %797 = vmatprep.subr.mxu0 0.0
    %798 = vmatpush2.msra.mxu0 0.0
    %799 = vmatprep.subr.mxu0 0.0
    %800 = vmatpush2.msra.mxu0 0.0
    %801 = vmatprep.subr.mxu0 0.0
    %802 = vmatpush2.msra.mxu0 0.0
    %803 = vmatprep.subr.mxu0 0.0
    %804 = vmatpush2.msra.mxu0 0.0
    %805 = vmatprep.subr.mxu0 0.0
    %806 = vmatpush2.msra.mxu0 0.0
    %807 = vmatprep.subr.mxu0 0.0
    %808 = vmatpush2.msra.mxu0 0.0
    %809 = vmatprep.subr.mxu0 0.0
    %810 = vmatpush2.msra.mxu0 0.0
    %811 = vmatprep.subr.mxu0 0.0
    %812 = vmatpush2.msra.mxu0 0.0
    %813 = vmatprep.subr.mxu0 0.0
    %814 = vmatpush2.msra.mxu0 0.0
    %815 = vmatprep.mubr.f32.mxu0 0.0
    %816 = vmatmul.mubr.f32.gmra.mxu0 %v746
    %v817 = vpop.f32.mrf.mxu0
    %v818 = vadd.f32 0.0, %v817
    %v819 = vpop.f32.mrf.mxu0
    %820 = vmatprep.mubr.f32.mxu0 0.0
    %821 = vmatmul.mubr.f32.gmra.mxu0 %v749
    %v822 = vpop.f32.mrf.mxu0
    %v823 = vadd.f32 0.0, %v822
    %v824 = vpop.f32.mrf.mxu0
    %825 = vdwg.mxu0
    %v827 = vsel %vm335, %v818, 0
    %v830 = vsel %vm335, %v823, 0
    %832 = vmatprep.subr.mxu0 0.0
    %833 = vmatpush1.msra.mxu0 0.0
    %834 = vmatprep.subr.mxu0 0.0
    %835 = vmatpush1.msra.mxu0 0.0
    %836 = vmatprep.subr.mxu0 0.0
    %837 = vmatpush1.msra.mxu0 0.0
    %838 = vmatprep.subr.mxu0 0.0
    %839 = vmatpush1.msra.mxu0 0.0
    %840 = vmatprep.subr.mxu0 0.0
    %841 = vmatpush1.msra.mxu0 0.0
    %842 = vmatprep.subr.mxu0 0.0
    %843 = vmatpush1.msra.mxu0 0.0
    %844 = vmatprep.subr.mxu0 0.0
    %845 = vmatpush1.msra.mxu0 0.0
    %846 = vmatprep.subr.mxu0 0.0
    %847 = vmatpush1.msra.mxu0 0.0
    %848 = vmatprep.subr.mxu0 0.0
    %849 = vmatpush1.msra.mxu0 0.0
    %850 = vmatprep.subr.mxu0 0.0
    %851 = vmatpush1.msra.mxu0 0.0
    %852 = vmatprep.subr.mxu0 0.0
    %853 = vmatpush1.msra.mxu0 0.0
    %854 = vmatprep.subr.mxu0 0.0
    %855 = vmatpush1.msra.mxu0 0.0
    %856 = vmatprep.subr.mxu0 0.0
    %857 = vmatpush1.msra.mxu0 0.0
    %858 = vmatprep.subr.mxu0 0.0
    %859 = vmatpush1.msra.mxu0 0.0
    %860 = vmatprep.subr.mxu0 0.0
    %861 = vmatpush1.msra.mxu0 0.0
    %862 = vmatprep.subr.mxu0 0.0
    %863 = vmatpush1.msra.mxu0 %v325
    %864 = vmatprep.subr.mxu0 0.0
    %865 = vmatpush2.msra.mxu0 0.0
    %866 = vmatprep.subr.mxu0 0.0
    %867 = vmatpush2.msra.mxu0 0.0
    %868 = vmatprep.subr.mxu0 0.0
    %869 = vmatpush2.msra.mxu0 0.0
    %870 = vmatprep.subr.mxu0 0.0
    %871 = vmatpush2.msra.mxu0 0.0
    %872 = vmatprep.subr.mxu0 0.0
    %873 = vmatpush2.msra.mxu0 0.0
    %874 = vmatprep.subr.mxu0 0.0
    %875 = vmatpush2.msra.mxu0 0.0
    %876 = vmatprep.subr.mxu0 0.0
    %877 = vmatpush2.msra.mxu0 0.0
    %878 = vmatprep.subr.mxu0 0.0
    %879 = vmatpush2.msra.mxu0 0.0
    %880 = vmatprep.subr.mxu0 0.0
    %881 = vmatpush2.msra.mxu0 0.0
    %882 = vmatprep.subr.mxu0 0.0
    %883 = vmatpush2.msra.mxu0 0.0
    %884 = vmatprep.subr.mxu0 0.0
    %885 = vmatpush2.msra.mxu0 0.0
    %886 = vmatprep.subr.mxu0 0.0
    %887 = vmatpush2.msra.mxu0 0.0
    %888 = vmatprep.subr.mxu0 0.0
    %889 = vmatpush2.msra.mxu0 0.0
    %890 = vmatprep.subr.mxu0 0.0
    %891 = vmatpush2.msra.mxu0 0.0
    %892 = vmatprep.subr.mxu0 0.0
    %893 = vmatpush2.msra.mxu0 0.0
    %894 = vmatprep.subr.mxu0 0.0
    %895 = vmatpush2.msra.mxu0 0.0
    %896 = vmatprep.mubr.f32.mxu0 0.0
    %897 = vmatmul.mubr.f32.gmra.mxu0 %v827
    %v898 = vpop.f32.mrf.mxu0
    %v899 = vadd.f32 0.0, %v898
    %v900 = vpop.f32.mrf.mxu0
    %901 = vmatprep.mubr.f32.mxu0 0.0
    %902 = vmatmul.mubr.f32.gmra.mxu0 %v830
    %v903 = vpop.f32.mrf.mxu0
    %v904 = vadd.f32 0.0, %v903
    %v905 = vpop.f32.mrf.mxu0
    %906 = vdwg.mxu0
    %v907 = vadd.f32 %v620, %v899
    %v908 = vadd.f32 %v621, %v904
    %909 = vrot.lane.b32.xlu0 %v316, 112
    %v910 = vpop.permute.xlu0 %909
    %911 = vrot.lane.b32.xlu0 %v321, 112
    %v912 = vpop.permute.xlu0 %911
    %913 = vrot.lane.b32.xlu0 %v316, 80
    %v914 = vpop.permute.xlu0 %913
    %915 = vrot.lane.b32.xlu0 %v321, 80
    %v916 = vpop.permute.xlu0 %915
    %v917 = vsel %vm335, %v910, 0
    %v919 = vsel %vm335, %v912, 0
    %v921 = vsel %vm335, %v914, 0
    %v923 = vsel %vm335, %v916, 0
    %925 = vmatprep.subr.mxu0 0.0
    %926 = vmatpush1.xpose.msra.mxu0 0.0
    %927 = vmatprep.subr.mxu0 0.0
    %928 = vmatpush1.xpose.msra.mxu0 0.0
    %929 = vmatprep.subr.mxu0 0.0
    %930 = vmatpush1.xpose.msra.mxu0 0.0
    %931 = vmatprep.subr.mxu0 0.0
    %932 = vmatpush1.xpose.msra.mxu0 0.0
    %933 = vmatprep.subr.mxu0 0.0
    %934 = vmatpush1.xpose.msra.mxu0 0.0
    %935 = vmatprep.subr.mxu0 0.0
    %936 = vmatpush1.xpose.msra.mxu0 0.0
    %937 = vmatprep.subr.mxu0 0.0
    %938 = vmatpush1.xpose.msra.mxu0 0.0
    %939 = vmatprep.subr.mxu0 0.0
    %940 = vmatpush1.xpose.msra.mxu0 0.0
    %941 = vmatprep.subr.mxu0 0.0
    %942 = vmatpush1.xpose.msra.mxu0 0.0
    %943 = vmatprep.subr.mxu0 0.0
    %944 = vmatpush1.xpose.msra.mxu0 0.0
    %945 = vmatprep.subr.mxu0 0.0
    %946 = vmatpush1.xpose.msra.mxu0 0.0
    %947 = vmatprep.subr.mxu0 0.0
    %948 = vmatpush1.xpose.msra.mxu0 0.0
    %949 = vmatprep.subr.mxu0 0.0
    %950 = vmatpush1.xpose.msra.mxu0 0.0
    %951 = vmatprep.subr.mxu0 0.0
    %952 = vmatpush1.xpose.msra.mxu0 0.0
    %953 = vmatprep.subr.mxu0 0.0
    %954 = vmatpush1.xpose.msra.mxu0 %v923
    %955 = vmatprep.subr.mxu0 0.0
    %956 = vmatpush1.xpose.msra.mxu0 %v921
    %957 = vmatprep.subr.mxu0 0.0
    %958 = vmatpush2.xpose.msra.mxu0 0.0
    %959 = vmatprep.subr.mxu0 0.0
    %960 = vmatpush2.xpose.msra.mxu0 0.0
    %961 = vmatprep.subr.mxu0 0.0
    %962 = vmatpush2.xpose.msra.mxu0 0.0
    %963 = vmatprep.subr.mxu0 0.0
    %964 = vmatpush2.xpose.msra.mxu0 0.0
    %965 = vmatprep.subr.mxu0 0.0
    %966 = vmatpush2.xpose.msra.mxu0 0.0
    %967 = vmatprep.subr.mxu0 0.0
    %968 = vmatpush2.xpose.msra.mxu0 0.0
    %969 = vmatprep.subr.mxu0 0.0
    %970 = vmatpush2.xpose.msra.mxu0 0.0
    %971 = vmatprep.subr.mxu0 0.0
    %972 = vmatpush2.xpose.msra.mxu0 0.0
    %973 = vmatprep.subr.mxu0 0.0
    %974 = vmatpush2.xpose.msra.mxu0 0.0
    %975 = vmatprep.subr.mxu0 0.0
    %976 = vmatpush2.xpose.msra.mxu0 0.0
    %977 = vmatprep.subr.mxu0 0.0
    %978 = vmatpush2.xpose.msra.mxu0 0.0
    %979 = vmatprep.subr.mxu0 0.0
    %980 = vmatpush2.xpose.msra.mxu0 0.0
    %981 = vmatprep.subr.mxu0 0.0
    %982 = vmatpush2.xpose.msra.mxu0 0.0
    %983 = vmatprep.subr.mxu0 0.0
    %984 = vmatpush2.xpose.msra.mxu0 0.0
    %985 = vmatprep.subr.mxu0 0.0
    %986 = vmatpush2.xpose.msra.mxu0 0.0
    %987 = vmatprep.subr.mxu0 0.0
    %988 = vmatpush2.xpose.msra.mxu0 0.0
    %989 = vmatprep.mubr.f32.mxu0 0.0
    %990 = vmatmul.mubr.f32.gmra.mxu0 %v917
    %v991 = vpop.f32.mrf.mxu0
    %v992 = vadd.f32 0.0, %v991
    %v993 = vpop.f32.mrf.mxu0
    %994 = vmatprep.mubr.f32.mxu0 0.0
    %995 = vmatmul.mubr.f32.gmra.mxu0 %v919
    %v996 = vpop.f32.mrf.mxu0
    %v997 = vadd.f32 0.0, %v996
    %v998 = vpop.f32.mrf.mxu0
    %999 = vdwg.mxu0
    %v1000 = vmul.f32 %v992, 0.35355338
    %v1001 = vmul.f32 %v997, 0.35355338
    %v1002 = vadd.f32 %v1000, %v184
    %v1003 = vadd.f32 %v1001, %v185
    %v1004 = vsel %vm423, %v1002, -inf
    %1005 = vmax.xlane.f32.xlu0 %v1004
    %v1006 = vpop.xlane.xlu0 %1005
    %v1007 = vsel %vm423, %v1003, -inf
    %1008 = vmax.xlane.f32.xlu0 %v1007
    %v1009 = vpop.xlane.xlu0 %1008
    %v1010 = vsub.f32 %v1002, %v1006
    %v1011 = vsub.f32 %v1003, %v1009
    %v1012 = vmul.f32 %v1010, 1.442695
    %v1013 = vpow.pop %v1012
    %v1014 = vmul.f32 %v1011, 1.442695
    %v1015 = vpow.pop %v1014
    %v1016 = vsel %vm423, %v1013, 0.0
    %1017 = vadd.xlane.f32.xlu0 %v1016
    %v1018 = vpop.xlane.xlu0 %1017
    %v1019 = vsel %vm423, %v1015, 0.0
    %1020 = vadd.xlane.f32.xlu0 %v1019
    %v1021 = vpop.xlane.xlu0 %1020
    %v1022 = vrcp.pop %v1018
    %v1023 = vmul.f32 %v1013, %v1022
    %v1024 = vrcp.pop %v1021
    %v1025 = vmul.f32 %v1015, %v1024
    %1026 = vrot.lane.b32.xlu0 %v316, 48
    %v1027 = vpop.permute.xlu0 %1026
    %1028 = vrot.lane.b32.xlu0 %v321, 48
    %v1029 = vpop.permute.xlu0 %1028
    %v1033 = vsel %vm423, %v1023, 0
    %v1036 = vsel %vm423, %v1025, 0
    %1038 = vmatprep.subr.mxu0 0.0
    %1039 = vmatpush1.msra.mxu0 0.0
    %1040 = vmatprep.subr.mxu0 0.0
    %1041 = vmatpush1.msra.mxu0 0.0
    %1042 = vmatprep.subr.mxu0 0.0
    %1043 = vmatpush1.msra.mxu0 0.0
    %1044 = vmatprep.subr.mxu0 0.0
    %1045 = vmatpush1.msra.mxu0 0.0
    %1046 = vmatprep.subr.mxu0 0.0
    %1047 = vmatpush1.msra.mxu0 0.0
    %1048 = vmatprep.subr.mxu0 0.0
    %1049 = vmatpush1.msra.mxu0 0.0
    %1050 = vmatprep.subr.mxu0 0.0
    %1051 = vmatpush1.msra.mxu0 0.0
    %1052 = vmatprep.subr.mxu0 0.0
    %1053 = vmatpush1.msra.mxu0 0.0
    %1054 = vmatprep.subr.mxu0 0.0
    %1055 = vmatpush1.msra.mxu0 0.0
    %1056 = vmatprep.subr.mxu0 0.0
    %1057 = vmatpush1.msra.mxu0 0.0
    %1058 = vmatprep.subr.mxu0 0.0
    %1059 = vmatpush1.msra.mxu0 0.0
    %1060 = vmatprep.subr.mxu0 0.0
    %1061 = vmatpush1.msra.mxu0 0.0
    %1062 = vmatprep.subr.mxu0 0.0
    %1063 = vmatpush1.msra.mxu0 0.0
    %1064 = vmatprep.subr.mxu0 0.0
    %1065 = vmatpush1.msra.mxu0 0.0
    %1066 = vmatprep.subr.mxu0 0.0
    %1067 = vmatpush1.msra.mxu0 %v1029
    %1068 = vmatprep.subr.mxu0 0.0
    %1069 = vmatpush1.msra.mxu0 %v1027
    %1070 = vmatprep.subr.mxu0 0.0
    %1071 = vmatpush2.msra.mxu0 0.0
    %1072 = vmatprep.subr.mxu0 0.0
    %1073 = vmatpush2.msra.mxu0 0.0
    %1074 = vmatprep.subr.mxu0 0.0
    %1075 = vmatpush2.msra.mxu0 0.0
    %1076 = vmatprep.subr.mxu0 0.0
    %1077 = vmatpush2.msra.mxu0 0.0
    %1078 = vmatprep.subr.mxu0 0.0
    %1079 = vmatpush2.msra.mxu0 0.0
    %1080 = vmatprep.subr.mxu0 0.0
    %1081 = vmatpush2.msra.mxu0 0.0
    %1082 = vmatprep.subr.mxu0 0.0
    %1083 = vmatpush2.msra.mxu0 0.0
    %1084 = vmatprep.subr.mxu0 0.0
    %1085 = vmatpush2.msra.mxu0 0.0
    %1086 = vmatprep.subr.mxu0 0.0
    %1087 = vmatpush2.msra.mxu0 0.0
    %1088 = vmatprep.subr.mxu0 0.0
    %1089 = vmatpush2.msra.mxu0 0.0
    %1090 = vmatprep.subr.mxu0 0.0
    %1091 = vmatpush2.msra.mxu0 0.0
    %1092 = vmatprep.subr.mxu0 0.0
    %1093 = vmatpush2.msra.mxu0 0.0
    %1094 = vmatprep.subr.mxu0 0.0
    %1095 = vmatpush2.msra.mxu0 0.0
    %1096 = vmatprep.subr.mxu0 0.0
    %1097 = vmatpush2.msra.mxu0 0.0
    %1098 = vmatprep.subr.mxu0 0.0
    %1099 = vmatpush2.msra.mxu0 0.0
    %1100 = vmatprep.subr.mxu0 0.0
    %1101 = vmatpush2.msra.mxu0 0.0
    %1102 = vmatprep.mubr.f32.mxu0 0.0
    %1103 = vmatmul.mubr.f32.gmra.mxu0 %v1033
    %v1104 = vpop.f32.mrf.mxu0
    %v1105 = vadd.f32 0.0, %v1104
    %v1106 = vpop.f32.mrf.mxu0
    %1107 = vmatprep.mubr.f32.mxu0 0.0
    %1108 = vmatmul.mubr.f32.gmra.mxu0 %v1036
    %v1109 = vpop.f32.mrf.mxu0
    %v1110 = vadd.f32 0.0, %v1109
    %v1111 = vpop.f32.mrf.mxu0
    %1112 = vdwg.mxu0
    %v1114 = vsel %vm335, %v1105, 0
    %v1117 = vsel %vm335, %v1110, 0
    %1119 = vmatprep.subr.mxu0 0.0
    %1120 = vmatpush1.msra.mxu0 0.0
    %1121 = vmatprep.subr.mxu0 0.0
    %1122 = vmatpush1.msra.mxu0 0.0
    %1123 = vmatprep.subr.mxu0 0.0
    %1124 = vmatpush1.msra.mxu0 0.0
    %1125 = vmatprep.subr.mxu0 0.0
    %1126 = vmatpush1.msra.mxu0 0.0
    %1127 = vmatprep.subr.mxu0 0.0
    %1128 = vmatpush1.msra.mxu0 0.0
    %1129 = vmatprep.subr.mxu0 0.0
    %1130 = vmatpush1.msra.mxu0 0.0
    %1131 = vmatprep.subr.mxu0 0.0
    %1132 = vmatpush1.msra.mxu0 0.0
    %1133 = vmatprep.subr.mxu0 0.0
    %1134 = vmatpush1.msra.mxu0 0.0
    %1135 = vmatprep.subr.mxu0 0.0
    %1136 = vmatpush1.msra.mxu0 0.0
    %1137 = vmatprep.subr.mxu0 0.0
    %1138 = vmatpush1.msra.mxu0 0.0
    %1139 = vmatprep.subr.mxu0 0.0
    %1140 = vmatpush1.msra.mxu0 0.0
    %1141 = vmatprep.subr.mxu0 0.0
    %1142 = vmatpush1.msra.mxu0 0.0
    %1143 = vmatprep.subr.mxu0 0.0
    %1144 = vmatpush1.msra.mxu0 0.0
    %1145 = vmatprep.subr.mxu0 0.0
    %1146 = vmatpush1.msra.mxu0 0.0
    %1147 = vmatprep.subr.mxu0 0.0
    %1148 = vmatpush1.msra.mxu0 0.0
    %1149 = vmatprep.subr.mxu0 0.0
    %1150 = vmatpush1.msra.mxu0 %v326
    %1151 = vmatprep.subr.mxu0 0.0
    %1152 = vmatpush2.msra.mxu0 0.0
    %1153 = vmatprep.subr.mxu0 0.0
    %1154 = vmatpush2.msra.mxu0 0.0
    %1155 = vmatprep.subr.mxu0 0.0
    %1156 = vmatpush2.msra.mxu0 0.0
    %1157 = vmatprep.subr.mxu0 0.0
    %1158 = vmatpush2.msra.mxu0 0.0
    %1159 = vmatprep.subr.mxu0 0.0
    %1160 = vmatpush2.msra.mxu0 0.0
    %1161 = vmatprep.subr.mxu0 0.0
    %1162 = vmatpush2.msra.mxu0 0.0
    %1163 = vmatprep.subr.mxu0 0.0
    %1164 = vmatpush2.msra.mxu0 0.0
    %1165 = vmatprep.subr.mxu0 0.0
    %1166 = vmatpush2.msra.mxu0 0.0
    %1167 = vmatprep.subr.mxu0 0.0
    %1168 = vmatpush2.msra.mxu0 0.0
    %1169 = vmatprep.subr.mxu0 0.0
    %1170 = vmatpush2.msra.mxu0 0.0
    %1171 = vmatprep.subr.mxu0 0.0
    %1172 = vmatpush2.msra.mxu0 0.0
    %1173 = vmatprep.subr.mxu0 0.0
    %1174 = vmatpush2.msra.mxu0 0.0
    %1175 = vmatprep.subr.mxu0 0.0
    %1176 = vmatpush2.msra.mxu0 0.0
    %1177 = vmatprep.subr.mxu0 0.0
    %1178 = vmatpush2.msra.mxu0 0.0
    %1179 = vmatprep.subr.mxu0 0.0
    %1180 = vmatpush2.msra.mxu0 0.0
    %1181 = vmatprep.subr.mxu0 0.0
    %1182 = vmatpush2.msra.mxu0 0.0
    %1183 = vmatprep.mubr.f32.mxu0 0.0
    %1184 = vmatmul.mubr.f32.gmra.mxu0 %v1114
    %v1185 = vpop.f32.mrf.mxu0
    %v1186 = vadd.f32 0.0, %v1185
    %v1187 = vpop.f32.mrf.mxu0
    %1188 = vmatprep.mubr.f32.mxu0 0.0
    %1189 = vmatmul.mubr.f32.gmra.mxu0 %v1117
    %v1190 = vpop.f32.mrf.mxu0
    %v1191 = vadd.f32 0.0, %v1190
    %v1192 = vpop.f32.mrf.mxu0
    %1193 = vdwg.mxu0
    %v1194 = vadd.f32 %v907, %v1186
    %v1195 = vadd.f32 %v908, %v1191
    %1196 = vrot.lane.b32.xlu0 %v316, 104
    %v1197 = vpop.permute.xlu0 %1196
    %1198 = vrot.lane.b32.xlu0 %v321, 104
    %v1199 = vpop.permute.xlu0 %1198
    %1200 = vrot.lane.b32.xlu0 %v316, 72
    %v1201 = vpop.permute.xlu0 %1200
    %1202 = vrot.lane.b32.xlu0 %v321, 72
    %v1203 = vpop.permute.xlu0 %1202
    %v1204 = vsel %vm335, %v1197, 0
    %v1206 = vsel %vm335, %v1199, 0
    %v1208 = vsel %vm335, %v1201, 0
    %v1210 = vsel %vm335, %v1203, 0
    %1212 = vmatprep.subr.mxu0 0.0
    %1213 = vmatpush1.xpose.msra.mxu0 0.0
    %1214 = vmatprep.subr.mxu0 0.0
    %1215 = vmatpush1.xpose.msra.mxu0 0.0
    %1216 = vmatprep.subr.mxu0 0.0
    %1217 = vmatpush1.xpose.msra.mxu0 0.0
    %1218 = vmatprep.subr.mxu0 0.0
    %1219 = vmatpush1.xpose.msra.mxu0 0.0
    %1220 = vmatprep.subr.mxu0 0.0
    %1221 = vmatpush1.xpose.msra.mxu0 0.0
    %1222 = vmatprep.subr.mxu0 0.0
    %1223 = vmatpush1.xpose.msra.mxu0 0.0
    %1224 = vmatprep.subr.mxu0 0.0
    %1225 = vmatpush1.xpose.msra.mxu0 0.0
    %1226 = vmatprep.subr.mxu0 0.0
    %1227 = vmatpush1.xpose.msra.mxu0 0.0
    %1228 = vmatprep.subr.mxu0 0.0
    %1229 = vmatpush1.xpose.msra.mxu0 0.0
    %1230 = vmatprep.subr.mxu0 0.0
    %1231 = vmatpush1.xpose.msra.mxu0 0.0
    %1232 = vmatprep.subr.mxu0 0.0
    %1233 = vmatpush1.xpose.msra.mxu0 0.0
    %1234 = vmatprep.subr.mxu0 0.0
    %1235 = vmatpush1.xpose.msra.mxu0 0.0
    %1236 = vmatprep.subr.mxu0 0.0
    %1237 = vmatpush1.xpose.msra.mxu0 0.0
    %1238 = vmatprep.subr.mxu0 0.0
    %1239 = vmatpush1.xpose.msra.mxu0 0.0
    %1240 = vmatprep.subr.mxu0 0.0
    %1241 = vmatpush1.xpose.msra.mxu0 %v1210
    %1242 = vmatprep.subr.mxu0 0.0
    %1243 = vmatpush1.xpose.msra.mxu0 %v1208
    %1244 = vmatprep.subr.mxu0 0.0
    %1245 = vmatpush2.xpose.msra.mxu0 0.0
    %1246 = vmatprep.subr.mxu0 0.0
    %1247 = vmatpush2.xpose.msra.mxu0 0.0
    %1248 = vmatprep.subr.mxu0 0.0
    %1249 = vmatpush2.xpose.msra.mxu0 0.0
    %1250 = vmatprep.subr.mxu0 0.0
    %1251 = vmatpush2.xpose.msra.mxu0 0.0
    %1252 = vmatprep.subr.mxu0 0.0
    %1253 = vmatpush2.xpose.msra.mxu0 0.0
    %1254 = vmatprep.subr.mxu0 0.0
    %1255 = vmatpush2.xpose.msra.mxu0 0.0
    %1256 = vmatprep.subr.mxu0 0.0
    %1257 = vmatpush2.xpose.msra.mxu0 0.0
    %1258 = vmatprep.subr.mxu0 0.0
    %1259 = vmatpush2.xpose.msra.mxu0 0.0
    %1260 = vmatprep.subr.mxu0 0.0
    %1261 = vmatpush2.xpose.msra.mxu0 0.0
    %1262 = vmatprep.subr.mxu0 0.0
    %1263 = vmatpush2.xpose.msra.mxu0 0.0
    %1264 = vmatprep.subr.mxu0 0.0
    %1265 = vmatpush2.xpose.msra.mxu0 0.0
    %1266 = vmatprep.subr.mxu0 0.0
    %1267 = vmatpush2.xpose.msra.mxu0 0.0
    %1268 = vmatprep.subr.mxu0 0.0
    %1269 = vmatpush2.xpose.msra.mxu0 0.0
    %1270 = vmatprep.subr.mxu0 0.0
    %1271 = vmatpush2.xpose.msra.mxu0 0.0
    %1272 = vmatprep.subr.mxu0 0.0
    %1273 = vmatpush2.xpose.msra.mxu0 0.0
    %1274 = vmatprep.subr.mxu0 0.0
    %1275 = vmatpush2.xpose.msra.mxu0 0.0
    %1276 = vmatprep.mubr.f32.mxu0 0.0
    %1277 = vmatmul.mubr.f32.gmra.mxu0 %v1204
    %v1278 = vpop.f32.mrf.mxu0
    %v1279 = vadd.f32 0.0, %v1278
    %v1280 = vpop.f32.mrf.mxu0
    %1281 = vmatprep.mubr.f32.mxu0 0.0
    %1282 = vmatmul.mubr.f32.gmra.mxu0 %v1206
    %v1283 = vpop.f32.mrf.mxu0
    %v1284 = vadd.f32 0.0, %v1283
    %v1285 = vpop.f32.mrf.mxu0
    %1286 = vdwg.mxu0
    %v1287 = vmul.f32 %v1279, 0.35355338
    %v1288 = vmul.f32 %v1284, 0.35355338
    %v1289 = vadd.f32 %v1287, %v184
    %v1290 = vadd.f32 %v1288, %v185
    %v1291 = vsel %vm423, %v1289, -inf
    %1292 = vmax.xlane.f32.xlu0 %v1291
    %v1293 = vpop.xlane.xlu0 %1292
    %v1294 = vsel %vm423, %v1290, -inf
    %1295 = vmax.xlane.f32.xlu0 %v1294
    %v1296 = vpop.xlane.xlu0 %1295
    %v1297 = vsub.f32 %v1289, %v1293
    %v1298 = vsub.f32 %v1290, %v1296
    %v1299 = vmul.f32 %v1297, 1.442695
    %v1300 = vpow.pop %v1299
    %v1301 = vmul.f32 %v1298, 1.442695
    %v1302 = vpow.pop %v1301
    %v1303 = vsel %vm423, %v1300, 0.0
    %1304 = vadd.xlane.f32.xlu0 %v1303
    %v1305 = vpop.xlane.xlu0 %1304
    %v1306 = vsel %vm423, %v1302, 0.0
    %1307 = vadd.xlane.f32.xlu0 %v1306
    %v1308 = vpop.xlane.xlu0 %1307
    %v1309 = vrcp.pop %v1305
    %v1310 = vmul.f32 %v1300, %v1309
    %v1311 = vrcp.pop %v1308
    %v1312 = vmul.f32 %v1302, %v1311
    %1313 = vrot.lane.b32.xlu0 %v316, 40
    %v1314 = vpop.permute.xlu0 %1313
    %1315 = vrot.lane.b32.xlu0 %v321, 40
    %v1316 = vpop.permute.xlu0 %1315
    %v1320 = vsel %vm423, %v1310, 0
    %v1323 = vsel %vm423, %v1312, 0
    %1325 = vmatprep.subr.mxu0 0.0
    %1326 = vmatpush1.msra.mxu0 0.0
    %1327 = vmatprep.subr.mxu0 0.0
    %1328 = vmatpush1.msra.mxu0 0.0
    %1329 = vmatprep.subr.mxu0 0.0
    %1330 = vmatpush1.msra.mxu0 0.0
    %1331 = vmatprep.subr.mxu0 0.0
    %1332 = vmatpush1.msra.mxu0 0.0
    %1333 = vmatprep.subr.mxu0 0.0
    %1334 = vmatpush1.msra.mxu0 0.0
    %1335 = vmatprep.subr.mxu0 0.0
    %1336 = vmatpush1.msra.mxu0 0.0
    %1337 = vmatprep.subr.mxu0 0.0
    %1338 = vmatpush1.msra.mxu0 0.0
    %1339 = vmatprep.subr.mxu0 0.0
    %1340 = vmatpush1.msra.mxu0 0.0
    %1341 = vmatprep.subr.mxu0 0.0
    %1342 = vmatpush1.msra.mxu0 0.0
    %1343 = vmatprep.subr.mxu0 0.0
    %1344 = vmatpush1.msra.mxu0 0.0
    %1345 = vmatprep.subr.mxu0 0.0
    %1346 = vmatpush1.msra.mxu0 0.0
    %1347 = vmatprep.subr.mxu0 0.0
    %1348 = vmatpush1.msra.mxu0 0.0
    %1349 = vmatprep.subr.mxu0 0.0
    %1350 = vmatpush1.msra.mxu0 0.0
    %1351 = vmatprep.subr.mxu0 0.0
    %1352 = vmatpush1.msra.mxu0 0.0
    %1353 = vmatprep.subr.mxu0 0.0
    %1354 = vmatpush1.msra.mxu0 %v1316
    %1355 = vmatprep.subr.mxu0 0.0
    %1356 = vmatpush1.msra.mxu0 %v1314
    %1357 = vmatprep.subr.mxu0 0.0
    %1358 = vmatpush2.msra.mxu0 0.0
    %1359 = vmatprep.subr.mxu0 0.0
    %1360 = vmatpush2.msra.mxu0 0.0
    %1361 = vmatprep.subr.mxu0 0.0
    %1362 = vmatpush2.msra.mxu0 0.0
    %1363 = vmatprep.subr.mxu0 0.0
    %1364 = vmatpush2.msra.mxu0 0.0
    %1365 = vmatprep.subr.mxu0 0.0
    %1366 = vmatpush2.msra.mxu0 0.0
    %1367 = vmatprep.subr.mxu0 0.0
    %1368 = vmatpush2.msra.mxu0 0.0
    %1369 = vmatprep.subr.mxu0 0.0
    %1370 = vmatpush2.msra.mxu0 0.0
    %1371 = vmatprep.subr.mxu0 0.0
    %1372 = vmatpush2.msra.mxu0 0.0
    %1373 = vmatprep.subr.mxu0 0.0
    %1374 = vmatpush2.msra.mxu0 0.0
    %1375 = vmatprep.subr.mxu0 0.0
    %1376 = vmatpush2.msra.mxu0 0.0
    %1377 = vmatprep.subr.mxu0 0.0
    %1378 = vmatpush2.msra.mxu0 0.0
    %1379 = vmatprep.subr.mxu0 0.0
    %1380 = vmatpush2.msra.mxu0 0.0
    %1381 = vmatprep.subr.mxu0 0.0
    %1382 = vmatpush2.msra.mxu0 0.0
    %1383 = vmatprep.subr.mxu0 0.0
    %1384 = vmatpush2.msra.mxu0 0.0
    %1385 = vmatprep.subr.mxu0 0.0
    %1386 = vmatpush2.msra.mxu0 0.0
    %1387 = vmatprep.subr.mxu0 0.0
    %1388 = vmatpush2.msra.mxu0 0.0
    %1389 = vmatprep.mubr.f32.mxu0 0.0
    %1390 = vmatmul.mubr.f32.gmra.mxu0 %v1320
    %v1391 = vpop.f32.mrf.mxu0
    %v1392 = vadd.f32 0.0, %v1391
    %v1393 = vpop.f32.mrf.mxu0
    %1394 = vmatprep.mubr.f32.mxu0 0.0
    %1395 = vmatmul.mubr.f32.gmra.mxu0 %v1323
    %v1396 = vpop.f32.mrf.mxu0
    %v1397 = vadd.f32 0.0, %v1396
    %v1398 = vpop.f32.mrf.mxu0
    %1399 = vdwg.mxu0
    %v1401 = vsel %vm335, %v1392, 0
    %v1404 = vsel %vm335, %v1397, 0
    %1406 = vmatprep.subr.mxu0 0.0
    %1407 = vmatpush1.msra.mxu0 0.0
    %1408 = vmatprep.subr.mxu0 0.0
    %1409 = vmatpush1.msra.mxu0 0.0
    %1410 = vmatprep.subr.mxu0 0.0
    %1411 = vmatpush1.msra.mxu0 0.0
    %1412 = vmatprep.subr.mxu0 0.0
    %1413 = vmatpush1.msra.mxu0 0.0
    %1414 = vmatprep.subr.mxu0 0.0
    %1415 = vmatpush1.msra.mxu0 0.0
    %1416 = vmatprep.subr.mxu0 0.0
    %1417 = vmatpush1.msra.mxu0 0.0
    %1418 = vmatprep.subr.mxu0 0.0
    %1419 = vmatpush1.msra.mxu0 0.0
    %1420 = vmatprep.subr.mxu0 0.0
    %1421 = vmatpush1.msra.mxu0 0.0
    %1422 = vmatprep.subr.mxu0 0.0
    %1423 = vmatpush1.msra.mxu0 0.0
    %1424 = vmatprep.subr.mxu0 0.0
    %1425 = vmatpush1.msra.mxu0 0.0
    %1426 = vmatprep.subr.mxu0 0.0
    %1427 = vmatpush1.msra.mxu0 0.0
    %1428 = vmatprep.subr.mxu0 0.0
    %1429 = vmatpush1.msra.mxu0 0.0
    %1430 = vmatprep.subr.mxu0 0.0
    %1431 = vmatpush1.msra.mxu0 0.0
    %1432 = vmatprep.subr.mxu0 0.0
    %1433 = vmatpush1.msra.mxu0 0.0
    %1434 = vmatprep.subr.mxu0 0.0
    %1435 = vmatpush1.msra.mxu0 0.0
    %1436 = vmatprep.subr.mxu0 0.0
    %1437 = vmatpush1.msra.mxu0 %v327
    %1438 = vmatprep.subr.mxu0 0.0
    %1439 = vmatpush2.msra.mxu0 0.0
    %1440 = vmatprep.subr.mxu0 0.0
    %1441 = vmatpush2.msra.mxu0 0.0
    %1442 = vmatprep.subr.mxu0 0.0
    %1443 = vmatpush2.msra.mxu0 0.0
    %1444 = vmatprep.subr.mxu0 0.0
    %1445 = vmatpush2.msra.mxu0 0.0
    %1446 = vmatprep.subr.mxu0 0.0
    %1447 = vmatpush2.msra.mxu0 0.0
    %1448 = vmatprep.subr.mxu0 0.0
    %1449 = vmatpush2.msra.mxu0 0.0
    %1450 = vmatprep.subr.mxu0 0.0
    %1451 = vmatpush2.msra.mxu0 0.0
    %1452 = vmatprep.subr.mxu0 0.0
    %1453 = vmatpush2.msra.mxu0 0.0
    %1454 = vmatprep.subr.mxu0 0.0
    %1455 = vmatpush2.msra.mxu0 0.0
    %1456 = vmatprep.subr.mxu0 0.0
    %1457 = vmatpush2.msra.mxu0 0.0
    %1458 = vmatprep.subr.mxu0 0.0
    %1459 = vmatpush2.msra.mxu0 0.0
    %1460 = vmatprep.subr.mxu0 0.0
    %1461 = vmatpush2.msra.mxu0 0.0
    %1462 = vmatprep.subr.mxu0 0.0
    %1463 = vmatpush2.msra.mxu0 0.0
    %1464 = vmatprep.subr.mxu0 0.0
    %1465 = vmatpush2.msra.mxu0 0.0
    %1466 = vmatprep.subr.mxu0 0.0
    %1467 = vmatpush2.msra.mxu0 0.0
    %1468 = vmatprep.subr.mxu0 0.0
    %1469 = vmatpush2.msra.mxu0 0.0
    %1470 = vmatprep.mubr.f32.mxu0 0.0
    %1471 = vmatmul.mubr.f32.gmra.mxu0 %v1401
    %v1472 = vpop.f32.mrf.mxu0
    %v1473 = vadd.f32 0.0, %v1472
    %v1474 = vpop.f32.mrf.mxu0
    %1475 = vmatprep.mubr.f32.mxu0 0.0
    %1476 = vmatmul.mubr.f32.gmra.mxu0 %v1404
    %v1477 = vpop.f32.mrf.mxu0
    %v1478 = vadd.f32 0.0, %v1477
    %v1479 = vpop.f32.mrf.mxu0
    %1480 = vdwg.mxu0
    %v1481 = vadd.f32 %v1194, %v1473
    %v1482 = vadd.f32 %v1195, %v1478
    %v1483 = vadd.f32 %v1481, %v182
    %v1484 = vadd.f32 %v1482, %v183
    %v1485 = vld [vmem:[%s11] sm:$0x1]
    %v1486 = vld [vmem:[%s12] sm:$0x1]
    %v1487 = vsel %vm188, %v1483, 0.0
    %1488 = vadd.xlane.f32.xlu0 %v1487
    %v1489 = vpop.xlane.xlu0 %1488
    %v1490 = vsel %vm188, %v1484, 0.0
    %1491 = vadd.xlane.f32.xlu0 %v1490
    %v1492 = vpop.xlane.xlu0 %1491
    %v1493 = vmul.f32 %v1489, %v195
    %v1494 = vmul.f32 %v1492, %v195
    %v1495 = vsub.f32 %v1483, %v1493
    %v1496 = vsub.f32 %v1484, %v1494
    %v1497 = vmul.f32 %v1495, %v1495
    %v1498 = vmul.f32 %v1496, %v1496
    %v1499 = vsel %vm188, %v1497, 0.0
    %1500 = vadd.xlane.f32.xlu0 %v1499
    %v1501 = vpop.xlane.xlu0 %1500
    %v1502 = vsel %vm188, %v1498, 0.0
    %1503 = vadd.xlane.f32.xlu0 %v1502
    %v1504 = vpop.xlane.xlu0 %1503
    %v1505 = vmul.f32 %v1501, %v195
    %v1506 = vmul.f32 %v1504, %v195
    %v1507 = vadd.f32 %v1505, 1e-05
    %v1508 = vadd.f32 %v1506, 1e-05
    %v1509 = vrsqrt.pop %v1507
    %v1510 = vrsqrt.pop %v1508
    %v1511 = vmul.f32 %v1495, %v1509
    %v1512 = vmul.f32 %v1496, %v1510
    %v1514 = vlaneseq
    %v1515 = vshrl.u32 %v1514, 7
    %v1516 = vsub.s32 0, %v1515
    %v1517 = vrot.slane %v1485, %v1516
    %v1519 = vmul.f32 %v1511, %v1517
    %v1520 = vmul.f32 %v1512, %v1517
    %v1522 = vlaneseq
    %v1523 = vshrl.u32 %v1522, 7
    %v1524 = vsub.s32 0, %v1523
    %v1525 = vrot.slane %v1486, %v1524
    %v1527 = vadd.f32 %v1519, %v1525
    %v1528 = vadd.f32 %v1520, %v1525
    %v1529 = vld [vmem:[%s13] sm:$0xff]
    %v1530 = vld [vmem:[%s13 + $0x8] sm:$0xff]
    %v1531 = vld [vmem:[%s13 + $0x10] sm:$0xff]
    %v1532 = vld [vmem:[%s13 + $0x18] sm:$0xff]
    %v1533 = vld [vmem:[%s14] sm:$0x1]
    %v1535 = vlaneseq
    %v1536 = vshrl.u32 %v1535, 7
    %v1537 = vsub.s32 0, %v1536
    %v1538 = vrot.slane %v1533, %v1537
    %v1541 = vsel %vm188, %v1527, 0
    %v1544 = vsel %vm188, %v1528, 0
    %1546 = vmatprep.subr.mxu0 0.0
    %1547 = vmatpush1.msra.mxu0 0.0
    %1548 = vmatprep.subr.mxu0 0.0
    %1549 = vmatpush1.msra.mxu0 0.0
    %1550 = vmatprep.subr.mxu0 0.0
    %1551 = vmatpush1.msra.mxu0 0.0
    %1552 = vmatprep.subr.mxu0 0.0
    %1553 = vmatpush1.msra.mxu0 0.0
    %1554 = vmatprep.subr.mxu0 0.0
    %1555 = vmatpush1.msra.mxu0 0.0
    %1556 = vmatprep.subr.mxu0 0.0
    %1557 = vmatpush1.msra.mxu0 0.0
    %1558 = vmatprep.subr.mxu0 0.0
    %1559 = vmatpush1.msra.mxu0 0.0
    %1560 = vmatprep.subr.mxu0 0.0
    %1561 = vmatpush1.msra.mxu0 0.0
    %1562 = vmatprep.subr.mxu0 0.0
    %1563 = vmatpush1.msra.mxu0 0.0
    %1564 = vmatprep.subr.mxu0 0.0
    %1565 = vmatpush1.msra.mxu0 0.0
    %1566 = vmatprep.subr.mxu0 0.0
    %1567 = vmatpush1.msra.mxu0 0.0
    %1568 = vmatprep.subr.mxu0 0.0
    %1569 = vmatpush1.msra.mxu0 0.0
    %1570 = vmatprep.subr.mxu0 0.0
    %1571 = vmatpush1.msra.mxu0 %v1532
    %1572 = vmatprep.subr.mxu0 0.0
    %1573 = vmatpush1.msra.mxu0 %v1531
    %1574 = vmatprep.subr.mxu0 0.0
    %1575 = vmatpush1.msra.mxu0 %v1530
    %1576 = vmatprep.subr.mxu0 0.0
    %1577 = vmatpush1.msra.mxu0 %v1529
    %1578 = vmatprep.subr.mxu0 0.0
    %1579 = vmatpush2.msra.mxu0 0.0
    %1580 = vmatprep.subr.mxu0 0.0
    %1581 = vmatpush2.msra.mxu0 0.0
    %1582 = vmatprep.subr.mxu0 0.0
    %1583 = vmatpush2.msra.mxu0 0.0
    %1584 = vmatprep.subr.mxu0 0.0
    %1585 = vmatpush2.msra.mxu0 0.0
    %1586 = vmatprep.subr.mxu0 0.0
    %1587 = vmatpush2.msra.mxu0 0.0
    %1588 = vmatprep.subr.mxu0 0.0
    %1589 = vmatpush2.msra.mxu0 0.0
    %1590 = vmatprep.subr.mxu0 0.0
    %1591 = vmatpush2.msra.mxu0 0.0
    %1592 = vmatprep.subr.mxu0 0.0
    %1593 = vmatpush2.msra.mxu0 0.0
    %1594 = vmatprep.subr.mxu0 0.0
    %1595 = vmatpush2.msra.mxu0 0.0
    %1596 = vmatprep.subr.mxu0 0.0
    %1597 = vmatpush2.msra.mxu0 0.0
    %1598 = vmatprep.subr.mxu0 0.0
    %1599 = vmatpush2.msra.mxu0 0.0
    %1600 = vmatprep.subr.mxu0 0.0
    %1601 = vmatpush2.msra.mxu0 0.0
    %1602 = vmatprep.subr.mxu0 0.0
    %1603 = vmatpush2.msra.mxu0 0.0
    %1604 = vmatprep.subr.mxu0 0.0
    %1605 = vmatpush2.msra.mxu0 0.0
    %1606 = vmatprep.subr.mxu0 0.0
    %1607 = vmatpush2.msra.mxu0 0.0
    %1608 = vmatprep.subr.mxu0 0.0
    %1609 = vmatpush2.msra.mxu0 0.0
    %1610 = vmatprep.mubr.f32.mxu0 0.0
    %1611 = vmatmul.mubr.f32.gmra.mxu0 %v1541
    %v1612 = vpop.f32.mrf.mxu0
    %v1613 = vadd.f32 %v1538, %v1612
    %v1614 = vpop.f32.mrf.mxu0
    %1615 = vmatprep.mubr.f32.mxu0 0.0
    %1616 = vmatmul.mubr.f32.gmra.mxu0 %v1544
    %v1617 = vpop.f32.mrf.mxu0
    %v1618 = vadd.f32 %v1538, %v1617
    %v1619 = vpop.f32.mrf.mxu0
    %1620 = vdwg.mxu0
    %v1621 = vmul.f32 %v1613, 0.5
    %v1622 = vmul.f32 %v1618, 0.5
    %v1623 = vmul.f32 %v1613, 0.70710677
    %v1624 = vmul.f32 %v1618, 0.70710677
    %v1625 = vand.u32 2147483647, %v1623
    %v1626 = vand.u32 2147483647, %v1624
    %v1627 = vmul.f32 %v1625, 0.3275911
    %v1628 = vmul.f32 %v1626, 0.3275911
    %v1629 = vadd.f32 %v1627, 1.0
    %v1630 = vadd.f32 %v1628, 1.0
    %v1631 = vrcp.pop %v1629
    %v1632 = vmul.f32 1.0, %v1631
    %v1633 = vrcp.pop %v1630
    %v1634 = vmul.f32 1.0, %v1633
    %v1635 = vmul.f32 %v1632, 1.0614054
    %v1636 = vmul.f32 %v1634, 1.0614054
    %v1637 = vadd.f32 %v1635, -1.4531521
    %v1638 = vadd.f32 %v1636, -1.4531521
    %v1639 = vmul.f32 %v1637, %v1632
    %v1640 = vmul.f32 %v1638, %v1634
    %v1641 = vadd.f32 %v1639, 1.4214138
    %v1642 = vadd.f32 %v1640, 1.4214138
    %v1643 = vmul.f32 %v1641, %v1632
    %v1644 = vmul.f32 %v1642, %v1634
    %v1645 = vadd.f32 %v1643, -0.28449672
    %v1646 = vadd.f32 %v1644, -0.28449672
    %v1647 = vmul.f32 %v1645, %v1632
    %v1648 = vmul.f32 %v1646, %v1634
    %v1649 = vadd.f32 %v1647, 0.2548296
    %v1650 = vadd.f32 %v1648, 0.2548296
    %v1651 = vmul.f32 %v1649, %v1632
    %v1652 = vmul.f32 %v1650, %v1634
    %v1653 = vsub.f32 0.0, %v1625
    %v1654 = vsub.f32 0.0, %v1626
    %v1655 = vmul.f32 %v1653, %v1625
    %v1656 = vmul.f32 %v1654, %v1626
    %v1657 = vmul.f32 %v1655, 1.442695
    %v1658 = vpow.pop %v1657
    %v1659 = vmul.f32 %v1656, 1.442695
    %v1660 = vpow.pop %v1659
    %v1661 = vmul.f32 %v1651, %v1658
    %v1662 = vmul.f32 %v1652, %v1660
    %v1663 = vsub.f32 1.0, %v1661
    %v1664 = vsub.f32 1.0, %v1662
    %vm1665 = vcmp.ge.f32.partialorder %v1623, 0.0
    %vm1666 = vcmp.ge.f32.partialorder %v1624, 0.0
    %v1667 = vsub.f32 0.0, %v1663
    %v1668 = vsub.f32 0.0, %v1664
    %v1669 = vsel %vm1665, %v1663, %v1667
    %v1670 = vsel %vm1666, %v1664, %v1668
    %v1671 = vadd.f32 %v1669, 1.0
    %v1672 = vadd.f32 %v1670, 1.0
    %v1673 = vmul.f32 %v1621, %v1671
    %v1674 = vmul.f32 %v1622, %v1672
    %v1675 = vld [vmem:[%s15] sm:$0xff]
    %v1676 = vld [vmem:[%s15 + $0x8] sm:$0xff]
    %v1677 = vld [vmem:[%s15 + $0x10] sm:$0xff]
    %v1678 = vld [vmem:[%s15 + $0x18] sm:$0xff]
    %v1679 = vld [vmem:[%s15 + $0x20] sm:$0xff]
    %v1680 = vld [vmem:[%s15 + $0x28] sm:$0xff]
    %v1681 = vld [vmem:[%s15 + $0x30] sm:$0xff]
    %v1682 = vld [vmem:[%s15 + $0x38] sm:$0xff]
    %v1683 = vld [vmem:[%s16] sm:$0x1]
    %v1685 = vlaneseq
    %v1686 = vshrl.u32 %v1685, 7
    %v1687 = vsub.s32 0, %v1686
    %v1688 = vrot.slane %v1683, %v1687
    %vm1690 = vcmask 523264
    %v1692 = vsel %vm1690, %v1673, 0
    %v1695 = vsel %vm1690, %v1674, 0
    %1697 = vmatprep.subr.mxu0 0.0
    %1698 = vmatpush1.msra.mxu0 0.0
    %1699 = vmatprep.subr.mxu0 0.0
    %1700 = vmatpush1.msra.mxu0 0.0
    %1701 = vmatprep.subr.mxu0 0.0
    %1702 = vmatpush1.msra.mxu0 0.0
    %1703 = vmatprep.subr.mxu0 0.0
    %1704 = vmatpush1.msra.mxu0 0.0
    %1705 = vmatprep.subr.mxu0 0.0
    %1706 = vmatpush1.msra.mxu0 0.0
    %1707 = vmatprep.subr.mxu0 0.0
    %1708 = vmatpush1.msra.mxu0 0.0
    %1709 = vmatprep.subr.mxu0 0.0
    %1710 = vmatpush1.msra.mxu0 0.0
    %1711 = vmatprep.subr.mxu0 0.0
    %1712 = vmatpush1.msra.mxu0 0.0
    %1713 = vmatprep.subr.mxu0 0.0
    %1714 = vmatpush1.msra.mxu0 %v1682
    %1715 = vmatprep.subr.mxu0 0.0
    %1716 = vmatpush1.msra.mxu0 %v1681
    %1717 = vmatprep.subr.mxu0 0.0
    %1718 = vmatpush1.msra.mxu0 %v1680
    %1719 = vmatprep.subr.mxu0 0.0
    %1720 = vmatpush1.msra.mxu0 %v1679
    %1721 = vmatprep.subr.mxu0 0.0
    %1722 = vmatpush1.msra.mxu0 %v1678
    %1723 = vmatprep.subr.mxu0 0.0
    %1724 = vmatpush1.msra.mxu0 %v1677
    %1725 = vmatprep.subr.mxu0 0.0
    %1726 = vmatpush1.msra.mxu0 %v1676
    %1727 = vmatprep.subr.mxu0 0.0
    %1728 = vmatpush1.msra.mxu0 %v1675
    %1729 = vmatprep.subr.mxu0 0.0
    %1730 = vmatpush2.msra.mxu0 0.0
    %1731 = vmatprep.subr.mxu0 0.0
    %1732 = vmatpush2.msra.mxu0 0.0
    %1733 = vmatprep.subr.mxu0 0.0
    %1734 = vmatpush2.msra.mxu0 0.0
    %1735 = vmatprep.subr.mxu0 0.0
    %1736 = vmatpush2.msra.mxu0 0.0
    %1737 = vmatprep.subr.mxu0 0.0
    %1738 = vmatpush2.msra.mxu0 0.0
    %1739 = vmatprep.subr.mxu0 0.0
    %1740 = vmatpush2.msra.mxu0 0.0
    %1741 = vmatprep.subr.mxu0 0.0
    %1742 = vmatpush2.msra.mxu0 0.0
    %1743 = vmatprep.subr.mxu0 0.0
    %1744 = vmatpush2.msra.mxu0 0.0
    %1745 = vmatprep.subr.mxu0 0.0
    %1746 = vmatpush2.msra.mxu0 0.0
    %1747 = vmatprep.subr.mxu0 0.0
    %1748 = vmatpush2.msra.mxu0 0.0
    %1749 = vmatprep.subr.mxu0 0.0
    %1750 = vmatpush2.msra.mxu0 0.0
    %1751 = vmatprep.subr.mxu0 0.0
    %1752 = vmatpush2.msra.mxu0 0.0
    %1753 = vmatprep.subr.mxu0 0.0
    %1754 = vmatpush2.msra.mxu0 0.0
    %1755 = vmatprep.subr.mxu0 0.0
    %1756 = vmatpush2.msra.mxu0 0.0
    %1757 = vmatprep.subr.mxu0 0.0
    %1758 = vmatpush2.msra.mxu0 0.0
    %1759 = vmatprep.subr.mxu0 0.0
    %1760 = vmatpush2.msra.mxu0 0.0
    %1761 = vmatprep.mubr.f32.mxu0 0.0
    %1762 = vmatmul.mubr.f32.gmra.mxu0 %v1692
    %v1763 = vpop.f32.mrf.mxu0
    %v1764 = vadd.f32 %v1688, %v1763
    %v1765 = vpop.f32.mrf.mxu0
    %1766 = vmatprep.mubr.f32.mxu0 0.0
    %1767 = vmatmul.mubr.f32.gmra.mxu0 %v1695
    %v1768 = vpop.f32.mrf.mxu0
    %v1769 = vadd.f32 %v1688, %v1768
    %v1770 = vpop.f32.mrf.mxu0
    %1771 = vdwg.mxu0
    %v1772 = vadd.f32 %v1764, %v1483
    %v1773 = vadd.f32 %v1769, %v1484
    %s1774 = scalar_lea.vmem %s5, 1
    %v1775 = vld [vmem:[%s1774] sm:$0x1]
    %s1776 = scalar_lea.vmem %s6, 1
    %v1777 = vld [vmem:[%s1776] sm:$0x1]
    %v1778 = vsel %vm188, %v1772, 0.0
    %1779 = vadd.xlane.f32.xlu0 %v1778
    %v1780 = vpop.xlane.xlu0 %1779
    %v1781 = vsel %vm188, %v1773, 0.0
    %1782 = vadd.xlane.f32.xlu0 %v1781
    %v1783 = vpop.xlane.xlu0 %1782
    %v1784 = vmul.f32 %v1780, %v195
    %v1785 = vmul.f32 %v1783, %v195
    %v1786 = vsub.f32 %v1772, %v1784
    %v1787 = vsub.f32 %v1773, %v1785
    %v1788 = vmul.f32 %v1786, %v1786
    %v1789 = vmul.f32 %v1787, %v1787
    %v1790 = vsel %vm188, %v1788, 0.0
    %1791 = vadd.xlane.f32.xlu0 %v1790
    %v1792 = vpop.xlane.xlu0 %1791
    %v1793 = vsel %vm188, %v1789, 0.0
    %1794 = vadd.xlane.f32.xlu0 %v1793
    %v1795 = vpop.xlane.xlu0 %1794
    %v1796 = vmul.f32 %v1792, %v195
    %v1797 = vmul.f32 %v1795, %v195
    %v1798 = vadd.f32 %v1796, 1e-05
    %v1799 = vadd.f32 %v1797, 1e-05
    %v1800 = vrsqrt.pop %v1798
    %v1801 = vrsqrt.pop %v1799
    %v1802 = vmul.f32 %v1786, %v1800
    %v1803 = vmul.f32 %v1787, %v1801
    %v1805 = vlaneseq
    %v1806 = vshrl.u32 %v1805, 7
    %v1807 = vsub.s32 0, %v1806
    %v1808 = vrot.slane %v1775, %v1807
    %v1810 = vmul.f32 %v1802, %v1808
    %v1811 = vmul.f32 %v1803, %v1808
    %v1813 = vlaneseq
    %v1814 = vshrl.u32 %v1813, 7
    %v1815 = vsub.s32 0, %v1814
    %v1816 = vrot.slane %v1777, %v1815
    %v1818 = vadd.f32 %v1810, %v1816
    %v1819 = vadd.f32 %v1811, %v1816
    %s1820 = scalar_lea.vmem %s7, 32
    %v1821 = vld [vmem:[%s1820] sm:$0xff]
    %v1822 = vld [vmem:[%s1820 + $0x8] sm:$0xff]
    %v1823 = vld [vmem:[%s1820 + $0x10] sm:$0xff]
    %v1824 = vld [vmem:[%s1820 + $0x18] sm:$0xff]
    %s1825 = scalar_lea.vmem %s8, 1
    %v1826 = vld [vmem:[%s1825] sm:$0x1]
    %v1828 = vlaneseq
    %v1829 = vshrl.u32 %v1828, 7
    %v1830 = vsub.s32 0, %v1829
    %v1831 = vrot.slane %v1826, %v1830
    %v1834 = vsel %vm188, %v1818, 0
    %v1837 = vsel %vm188, %v1819, 0
    %1839 = vmatprep.subr.mxu0 0.0
    %1840 = vmatpush1.msra.mxu0 0.0
    %1841 = vmatprep.subr.mxu0 0.0
    %1842 = vmatpush1.msra.mxu0 0.0
    %1843 = vmatprep.subr.mxu0 0.0
    %1844 = vmatpush1.msra.mxu0 0.0
    %1845 = vmatprep.subr.mxu0 0.0
    %1846 = vmatpush1.msra.mxu0 0.0
    %1847 = vmatprep.subr.mxu0 0.0
    %1848 = vmatpush1.msra.mxu0 0.0
    %1849 = vmatprep.subr.mxu0 0.0
    %1850 = vmatpush1.msra.mxu0 0.0
    %1851 = vmatprep.subr.mxu0 0.0
    %1852 = vmatpush1.msra.mxu0 0.0
    %1853 = vmatprep.subr.mxu0 0.0
    %1854 = vmatpush1.msra.mxu0 0.0
    %1855 = vmatprep.subr.mxu0 0.0
    %1856 = vmatpush1.msra.mxu0 0.0
    %1857 = vmatprep.subr.mxu0 0.0
    %1858 = vmatpush1.msra.mxu0 0.0
    %1859 = vmatprep.subr.mxu0 0.0
    %1860 = vmatpush1.msra.mxu0 0.0
    %1861 = vmatprep.subr.mxu0 0.0
    %1862 = vmatpush1.msra.mxu0 0.0
    %1863 = vmatprep.subr.mxu0 0.0
    %1864 = vmatpush1.msra.mxu0 %v1824
    %1865 = vmatprep.subr.mxu0 0.0
    %1866 = vmatpush1.msra.mxu0 %v1823
    %1867 = vmatprep.subr.mxu0 0.0
    %1868 = vmatpush1.msra.mxu0 %v1822
    %1869 = vmatprep.subr.mxu0 0.0
    %1870 = vmatpush1.msra.mxu0 %v1821
    %1871 = vmatprep.subr.mxu0 0.0
    %1872 = vmatpush2.msra.mxu0 0.0
    %1873 = vmatprep.subr.mxu0 0.0
    %1874 = vmatpush2.msra.mxu0 0.0
    %1875 = vmatprep.subr.mxu0 0.0
    %1876 = vmatpush2.msra.mxu0 0.0
    %1877 = vmatprep.subr.mxu0 0.0
    %1878 = vmatpush2.msra.mxu0 0.0
    %1879 = vmatprep.subr.mxu0 0.0
    %1880 = vmatpush2.msra.mxu0 0.0
    %1881 = vmatprep.subr.mxu0 0.0
    %1882 = vmatpush2.msra.mxu0 0.0
    %1883 = vmatprep.subr.mxu0 0.0
    %1884 = vmatpush2.msra.mxu0 0.0
    %1885 = vmatprep.subr.mxu0 0.0
    %1886 = vmatpush2.msra.mxu0 0.0
    %1887 = vmatprep.subr.mxu0 0.0
    %1888 = vmatpush2.msra.mxu0 0.0
    %1889 = vmatprep.subr.mxu0 0.0
    %1890 = vmatpush2.msra.mxu0 0.0
    %1891 = vmatprep.subr.mxu0 0.0
    %1892 = vmatpush2.msra.mxu0 0.0
    %1893 = vmatprep.subr.mxu0 0.0
    %1894 = vmatpush2.msra.mxu0 0.0
    %1895 = vmatprep.subr.mxu0 0.0
    %1896 = vmatpush2.msra.mxu0 0.0
    %1897 = vmatprep.subr.mxu0 0.0
    %1898 = vmatpush2.msra.mxu0 0.0
    %1899 = vmatprep.subr.mxu0 0.0
    %1900 = vmatpush2.msra.mxu0 0.0
    %1901 = vmatprep.subr.mxu0 0.0
    %1902 = vmatpush2.msra.mxu0 0.0
    %1903 = vmatprep.mubr.f32.mxu0 0.0
    %1904 = vmatmul.mubr.f32.gmra.mxu0 %v1834
    %v1905 = vpop.f32.mrf.mxu0
    %v1906 = vadd.f32 %v1831, %v1905
    %v1907 = vpop.f32.mrf.mxu0
    %1908 = vmatprep.mubr.f32.mxu0 0.0
    %1909 = vmatmul.mubr.f32.gmra.mxu0 %v1837
    %v1910 = vpop.f32.mrf.mxu0
    %v1911 = vadd.f32 %v1831, %v1910
    %v1912 = vpop.f32.mrf.mxu0
    %1913 = vdwg.mxu0
    %s1914 = scalar_lea.vmem %s9, 32
    %v1915 = vld [vmem:[%s1914] sm:$0xff]
    %v1916 = vld [vmem:[%s1914 + $0x8] sm:$0xff]
    %v1917 = vld [vmem:[%s1914 + $0x10] sm:$0xff]
    %v1918 = vld [vmem:[%s1914 + $0x18] sm:$0xff]
    %s1919 = scalar_lea.vmem %s10, 1
    %v1920 = vld [vmem:[%s1919] sm:$0x1]
    %1923 = vrot.lane.b32.xlu0 %v1906, 96
    %v1924 = vpop.permute.xlu0 %1923
    %1925 = vrot.lane.b32.xlu0 %v1911, 96
    %v1926 = vpop.permute.xlu0 %1925
    %v1927 = vsel %vm335, %v1906, 0
    %v1929 = vsel %vm335, %v1911, 0
    %v1931 = vsel %vm335, %v1924, 0
    %v1933 = vsel %vm335, %v1926, 0
    %1935 = vmatprep.subr.mxu0 0.0
    %1936 = vmatpush1.xpose.msra.mxu0 0.0
    %1937 = vmatprep.subr.mxu0 0.0
    %1938 = vmatpush1.xpose.msra.mxu0 0.0
    %1939 = vmatprep.subr.mxu0 0.0
    %1940 = vmatpush1.xpose.msra.mxu0 0.0
    %1941 = vmatprep.subr.mxu0 0.0
    %1942 = vmatpush1.xpose.msra.mxu0 0.0
    %1943 = vmatprep.subr.mxu0 0.0
    %1944 = vmatpush1.xpose.msra.mxu0 0.0
    %1945 = vmatprep.subr.mxu0 0.0
    %1946 = vmatpush1.xpose.msra.mxu0 0.0
    %1947 = vmatprep.subr.mxu0 0.0
    %1948 = vmatpush1.xpose.msra.mxu0 0.0
    %1949 = vmatprep.subr.mxu0 0.0
    %1950 = vmatpush1.xpose.msra.mxu0 0.0
    %1951 = vmatprep.subr.mxu0 0.0
    %1952 = vmatpush1.xpose.msra.mxu0 0.0
    %1953 = vmatprep.subr.mxu0 0.0
    %1954 = vmatpush1.xpose.msra.mxu0 0.0
    %1955 = vmatprep.subr.mxu0 0.0
    %1956 = vmatpush1.xpose.msra.mxu0 0.0
    %1957 = vmatprep.subr.mxu0 0.0
    %1958 = vmatpush1.xpose.msra.mxu0 0.0
    %1959 = vmatprep.subr.mxu0 0.0
    %1960 = vmatpush1.xpose.msra.mxu0 0.0
    %1961 = vmatprep.subr.mxu0 0.0
    %1962 = vmatpush1.xpose.msra.mxu0 0.0
    %1963 = vmatprep.subr.mxu0 0.0
    %1964 = vmatpush1.xpose.msra.mxu0 %v1933
    %1965 = vmatprep.subr.mxu0 0.0
    %1966 = vmatpush1.xpose.msra.mxu0 %v1931
    %1967 = vmatprep.subr.mxu0 0.0
    %1968 = vmatpush2.xpose.msra.mxu0 0.0
    %1969 = vmatprep.subr.mxu0 0.0
    %1970 = vmatpush2.xpose.msra.mxu0 0.0
    %1971 = vmatprep.subr.mxu0 0.0
    %1972 = vmatpush2.xpose.msra.mxu0 0.0
    %1973 = vmatprep.subr.mxu0 0.0
    %1974 = vmatpush2.xpose.msra.mxu0 0.0
    %1975 = vmatprep.subr.mxu0 0.0
    %1976 = vmatpush2.xpose.msra.mxu0 0.0
    %1977 = vmatprep.subr.mxu0 0.0
    %1978 = vmatpush2.xpose.msra.mxu0 0.0
    %1979 = vmatprep.subr.mxu0 0.0
    %1980 = vmatpush2.xpose.msra.mxu0 0.0
    %1981 = vmatprep.subr.mxu0 0.0
    %1982 = vmatpush2.xpose.msra.mxu0 0.0
    %1983 = vmatprep.subr.mxu0 0.0
    %1984 = vmatpush2.xpose.msra.mxu0 0.0
    %1985 = vmatprep.subr.mxu0 0.0
    %1986 = vmatpush2.xpose.msra.mxu0 0.0
    %1987 = vmatprep.subr.mxu0 0.0
    %1988 = vmatpush2.xpose.msra.mxu0 0.0
    %1989 = vmatprep.subr.mxu0 0.0
    %1990 = vmatpush2.xpose.msra.mxu0 0.0
    %1991 = vmatprep.subr.mxu0 0.0
    %1992 = vmatpush2.xpose.msra.mxu0 0.0
    %1993 = vmatprep.subr.mxu0 0.0
    %1994 = vmatpush2.xpose.msra.mxu0 0.0
    %1995 = vmatprep.subr.mxu0 0.0
    %1996 = vmatpush2.xpose.msra.mxu0 0.0
    %1997 = vmatprep.subr.mxu0 0.0
    %1998 = vmatpush2.xpose.msra.mxu0 0.0
    %1999 = vmatprep.mubr.f32.mxu0 0.0
    %2000 = vmatmul.mubr.f32.gmra.mxu0 %v1927
    %v2001 = vpop.f32.mrf.mxu0
    %v2002 = vadd.f32 0.0, %v2001
    %v2003 = vpop.f32.mrf.mxu0
    %2004 = vmatprep.mubr.f32.mxu0 0.0
    %2005 = vmatmul.mubr.f32.gmra.mxu0 %v1929
    %v2006 = vpop.f32.mrf.mxu0
    %v2007 = vadd.f32 0.0, %v2006
    %v2008 = vpop.f32.mrf.mxu0
    %2009 = vdwg.mxu0
    %v2010 = vmul.f32 %v2002, 0.35355338
    %v2011 = vmul.f32 %v2007, 0.35355338
    %v2012 = vadd.f32 %v2010, %v184
    %v2013 = vadd.f32 %v2011, %v185
    %v2014 = vsel %vm423, %v2012, -inf
    %2015 = vmax.xlane.f32.xlu0 %v2014
    %v2016 = vpop.xlane.xlu0 %2015
    %v2017 = vsel %vm423, %v2013, -inf
    %2018 = vmax.xlane.f32.xlu0 %v2017
    %v2019 = vpop.xlane.xlu0 %2018
    %v2020 = vsub.f32 %v2012, %v2016
    %v2021 = vsub.f32 %v2013, %v2019
    %v2022 = vmul.f32 %v2020, 1.442695
    %v2023 = vpow.pop %v2022
    %v2024 = vmul.f32 %v2021, 1.442695
    %v2025 = vpow.pop %v2024
    %v2026 = vsel %vm423, %v2023, 0.0
    %2027 = vadd.xlane.f32.xlu0 %v2026
    %v2028 = vpop.xlane.xlu0 %2027
    %v2029 = vsel %vm423, %v2025, 0.0
    %2030 = vadd.xlane.f32.xlu0 %v2029
    %v2031 = vpop.xlane.xlu0 %2030
    %v2032 = vrcp.pop %v2028
    %v2033 = vmul.f32 %v2023, %v2032
    %v2034 = vrcp.pop %v2031
    %v2035 = vmul.f32 %v2025, %v2034
    %2036 = vrot.lane.b32.xlu0 %v1906, 64
    %v2037 = vpop.permute.xlu0 %2036
    %2038 = vrot.lane.b32.xlu0 %v1911, 64
    %v2039 = vpop.permute.xlu0 %2038
    %v2043 = vsel %vm423, %v2033, 0
    %v2046 = vsel %vm423, %v2035, 0
    %2048 = vmatprep.subr.mxu0 0.0
    %2049 = vmatpush1.msra.mxu0 0.0
    %2050 = vmatprep.subr.mxu0 0.0
    %2051 = vmatpush1.msra.mxu0 0.0
    %2052 = vmatprep.subr.mxu0 0.0
    %2053 = vmatpush1.msra.mxu0 0.0
    %2054 = vmatprep.subr.mxu0 0.0
    %2055 = vmatpush1.msra.mxu0 0.0
    %2056 = vmatprep.subr.mxu0 0.0
    %2057 = vmatpush1.msra.mxu0 0.0
    %2058 = vmatprep.subr.mxu0 0.0
    %2059 = vmatpush1.msra.mxu0 0.0
    %2060 = vmatprep.subr.mxu0 0.0
    %2061 = vmatpush1.msra.mxu0 0.0
    %2062 = vmatprep.subr.mxu0 0.0
    %2063 = vmatpush1.msra.mxu0 0.0
    %2064 = vmatprep.subr.mxu0 0.0
    %2065 = vmatpush1.msra.mxu0 0.0
    %2066 = vmatprep.subr.mxu0 0.0
    %2067 = vmatpush1.msra.mxu0 0.0
    %2068 = vmatprep.subr.mxu0 0.0
    %2069 = vmatpush1.msra.mxu0 0.0
    %2070 = vmatprep.subr.mxu0 0.0
    %2071 = vmatpush1.msra.mxu0 0.0
    %2072 = vmatprep.subr.mxu0 0.0
    %2073 = vmatpush1.msra.mxu0 0.0
    %2074 = vmatprep.subr.mxu0 0.0
    %2075 = vmatpush1.msra.mxu0 0.0
    %2076 = vmatprep.subr.mxu0 0.0
    %2077 = vmatpush1.msra.mxu0 %v2039
    %2078 = vmatprep.subr.mxu0 0.0
    %2079 = vmatpush1.msra.mxu0 %v2037
    %2080 = vmatprep.subr.mxu0 0.0
    %2081 = vmatpush2.msra.mxu0 0.0
    %2082 = vmatprep.subr.mxu0 0.0
    %2083 = vmatpush2.msra.mxu0 0.0
    %2084 = vmatprep.subr.mxu0 0.0
    %2085 = vmatpush2.msra.mxu0 0.0
    %2086 = vmatprep.subr.mxu0 0.0
    %2087 = vmatpush2.msra.mxu0 0.0
    %2088 = vmatprep.subr.mxu0 0.0
    %2089 = vmatpush2.msra.mxu0 0.0
    %2090 = vmatprep.subr.mxu0 0.0
    %2091 = vmatpush2.msra.mxu0 0.0
    %2092 = vmatprep.subr.mxu0 0.0
    %2093 = vmatpush2.msra.mxu0 0.0
    %2094 = vmatprep.subr.mxu0 0.0
    %2095 = vmatpush2.msra.mxu0 0.0
    %2096 = vmatprep.subr.mxu0 0.0
    %2097 = vmatpush2.msra.mxu0 0.0
    %2098 = vmatprep.subr.mxu0 0.0
    %2099 = vmatpush2.msra.mxu0 0.0
    %2100 = vmatprep.subr.mxu0 0.0
    %2101 = vmatpush2.msra.mxu0 0.0
    %2102 = vmatprep.subr.mxu0 0.0
    %2103 = vmatpush2.msra.mxu0 0.0
    %2104 = vmatprep.subr.mxu0 0.0
    %2105 = vmatpush2.msra.mxu0 0.0
    %2106 = vmatprep.subr.mxu0 0.0
    %2107 = vmatpush2.msra.mxu0 0.0
    %2108 = vmatprep.subr.mxu0 0.0
    %2109 = vmatpush2.msra.mxu0 0.0
    %2110 = vmatprep.subr.mxu0 0.0
    %2111 = vmatpush2.msra.mxu0 0.0
    %2112 = vmatprep.mubr.f32.mxu0 0.0
    %2113 = vmatmul.mubr.f32.gmra.mxu0 %v2043
    %v2114 = vpop.f32.mrf.mxu0
    %v2115 = vadd.f32 0.0, %v2114
    %v2116 = vpop.f32.mrf.mxu0
    %2117 = vmatprep.mubr.f32.mxu0 0.0
    %2118 = vmatmul.mubr.f32.gmra.mxu0 %v2046
    %v2119 = vpop.f32.mrf.mxu0
    %v2120 = vadd.f32 0.0, %v2119
    %v2121 = vpop.f32.mrf.mxu0
    %2122 = vdwg.mxu0
    %v2124 = vsel %vm335, %v2115, 0
    %v2127 = vsel %vm335, %v2120, 0
    %2129 = vmatprep.subr.mxu0 0.0
    %2130 = vmatpush1.msra.mxu0 0.0
    %2131 = vmatprep.subr.mxu0 0.0
    %2132 = vmatpush1.msra.mxu0 0.0
    %2133 = vmatprep.subr.mxu0 0.0
    %2134 = vmatpush1.msra.mxu0 0.0
    %2135 = vmatprep.subr.mxu0 0.0
    %2136 = vmatpush1.msra.mxu0 0.0
    %2137 = vmatprep.subr.mxu0 0.0
    %2138 = vmatpush1.msra.mxu0 0.0
    %2139 = vmatprep.subr.mxu0 0.0
    %2140 = vmatpush1.msra.mxu0 0.0
    %2141 = vmatprep.subr.mxu0 0.0
    %2142 = vmatpush1.msra.mxu0 0.0
    %2143 = vmatprep.subr.mxu0 0.0
    %2144 = vmatpush1.msra.mxu0 0.0
    %2145 = vmatprep.subr.mxu0 0.0
    %2146 = vmatpush1.msra.mxu0 0.0
    %2147 = vmatprep.subr.mxu0 0.0
    %2148 = vmatpush1.msra.mxu0 0.0
    %2149 = vmatprep.subr.mxu0 0.0
    %2150 = vmatpush1.msra.mxu0 0.0
    %2151 = vmatprep.subr.mxu0 0.0
    %2152 = vmatpush1.msra.mxu0 0.0
    %2153 = vmatprep.subr.mxu0 0.0
    %2154 = vmatpush1.msra.mxu0 0.0
    %2155 = vmatprep.subr.mxu0 0.0
    %2156 = vmatpush1.msra.mxu0 0.0
    %2157 = vmatprep.subr.mxu0 0.0
    %2158 = vmatpush1.msra.mxu0 0.0
    %2159 = vmatprep.subr.mxu0 0.0
    %2160 = vmatpush1.msra.mxu0 %v1915
    %2161 = vmatprep.subr.mxu0 0.0
    %2162 = vmatpush2.msra.mxu0 0.0
    %2163 = vmatprep.subr.mxu0 0.0
    %2164 = vmatpush2.msra.mxu0 0.0
    %2165 = vmatprep.subr.mxu0 0.0
    %2166 = vmatpush2.msra.mxu0 0.0
    %2167 = vmatprep.subr.mxu0 0.0
    %2168 = vmatpush2.msra.mxu0 0.0
    %2169 = vmatprep.subr.mxu0 0.0
    %2170 = vmatpush2.msra.mxu0 0.0
    %2171 = vmatprep.subr.mxu0 0.0
    %2172 = vmatpush2.msra.mxu0 0.0
    %2173 = vmatprep.subr.mxu0 0.0
    %2174 = vmatpush2.msra.mxu0 0.0
    %2175 = vmatprep.subr.mxu0 0.0
    %2176 = vmatpush2.msra.mxu0 0.0
    %2177 = vmatprep.subr.mxu0 0.0
    %2178 = vmatpush2.msra.mxu0 0.0
    %2179 = vmatprep.subr.mxu0 0.0
    %2180 = vmatpush2.msra.mxu0 0.0
    %2181 = vmatprep.subr.mxu0 0.0
    %2182 = vmatpush2.msra.mxu0 0.0
    %2183 = vmatprep.subr.mxu0 0.0
    %2184 = vmatpush2.msra.mxu0 0.0
    %2185 = vmatprep.subr.mxu0 0.0
    %2186 = vmatpush2.msra.mxu0 0.0
    %2187 = vmatprep.subr.mxu0 0.0
    %2188 = vmatpush2.msra.mxu0 0.0
    %2189 = vmatprep.subr.mxu0 0.0
    %2190 = vmatpush2.msra.mxu0 0.0
    %2191 = vmatprep.subr.mxu0 0.0
    %2192 = vmatpush2.msra.mxu0 0.0
    %2193 = vmatprep.mubr.f32.mxu0 0.0
    %2194 = vmatmul.mubr.f32.gmra.mxu0 %v2124
    %v2195 = vpop.f32.mrf.mxu0
    %v2196 = vadd.f32 0.0, %v2195
    %v2197 = vpop.f32.mrf.mxu0
    %2198 = vmatprep.mubr.f32.mxu0 0.0
    %2199 = vmatmul.mubr.f32.gmra.mxu0 %v2127
    %v2200 = vpop.f32.mrf.mxu0
    %v2201 = vadd.f32 0.0, %v2200
    %v2202 = vpop.f32.mrf.mxu0
    %2203 = vdwg.mxu0
    %v2205 = vlaneseq
    %v2206 = vshrl.u32 %v2205, 7
    %v2207 = vsub.s32 0, %v2206
    %v2208 = vrot.slane %v1920, %v2207
    %v2210 = vadd.f32 %v2208, %v2196
    %v2211 = vadd.f32 %v2208, %v2201
    %2212 = vrot.lane.b32.xlu0 %v1906, 120
    %v2213 = vpop.permute.xlu0 %2212
    %2214 = vrot.lane.b32.xlu0 %v1911, 120
    %v2215 = vpop.permute.xlu0 %2214
    %2216 = vrot.lane.b32.xlu0 %v1906, 88
    %v2217 = vpop.permute.xlu0 %2216
    %2218 = vrot.lane.b32.xlu0 %v1911, 88
    %v2219 = vpop.permute.xlu0 %2218
    %v2220 = vsel %vm335, %v2213, 0
    %v2222 = vsel %vm335, %v2215, 0
    %v2224 = vsel %vm335, %v2217, 0
    %v2226 = vsel %vm335, %v2219, 0
    %2228 = vmatprep.subr.mxu0 0.0
    %2229 = vmatpush1.xpose.msra.mxu0 0.0
    %2230 = vmatprep.subr.mxu0 0.0
    %2231 = vmatpush1.xpose.msra.mxu0 0.0
    %2232 = vmatprep.subr.mxu0 0.0
    %2233 = vmatpush1.xpose.msra.mxu0 0.0
    %2234 = vmatprep.subr.mxu0 0.0
    %2235 = vmatpush1.xpose.msra.mxu0 0.0
    %2236 = vmatprep.subr.mxu0 0.0
    %2237 = vmatpush1.xpose.msra.mxu0 0.0
    %2238 = vmatprep.subr.mxu0 0.0
    %2239 = vmatpush1.xpose.msra.mxu0 0.0
    %2240 = vmatprep.subr.mxu0 0.0
    %2241 = vmatpush1.xpose.msra.mxu0 0.0
    %2242 = vmatprep.subr.mxu0 0.0
    %2243 = vmatpush1.xpose.msra.mxu0 0.0
    %2244 = vmatprep.subr.mxu0 0.0
    %2245 = vmatpush1.xpose.msra.mxu0 0.0
    %2246 = vmatprep.subr.mxu0 0.0
    %2247 = vmatpush1.xpose.msra.mxu0 0.0
    %2248 = vmatprep.subr.mxu0 0.0
    %2249 = vmatpush1.xpose.msra.mxu0 0.0
    %2250 = vmatprep.subr.mxu0 0.0
    %2251 = vmatpush1.xpose.msra.mxu0 0.0
    %2252 = vmatprep.subr.mxu0 0.0
    %2253 = vmatpush1.xpose.msra.mxu0 0.0
    %2254 = vmatprep.subr.mxu0 0.0
    %2255 = vmatpush1.xpose.msra.mxu0 0.0
    %2256 = vmatprep.subr.mxu0 0.0
    %2257 = vmatpush1.xpose.msra.mxu0 %v2226
    %2258 = vmatprep.subr.mxu0 0.0
    %2259 = vmatpush1.xpose.msra.mxu0 %v2224
    %2260 = vmatprep.subr.mxu0 0.0
    %2261 = vmatpush2.xpose.msra.mxu0 0.0
    %2262 = vmatprep.subr.mxu0 0.0
    %2263 = vmatpush2.xpose.msra.mxu0 0.0
    %2264 = vmatprep.subr.mxu0 0.0
    %2265 = vmatpush2.xpose.msra.mxu0 0.0
    %2266 = vmatprep.subr.mxu0 0.0
    %2267 = vmatpush2.xpose.msra.mxu0 0.0
    %2268 = vmatprep.subr.mxu0 0.0
    %2269 = vmatpush2.xpose.msra.mxu0 0.0
    %2270 = vmatprep.subr.mxu0 0.0
    %2271 = vmatpush2.xpose.msra.mxu0 0.0
    %2272 = vmatprep.subr.mxu0 0.0
    %2273 = vmatpush2.xpose.msra.mxu0 0.0
    %2274 = vmatprep.subr.mxu0 0.0
    %2275 = vmatpush2.xpose.msra.mxu0 0.0
    %2276 = vmatprep.subr.mxu0 0.0
    %2277 = vmatpush2.xpose.msra.mxu0 0.0
    %2278 = vmatprep.subr.mxu0 0.0
    %2279 = vmatpush2.xpose.msra.mxu0 0.0
    %2280 = vmatprep.subr.mxu0 0.0
    %2281 = vmatpush2.xpose.msra.mxu0 0.0
    %2282 = vmatprep.subr.mxu0 0.0
    %2283 = vmatpush2.xpose.msra.mxu0 0.0
    %2284 = vmatprep.subr.mxu0 0.0
    %2285 = vmatpush2.xpose.msra.mxu0 0.0
    %2286 = vmatprep.subr.mxu0 0.0
    %2287 = vmatpush2.xpose.msra.mxu0 0.0
    %2288 = vmatprep.subr.mxu0 0.0
    %2289 = vmatpush2.xpose.msra.mxu0 0.0
    %2290 = vmatprep.subr.mxu0 0.0
    %2291 = vmatpush2.xpose.msra.mxu0 0.0
    %2292 = vmatprep.mubr.f32.mxu0 0.0
    %2293 = vmatmul.mubr.f32.gmra.mxu0 %v2220
    %v2294 = vpop.f32.mrf.mxu0
    %v2295 = vadd.f32 0.0, %v2294
    %v2296 = vpop.f32.mrf.mxu0
    %2297 = vmatprep.mubr.f32.mxu0 0.0
    %2298 = vmatmul.mubr.f32.gmra.mxu0 %v2222
    %v2299 = vpop.f32.mrf.mxu0
    %v2300 = vadd.f32 0.0, %v2299
    %v2301 = vpop.f32.mrf.mxu0
    %2302 = vdwg.mxu0
    %v2303 = vmul.f32 %v2295, 0.35355338
    %v2304 = vmul.f32 %v2300, 0.35355338
    %v2305 = vadd.f32 %v2303, %v184
    %v2306 = vadd.f32 %v2304, %v185
    %v2307 = vsel %vm423, %v2305, -inf
    %2308 = vmax.xlane.f32.xlu0 %v2307
    %v2309 = vpop.xlane.xlu0 %2308
    %v2310 = vsel %vm423, %v2306, -inf
    %2311 = vmax.xlane.f32.xlu0 %v2310
    %v2312 = vpop.xlane.xlu0 %2311
    %v2313 = vsub.f32 %v2305, %v2309
    %v2314 = vsub.f32 %v2306, %v2312
    %v2315 = vmul.f32 %v2313, 1.442695
    %v2316 = vpow.pop %v2315
    %v2317 = vmul.f32 %v2314, 1.442695
    %v2318 = vpow.pop %v2317
    %v2319 = vsel %vm423, %v2316, 0.0
    %2320 = vadd.xlane.f32.xlu0 %v2319
    %v2321 = vpop.xlane.xlu0 %2320
    %v2322 = vsel %vm423, %v2318, 0.0
    %2323 = vadd.xlane.f32.xlu0 %v2322
    %v2324 = vpop.xlane.xlu0 %2323
    %v2325 = vrcp.pop %v2321
    %v2326 = vmul.f32 %v2316, %v2325
    %v2327 = vrcp.pop %v2324
    %v2328 = vmul.f32 %v2318, %v2327
    %2329 = vrot.lane.b32.xlu0 %v1906, 56
    %v2330 = vpop.permute.xlu0 %2329
    %2331 = vrot.lane.b32.xlu0 %v1911, 56
    %v2332 = vpop.permute.xlu0 %2331
    %v2336 = vsel %vm423, %v2326, 0
    %v2339 = vsel %vm423, %v2328, 0
    %2341 = vmatprep.subr.mxu0 0.0
    %2342 = vmatpush1.msra.mxu0 0.0
    %2343 = vmatprep.subr.mxu0 0.0
    %2344 = vmatpush1.msra.mxu0 0.0
    %2345 = vmatprep.subr.mxu0 0.0
    %2346 = vmatpush1.msra.mxu0 0.0
    %2347 = vmatprep.subr.mxu0 0.0
    %2348 = vmatpush1.msra.mxu0 0.0
    %2349 = vmatprep.subr.mxu0 0.0
    %2350 = vmatpush1.msra.mxu0 0.0
    %2351 = vmatprep.subr.mxu0 0.0
    %2352 = vmatpush1.msra.mxu0 0.0
    %2353 = vmatprep.subr.mxu0 0.0
    %2354 = vmatpush1.msra.mxu0 0.0
    %2355 = vmatprep.subr.mxu0 0.0
    %2356 = vmatpush1.msra.mxu0 0.0
    %2357 = vmatprep.subr.mxu0 0.0
    %2358 = vmatpush1.msra.mxu0 0.0
    %2359 = vmatprep.subr.mxu0 0.0
    %2360 = vmatpush1.msra.mxu0 0.0
    %2361 = vmatprep.subr.mxu0 0.0
    %2362 = vmatpush1.msra.mxu0 0.0
    %2363 = vmatprep.subr.mxu0 0.0
    %2364 = vmatpush1.msra.mxu0 0.0
    %2365 = vmatprep.subr.mxu0 0.0
    %2366 = vmatpush1.msra.mxu0 0.0
    %2367 = vmatprep.subr.mxu0 0.0
    %2368 = vmatpush1.msra.mxu0 0.0
    %2369 = vmatprep.subr.mxu0 0.0
    %2370 = vmatpush1.msra.mxu0 %v2332
    %2371 = vmatprep.subr.mxu0 0.0
    %2372 = vmatpush1.msra.mxu0 %v2330
    %2373 = vmatprep.subr.mxu0 0.0
    %2374 = vmatpush2.msra.mxu0 0.0
    %2375 = vmatprep.subr.mxu0 0.0
    %2376 = vmatpush2.msra.mxu0 0.0
    %2377 = vmatprep.subr.mxu0 0.0
    %2378 = vmatpush2.msra.mxu0 0.0
    %2379 = vmatprep.subr.mxu0 0.0
    %2380 = vmatpush2.msra.mxu0 0.0
    %2381 = vmatprep.subr.mxu0 0.0
    %2382 = vmatpush2.msra.mxu0 0.0
    %2383 = vmatprep.subr.mxu0 0.0
    %2384 = vmatpush2.msra.mxu0 0.0
    %2385 = vmatprep.subr.mxu0 0.0
    %2386 = vmatpush2.msra.mxu0 0.0
    %2387 = vmatprep.subr.mxu0 0.0
    %2388 = vmatpush2.msra.mxu0 0.0
    %2389 = vmatprep.subr.mxu0 0.0
    %2390 = vmatpush2.msra.mxu0 0.0
    %2391 = vmatprep.subr.mxu0 0.0
    %2392 = vmatpush2.msra.mxu0 0.0
    %2393 = vmatprep.subr.mxu0 0.0
    %2394 = vmatpush2.msra.mxu0 0.0
    %2395 = vmatprep.subr.mxu0 0.0
    %2396 = vmatpush2.msra.mxu0 0.0
    %2397 = vmatprep.subr.mxu0 0.0
    %2398 = vmatpush2.msra.mxu0 0.0
    %2399 = vmatprep.subr.mxu0 0.0
    %2400 = vmatpush2.msra.mxu0 0.0
    %2401 = vmatprep.subr.mxu0 0.0
    %2402 = vmatpush2.msra.mxu0 0.0
    %2403 = vmatprep.subr.mxu0 0.0
    %2404 = vmatpush2.msra.mxu0 0.0
    %2405 = vmatprep.mubr.f32.mxu0 0.0
    %2406 = vmatmul.mubr.f32.gmra.mxu0 %v2336
    %v2407 = vpop.f32.mrf.mxu0
    %v2408 = vadd.f32 0.0, %v2407
    %v2409 = vpop.f32.mrf.mxu0
    %2410 = vmatprep.mubr.f32.mxu0 0.0
    %2411 = vmatmul.mubr.f32.gmra.mxu0 %v2339
    %v2412 = vpop.f32.mrf.mxu0
    %v2413 = vadd.f32 0.0, %v2412
    %v2414 = vpop.f32.mrf.mxu0
    %2415 = vdwg.mxu0
    %v2417 = vsel %vm335, %v2408, 0
    %v2420 = vsel %vm335, %v2413, 0
    %2422 = vmatprep.subr.mxu0 0.0
    %2423 = vmatpush1.msra.mxu0 0.0
    %2424 = vmatprep.subr.mxu0 0.0
    %2425 = vmatpush1.msra.mxu0 0.0
    %2426 = vmatprep.subr.mxu0 0.0
    %2427 = vmatpush1.msra.mxu0 0.0
    %2428 = vmatprep.subr.mxu0 0.0
    %2429 = vmatpush1.msra.mxu0 0.0
    %2430 = vmatprep.subr.mxu0 0.0
    %2431 = vmatpush1.msra.mxu0 0.0
    %2432 = vmatprep.subr.mxu0 0.0
    %2433 = vmatpush1.msra.mxu0 0.0
    %2434 = vmatprep.subr.mxu0 0.0
    %2435 = vmatpush1.msra.mxu0 0.0
    %2436 = vmatprep.subr.mxu0 0.0
    %2437 = vmatpush1.msra.mxu0 0.0
    %2438 = vmatprep.subr.mxu0 0.0
    %2439 = vmatpush1.msra.mxu0 0.0
    %2440 = vmatprep.subr.mxu0 0.0
    %2441 = vmatpush1.msra.mxu0 0.0
    %2442 = vmatprep.subr.mxu0 0.0
    %2443 = vmatpush1.msra.mxu0 0.0
    %2444 = vmatprep.subr.mxu0 0.0
    %2445 = vmatpush1.msra.mxu0 0.0
    %2446 = vmatprep.subr.mxu0 0.0
    %2447 = vmatpush1.msra.mxu0 0.0
    %2448 = vmatprep.subr.mxu0 0.0
    %2449 = vmatpush1.msra.mxu0 0.0
    %2450 = vmatprep.subr.mxu0 0.0
    %2451 = vmatpush1.msra.mxu0 0.0
    %2452 = vmatprep.subr.mxu0 0.0
    %2453 = vmatpush1.msra.mxu0 %v1916
    %2454 = vmatprep.subr.mxu0 0.0
    %2455 = vmatpush2.msra.mxu0 0.0
    %2456 = vmatprep.subr.mxu0 0.0
    %2457 = vmatpush2.msra.mxu0 0.0
    %2458 = vmatprep.subr.mxu0 0.0
    %2459 = vmatpush2.msra.mxu0 0.0
    %2460 = vmatprep.subr.mxu0 0.0
    %2461 = vmatpush2.msra.mxu0 0.0
    %2462 = vmatprep.subr.mxu0 0.0
    %2463 = vmatpush2.msra.mxu0 0.0
    %2464 = vmatprep.subr.mxu0 0.0
    %2465 = vmatpush2.msra.mxu0 0.0
    %2466 = vmatprep.subr.mxu0 0.0
    %2467 = vmatpush2.msra.mxu0 0.0
    %2468 = vmatprep.subr.mxu0 0.0
    %2469 = vmatpush2.msra.mxu0 0.0
    %2470 = vmatprep.subr.mxu0 0.0
    %2471 = vmatpush2.msra.mxu0 0.0
    %2472 = vmatprep.subr.mxu0 0.0
    %2473 = vmatpush2.msra.mxu0 0.0
    %2474 = vmatprep.subr.mxu0 0.0
    %2475 = vmatpush2.msra.mxu0 0.0
    %2476 = vmatprep.subr.mxu0 0.0
    %2477 = vmatpush2.msra.mxu0 0.0
    %2478 = vmatprep.subr.mxu0 0.0
    %2479 = vmatpush2.msra.mxu0 0.0
    %2480 = vmatprep.subr.mxu0 0.0
    %2481 = vmatpush2.msra.mxu0 0.0
    %2482 = vmatprep.subr.mxu0 0.0
    %2483 = vmatpush2.msra.mxu0 0.0
    %2484 = vmatprep.subr.mxu0 0.0
    %2485 = vmatpush2.msra.mxu0 0.0
    %2486 = vmatprep.mubr.f32.mxu0 0.0
    %2487 = vmatmul.mubr.f32.gmra.mxu0 %v2417
    %v2488 = vpop.f32.mrf.mxu0
    %v2489 = vadd.f32 0.0, %v2488
    %v2490 = vpop.f32.mrf.mxu0
    %2491 = vmatprep.mubr.f32.mxu0 0.0
    %2492 = vmatmul.mubr.f32.gmra.mxu0 %v2420
    %v2493 = vpop.f32.mrf.mxu0
    %v2494 = vadd.f32 0.0, %v2493
    %v2495 = vpop.f32.mrf.mxu0
    %2496 = vdwg.mxu0
    %v2497 = vadd.f32 %v2210, %v2489
    %v2498 = vadd.f32 %v2211, %v2494
    %2499 = vrot.lane.b32.xlu0 %v1906, 112
    %v2500 = vpop.permute.xlu0 %2499
    %2501 = vrot.lane.b32.xlu0 %v1911, 112
    %v2502 = vpop.permute.xlu0 %2501
    %2503 = vrot.lane.b32.xlu0 %v1906, 80
    %v2504 = vpop.permute.xlu0 %2503
    %2505 = vrot.lane.b32.xlu0 %v1911, 80
    %v2506 = vpop.permute.xlu0 %2505
    %v2507 = vsel %vm335, %v2500, 0
    %v2509 = vsel %vm335, %v2502, 0
    %v2511 = vsel %vm335, %v2504, 0
    %v2513 = vsel %vm335, %v2506, 0
    %2515 = vmatprep.subr.mxu0 0.0
    %2516 = vmatpush1.xpose.msra.mxu0 0.0
    %2517 = vmatprep.subr.mxu0 0.0
    %2518 = vmatpush1.xpose.msra.mxu0 0.0
    %2519 = vmatprep.subr.mxu0 0.0
    %2520 = vmatpush1.xpose.msra.mxu0 0.0
    %2521 = vmatprep.subr.mxu0 0.0
    %2522 = vmatpush1.xpose.msra.mxu0 0.0
    %2523 = vmatprep.subr.mxu0 0.0
    %2524 = vmatpush1.xpose.msra.mxu0 0.0
    %2525 = vmatprep.subr.mxu0 0.0
    %2526 = vmatpush1.xpose.msra.mxu0 0.0
    %2527 = vmatprep.subr.mxu0 0.0
    %2528 = vmatpush1.xpose.msra.mxu0 0.0
    %2529 = vmatprep.subr.mxu0 0.0
    %2530 = vmatpush1.xpose.msra.mxu0 0.0
    %2531 = vmatprep.subr.mxu0 0.0
    %2532 = vmatpush1.xpose.msra.mxu0 0.0
    %2533 = vmatprep.subr.mxu0 0.0
    %2534 = vmatpush1.xpose.msra.mxu0 0.0
    %2535 = vmatprep.subr.mxu0 0.0
    %2536 = vmatpush1.xpose.msra.mxu0 0.0
    %2537 = vmatprep.subr.mxu0 0.0
    %2538 = vmatpush1.xpose.msra.mxu0 0.0
    %2539 = vmatprep.subr.mxu0 0.0
    %2540 = vmatpush1.xpose.msra.mxu0 0.0
    %2541 = vmatprep.subr.mxu0 0.0
    %2542 = vmatpush1.xpose.msra.mxu0 0.0
    %2543 = vmatprep.subr.mxu0 0.0
    %2544 = vmatpush1.xpose.msra.mxu0 %v2513
    %2545 = vmatprep.subr.mxu0 0.0
    %2546 = vmatpush1.xpose.msra.mxu0 %v2511
    %2547 = vmatprep.subr.mxu0 0.0
    %2548 = vmatpush2.xpose.msra.mxu0 0.0
    %2549 = vmatprep.subr.mxu0 0.0
    %2550 = vmatpush2.xpose.msra.mxu0 0.0
    %2551 = vmatprep.subr.mxu0 0.0
    %2552 = vmatpush2.xpose.msra.mxu0 0.0
    %2553 = vmatprep.subr.mxu0 0.0
    %2554 = vmatpush2.xpose.msra.mxu0 0.0
    %2555 = vmatprep.subr.mxu0 0.0
    %2556 = vmatpush2.xpose.msra.mxu0 0.0
    %2557 = vmatprep.subr.mxu0 0.0
    %2558 = vmatpush2.xpose.msra.mxu0 0.0
    %2559 = vmatprep.subr.mxu0 0.0
    %2560 = vmatpush2.xpose.msra.mxu0 0.0
    %2561 = vmatprep.subr.mxu0 0.0
    %2562 = vmatpush2.xpose.msra.mxu0 0.0
    %2563 = vmatprep.subr.mxu0 0.0
    %2564 = vmatpush2.xpose.msra.mxu0 0.0
    %2565 = vmatprep.subr.mxu0 0.0
    %2566 = vmatpush2.xpose.msra.mxu0 0.0
    %2567 = vmatprep.subr.mxu0 0.0
    %2568 = vmatpush2.xpose.msra.mxu0 0.0
    %2569 = vmatprep.subr.mxu0 0.0
    %2570 = vmatpush2.xpose.msra.mxu0 0.0
    %2571 = vmatprep.subr.mxu0 0.0
    %2572 = vmatpush2.xpose.msra.mxu0 0.0
    %2573 = vmatprep.subr.mxu0 0.0
    %2574 = vmatpush2.xpose.msra.mxu0 0.0
    %2575 = vmatprep.subr.mxu0 0.0
    %2576 = vmatpush2.xpose.msra.mxu0 0.0
    %2577 = vmatprep.subr.mxu0 0.0
    %2578 = vmatpush2.xpose.msra.mxu0 0.0
    %2579 = vmatprep.mubr.f32.mxu0 0.0
    %2580 = vmatmul.mubr.f32.gmra.mxu0 %v2507
    %v2581 = vpop.f32.mrf.mxu0
    %v2582 = vadd.f32 0.0, %v2581
    %v2583 = vpop.f32.mrf.mxu0
    %2584 = vmatprep.mubr.f32.mxu0 0.0
    %2585 = vmatmul.mubr.f32.gmra.mxu0 %v2509
    %v2586 = vpop.f32.mrf.mxu0
    %v2587 = vadd.f32 0.0, %v2586
    %v2588 = vpop.f32.mrf.mxu0
    %2589 = vdwg.mxu0
    %v2590 = vmul.f32 %v2582, 0.35355338
    %v2591 = vmul.f32 %v2587, 0.35355338
    %v2592 = vadd.f32 %v2590, %v184
    %v2593 = vadd.f32 %v2591, %v185
    %v2594 = vsel %vm423, %v2592, -inf
    %2595 = vmax.xlane.f32.xlu0 %v2594
    %v2596 = vpop.xlane.xlu0 %2595
    %v2597 = vsel %vm423, %v2593, -inf
    %2598 = vmax.xlane.f32.xlu0 %v2597
    %v2599 = vpop.xlane.xlu0 %2598
    %v2600 = vsub.f32 %v2592, %v2596
    %v2601 = vsub.f32 %v2593, %v2599
    %v2602 = vmul.f32 %v2600, 1.442695
    %v2603 = vpow.pop %v2602
    %v2604 = vmul.f32 %v2601, 1.442695
    %v2605 = vpow.pop %v2604
    %v2606 = vsel %vm423, %v2603, 0.0
    %2607 = vadd.xlane.f32.xlu0 %v2606
    %v2608 = vpop.xlane.xlu0 %2607
    %v2609 = vsel %vm423, %v2605, 0.0
    %2610 = vadd.xlane.f32.xlu0 %v2609
    %v2611 = vpop.xlane.xlu0 %2610
    %v2612 = vrcp.pop %v2608
    %v2613 = vmul.f32 %v2603, %v2612
    %v2614 = vrcp.pop %v2611
    %v2615 = vmul.f32 %v2605, %v2614
    %2616 = vrot.lane.b32.xlu0 %v1906, 48
    %v2617 = vpop.permute.xlu0 %2616
    %2618 = vrot.lane.b32.xlu0 %v1911, 48
    %v2619 = vpop.permute.xlu0 %2618
    %v2623 = vsel %vm423, %v2613, 0
    %v2626 = vsel %vm423, %v2615, 0
    %2628 = vmatprep.subr.mxu0 0.0
    %2629 = vmatpush1.msra.mxu0 0.0
    %2630 = vmatprep.subr.mxu0 0.0
    %2631 = vmatpush1.msra.mxu0 0.0
    %2632 = vmatprep.subr.mxu0 0.0
    %2633 = vmatpush1.msra.mxu0 0.0
    %2634 = vmatprep.subr.mxu0 0.0
    %2635 = vmatpush1.msra.mxu0 0.0
    %2636 = vmatprep.subr.mxu0 0.0
    %2637 = vmatpush1.msra.mxu0 0.0
    %2638 = vmatprep.subr.mxu0 0.0
    %2639 = vmatpush1.msra.mxu0 0.0
    %2640 = vmatprep.subr.mxu0 0.0
    %2641 = vmatpush1.msra.mxu0 0.0
    %2642 = vmatprep.subr.mxu0 0.0
    %2643 = vmatpush1.msra.mxu0 0.0
    %2644 = vmatprep.subr.mxu0 0.0
    %2645 = vmatpush1.msra.mxu0 0.0
    %2646 = vmatprep.subr.mxu0 0.0
    %2647 = vmatpush1.msra.mxu0 0.0
    %2648 = vmatprep.subr.mxu0 0.0
    %2649 = vmatpush1.msra.mxu0 0.0
    %2650 = vmatprep.subr.mxu0 0.0
    %2651 = vmatpush1.msra.mxu0 0.0
    %2652 = vmatprep.subr.mxu0 0.0
    %2653 = vmatpush1.msra.mxu0 0.0
    %2654 = vmatprep.subr.mxu0 0.0
    %2655 = vmatpush1.msra.mxu0 0.0
    %2656 = vmatprep.subr.mxu0 0.0
    %2657 = vmatpush1.msra.mxu0 %v2619
    %2658 = vmatprep.subr.mxu0 0.0
    %2659 = vmatpush1.msra.mxu0 %v2617
    %2660 = vmatprep.subr.mxu0 0.0
    %2661 = vmatpush2.msra.mxu0 0.0
    %2662 = vmatprep.subr.mxu0 0.0
    %2663 = vmatpush2.msra.mxu0 0.0
    %2664 = vmatprep.subr.mxu0 0.0
    %2665 = vmatpush2.msra.mxu0 0.0
    %2666 = vmatprep.subr.mxu0 0.0
    %2667 = vmatpush2.msra.mxu0 0.0
    %2668 = vmatprep.subr.mxu0 0.0
    %2669 = vmatpush2.msra.mxu0 0.0
    %2670 = vmatprep.subr.mxu0 0.0
    %2671 = vmatpush2.msra.mxu0 0.0
    %2672 = vmatprep.subr.mxu0 0.0
    %2673 = vmatpush2.msra.mxu0 0.0
    %2674 = vmatprep.subr.mxu0 0.0
    %2675 = vmatpush2.msra.mxu0 0.0
    %2676 = vmatprep.subr.mxu0 0.0
    %2677 = vmatpush2.msra.mxu0 0.0
    %2678 = vmatprep.subr.mxu0 0.0
    %2679 = vmatpush2.msra.mxu0 0.0
    %2680 = vmatprep.subr.mxu0 0.0
    %2681 = vmatpush2.msra.mxu0 0.0
    %2682 = vmatprep.subr.mxu0 0.0
    %2683 = vmatpush2.msra.mxu0 0.0
    %2684 = vmatprep.subr.mxu0 0.0
    %2685 = vmatpush2.msra.mxu0 0.0
    %2686 = vmatprep.subr.mxu0 0.0
    %2687 = vmatpush2.msra.mxu0 0.0
    %2688 = vmatprep.subr.mxu0 0.0
    %2689 = vmatpush2.msra.mxu0 0.0
    %2690 = vmatprep.subr.mxu0 0.0
    %2691 = vmatpush2.msra.mxu0 0.0
    %2692 = vmatprep.mubr.f32.mxu0 0.0
    %2693 = vmatmul.mubr.f32.gmra.mxu0 %v2623
    %v2694 = vpop.f32.mrf.mxu0
    %v2695 = vadd.f32 0.0, %v2694
    %v2696 = vpop.f32.mrf.mxu0
    %2697 = vmatprep.mubr.f32.mxu0 0.0
    %2698 = vmatmul.mubr.f32.gmra.mxu0 %v2626
    %v2699 = vpop.f32.mrf.mxu0
    %v2700 = vadd.f32 0.0, %v2699
    %v2701 = vpop.f32.mrf.mxu0
    %2702 = vdwg.mxu0
    %v2704 = vsel %vm335, %v2695, 0
    %v2707 = vsel %vm335, %v2700, 0
    %2709 = vmatprep.subr.mxu0 0.0
    %2710 = vmatpush1.msra.mxu0 0.0
    %2711 = vmatprep.subr.mxu0 0.0
    %2712 = vmatpush1.msra.mxu0 0.0
    %2713 = vmatprep.subr.mxu0 0.0
    %2714 = vmatpush1.msra.mxu0 0.0
    %2715 = vmatprep.subr.mxu0 0.0
    %2716 = vmatpush1.msra.mxu0 0.0
    %2717 = vmatprep.subr.mxu0 0.0
    %2718 = vmatpush1.msra.mxu0 0.0
    %2719 = vmatprep.subr.mxu0 0.0
    %2720 = vmatpush1.msra.mxu0 0.0
    %2721 = vmatprep.subr.mxu0 0.0
    %2722 = vmatpush1.msra.mxu0 0.0
    %2723 = vmatprep.subr.mxu0 0.0
    %2724 = vmatpush1.msra.mxu0 0.0
    %2725 = vmatprep.subr.mxu0 0.0
    %2726 = vmatpush1.msra.mxu0 0.0
    %2727 = vmatprep.subr.mxu0 0.0
    %2728 = vmatpush1.msra.mxu0 0.0
    %2729 = vmatprep.subr.mxu0 0.0
    %2730 = vmatpush1.msra.mxu0 0.0
    %2731 = vmatprep.subr.mxu0 0.0
    %2732 = vmatpush1.msra.mxu0 0.0
    %2733 = vmatprep.subr.mxu0 0.0
    %2734 = vmatpush1.msra.mxu0 0.0
    %2735 = vmatprep.subr.mxu0 0.0
    %2736 = vmatpush1.msra.mxu0 0.0
    %2737 = vmatprep.subr.mxu0 0.0
    %2738 = vmatpush1.msra.mxu0 0.0
    %2739 = vmatprep.subr.mxu0 0.0
    %2740 = vmatpush1.msra.mxu0 %v1917
    %2741 = vmatprep.subr.mxu0 0.0
    %2742 = vmatpush2.msra.mxu0 0.0
    %2743 = vmatprep.subr.mxu0 0.0
    %2744 = vmatpush2.msra.mxu0 0.0
    %2745 = vmatprep.subr.mxu0 0.0
    %2746 = vmatpush2.msra.mxu0 0.0
    %2747 = vmatprep.subr.mxu0 0.0
    %2748 = vmatpush2.msra.mxu0 0.0
    %2749 = vmatprep.subr.mxu0 0.0
    %2750 = vmatpush2.msra.mxu0 0.0
    %2751 = vmatprep.subr.mxu0 0.0
    %2752 = vmatpush2.msra.mxu0 0.0
    %2753 = vmatprep.subr.mxu0 0.0
    %2754 = vmatpush2.msra.mxu0 0.0
    %2755 = vmatprep.subr.mxu0 0.0
    %2756 = vmatpush2.msra.mxu0 0.0
    %2757 = vmatprep.subr.mxu0 0.0
    %2758 = vmatpush2.msra.mxu0 0.0
    %2759 = vmatprep.subr.mxu0 0.0
    %2760 = vmatpush2.msra.mxu0 0.0
    %2761 = vmatprep.subr.mxu0 0.0
    %2762 = vmatpush2.msra.mxu0 0.0
    %2763 = vmatprep.subr.mxu0 0.0
    %2764 = vmatpush2.msra.mxu0 0.0
    %2765 = vmatprep.subr.mxu0 0.0
    %2766 = vmatpush2.msra.mxu0 0.0
    %2767 = vmatprep.subr.mxu0 0.0
    %2768 = vmatpush2.msra.mxu0 0.0
    %2769 = vmatprep.subr.mxu0 0.0
    %2770 = vmatpush2.msra.mxu0 0.0
    %2771 = vmatprep.subr.mxu0 0.0
    %2772 = vmatpush2.msra.mxu0 0.0
    %2773 = vmatprep.mubr.f32.mxu0 0.0
    %2774 = vmatmul.mubr.f32.gmra.mxu0 %v2704
    %v2775 = vpop.f32.mrf.mxu0
    %v2776 = vadd.f32 0.0, %v2775
    %v2777 = vpop.f32.mrf.mxu0
    %2778 = vmatprep.mubr.f32.mxu0 0.0
    %2779 = vmatmul.mubr.f32.gmra.mxu0 %v2707
    %v2780 = vpop.f32.mrf.mxu0
    %v2781 = vadd.f32 0.0, %v2780
    %v2782 = vpop.f32.mrf.mxu0
    %2783 = vdwg.mxu0
    %v2784 = vadd.f32 %v2497, %v2776
    %v2785 = vadd.f32 %v2498, %v2781
    %2786 = vrot.lane.b32.xlu0 %v1906, 104
    %v2787 = vpop.permute.xlu0 %2786
    %2788 = vrot.lane.b32.xlu0 %v1911, 104
    %v2789 = vpop.permute.xlu0 %2788
    %2790 = vrot.lane.b32.xlu0 %v1906, 72
    %v2791 = vpop.permute.xlu0 %2790
    %2792 = vrot.lane.b32.xlu0 %v1911, 72
    %v2793 = vpop.permute.xlu0 %2792
    %v2794 = vsel %vm335, %v2787, 0
    %v2796 = vsel %vm335, %v2789, 0
    %v2798 = vsel %vm335, %v2791, 0
    %v2800 = vsel %vm335, %v2793, 0
    %2802 = vmatprep.subr.mxu0 0.0
    %2803 = vmatpush1.xpose.msra.mxu0 0.0
    %2804 = vmatprep.subr.mxu0 0.0
    %2805 = vmatpush1.xpose.msra.mxu0 0.0
    %2806 = vmatprep.subr.mxu0 0.0
    %2807 = vmatpush1.xpose.msra.mxu0 0.0
    %2808 = vmatprep.subr.mxu0 0.0
    %2809 = vmatpush1.xpose.msra.mxu0 0.0
    %2810 = vmatprep.subr.mxu0 0.0
    %2811 = vmatpush1.xpose.msra.mxu0 0.0
    %2812 = vmatprep.subr.mxu0 0.0
    %2813 = vmatpush1.xpose.msra.mxu0 0.0
    %2814 = vmatprep.subr.mxu0 0.0
    %2815 = vmatpush1.xpose.msra.mxu0 0.0
    %2816 = vmatprep.subr.mxu0 0.0
    %2817 = vmatpush1.xpose.msra.mxu0 0.0
    %2818 = vmatprep.subr.mxu0 0.0
    %2819 = vmatpush1.xpose.msra.mxu0 0.0
    %2820 = vmatprep.subr.mxu0 0.0
    %2821 = vmatpush1.xpose.msra.mxu0 0.0
    %2822 = vmatprep.subr.mxu0 0.0
    %2823 = vmatpush1.xpose.msra.mxu0 0.0
    %2824 = vmatprep.subr.mxu0 0.0
    %2825 = vmatpush1.xpose.msra.mxu0 0.0
    %2826 = vmatprep.subr.mxu0 0.0
    %2827 = vmatpush1.xpose.msra.mxu0 0.0
    %2828 = vmatprep.subr.mxu0 0.0
    %2829 = vmatpush1.xpose.msra.mxu0 0.0
    %2830 = vmatprep.subr.mxu0 0.0
    %2831 = vmatpush1.xpose.msra.mxu0 %v2800
    %2832 = vmatprep.subr.mxu0 0.0
    %2833 = vmatpush1.xpose.msra.mxu0 %v2798
    %2834 = vmatprep.subr.mxu0 0.0
    %2835 = vmatpush2.xpose.msra.mxu0 0.0
    %2836 = vmatprep.subr.mxu0 0.0
    %2837 = vmatpush2.xpose.msra.mxu0 0.0
    %2838 = vmatprep.subr.mxu0 0.0
    %2839 = vmatpush2.xpose.msra.mxu0 0.0
    %2840 = vmatprep.subr.mxu0 0.0
    %2841 = vmatpush2.xpose.msra.mxu0 0.0
    %2842 = vmatprep.subr.mxu0 0.0
    %2843 = vmatpush2.xpose.msra.mxu0 0.0
    %2844 = vmatprep.subr.mxu0 0.0
    %2845 = vmatpush2.xpose.msra.mxu0 0.0
    %2846 = vmatprep.subr.mxu0 0.0
    %2847 = vmatpush2.xpose.msra.mxu0 0.0
    %2848 = vmatprep.subr.mxu0 0.0
    %2849 = vmatpush2.xpose.msra.mxu0 0.0
    %2850 = vmatprep.subr.mxu0 0.0
    %2851 = vmatpush2.xpose.msra.mxu0 0.0
    %2852 = vmatprep.subr.mxu0 0.0
    %2853 = vmatpush2.xpose.msra.mxu0 0.0
    %2854 = vmatprep.subr.mxu0 0.0
    %2855 = vmatpush2.xpose.msra.mxu0 0.0
    %2856 = vmatprep.subr.mxu0 0.0
    %2857 = vmatpush2.xpose.msra.mxu0 0.0
    %2858 = vmatprep.subr.mxu0 0.0
    %2859 = vmatpush2.xpose.msra.mxu0 0.0
    %2860 = vmatprep.subr.mxu0 0.0
    %2861 = vmatpush2.xpose.msra.mxu0 0.0
    %2862 = vmatprep.subr.mxu0 0.0
    %2863 = vmatpush2.xpose.msra.mxu0 0.0
    %2864 = vmatprep.subr.mxu0 0.0
    %2865 = vmatpush2.xpose.msra.mxu0 0.0
    %2866 = vmatprep.mubr.f32.mxu0 0.0
    %2867 = vmatmul.mubr.f32.gmra.mxu0 %v2794
    %v2868 = vpop.f32.mrf.mxu0
    %v2869 = vadd.f32 0.0, %v2868
    %v2870 = vpop.f32.mrf.mxu0
    %2871 = vmatprep.mubr.f32.mxu0 0.0
    %2872 = vmatmul.mubr.f32.gmra.mxu0 %v2796
    %v2873 = vpop.f32.mrf.mxu0
    %v2874 = vadd.f32 0.0, %v2873
    %v2875 = vpop.f32.mrf.mxu0
    %2876 = vdwg.mxu0
    %v2877 = vmul.f32 %v2869, 0.35355338
    %v2878 = vmul.f32 %v2874, 0.35355338
    %v2879 = vadd.f32 %v2877, %v184
    %v2880 = vadd.f32 %v2878, %v185
    %v2881 = vsel %vm423, %v2879, -inf
    %2882 = vmax.xlane.f32.xlu0 %v2881
    %v2883 = vpop.xlane.xlu0 %2882
    %v2884 = vsel %vm423, %v2880, -inf
    %2885 = vmax.xlane.f32.xlu0 %v2884
    %v2886 = vpop.xlane.xlu0 %2885
    %v2887 = vsub.f32 %v2879, %v2883
    %v2888 = vsub.f32 %v2880, %v2886
    %v2889 = vmul.f32 %v2887, 1.442695
    %v2890 = vpow.pop %v2889
    %v2891 = vmul.f32 %v2888, 1.442695
    %v2892 = vpow.pop %v2891
    %v2893 = vsel %vm423, %v2890, 0.0
    %2894 = vadd.xlane.f32.xlu0 %v2893
    %v2895 = vpop.xlane.xlu0 %2894
    %v2896 = vsel %vm423, %v2892, 0.0
    %2897 = vadd.xlane.f32.xlu0 %v2896
    %v2898 = vpop.xlane.xlu0 %2897
    %v2899 = vrcp.pop %v2895
    %v2900 = vmul.f32 %v2890, %v2899
    %v2901 = vrcp.pop %v2898
    %v2902 = vmul.f32 %v2892, %v2901
    %2903 = vrot.lane.b32.xlu0 %v1906, 40
    %v2904 = vpop.permute.xlu0 %2903
    %2905 = vrot.lane.b32.xlu0 %v1911, 40
    %v2906 = vpop.permute.xlu0 %2905
    %v2910 = vsel %vm423, %v2900, 0
    %v2913 = vsel %vm423, %v2902, 0
    %2915 = vmatprep.subr.mxu0 0.0
    %2916 = vmatpush1.msra.mxu0 0.0
    %2917 = vmatprep.subr.mxu0 0.0
    %2918 = vmatpush1.msra.mxu0 0.0
    %2919 = vmatprep.subr.mxu0 0.0
    %2920 = vmatpush1.msra.mxu0 0.0
    %2921 = vmatprep.subr.mxu0 0.0
    %2922 = vmatpush1.msra.mxu0 0.0
    %2923 = vmatprep.subr.mxu0 0.0
    %2924 = vmatpush1.msra.mxu0 0.0
    %2925 = vmatprep.subr.mxu0 0.0
    %2926 = vmatpush1.msra.mxu0 0.0
    %2927 = vmatprep.subr.mxu0 0.0
    %2928 = vmatpush1.msra.mxu0 0.0
    %2929 = vmatprep.subr.mxu0 0.0
    %2930 = vmatpush1.msra.mxu0 0.0
    %2931 = vmatprep.subr.mxu0 0.0
    %2932 = vmatpush1.msra.mxu0 0.0
    %2933 = vmatprep.subr.mxu0 0.0
    %2934 = vmatpush1.msra.mxu0 0.0
    %2935 = vmatprep.subr.mxu0 0.0
    %2936 = vmatpush1.msra.mxu0 0.0
    %2937 = vmatprep.subr.mxu0 0.0
    %2938 = vmatpush1.msra.mxu0 0.0
    %2939 = vmatprep.subr.mxu0 0.0
    %2940 = vmatpush1.msra.mxu0 0.0
    %2941 = vmatprep.subr.mxu0 0.0
    %2942 = vmatpush1.msra.mxu0 0.0
    %2943 = vmatprep.subr.mxu0 0.0
    %2944 = vmatpush1.msra.mxu0 %v2906
    %2945 = vmatprep.subr.mxu0 0.0
    %2946 = vmatpush1.msra.mxu0 %v2904
    %2947 = vmatprep.subr.mxu0 0.0
    %2948 = vmatpush2.msra.mxu0 0.0
    %2949 = vmatprep.subr.mxu0 0.0
    %2950 = vmatpush2.msra.mxu0 0.0
    %2951 = vmatprep.subr.mxu0 0.0
    %2952 = vmatpush2.msra.mxu0 0.0
    %2953 = vmatprep.subr.mxu0 0.0
    %2954 = vmatpush2.msra.mxu0 0.0
    %2955 = vmatprep.subr.mxu0 0.0
    %2956 = vmatpush2.msra.mxu0 0.0
    %2957 = vmatprep.subr.mxu0 0.0
    %2958 = vmatpush2.msra.mxu0 0.0
    %2959 = vmatprep.subr.mxu0 0.0
    %2960 = vmatpush2.msra.mxu0 0.0
    %2961 = vmatprep.subr.mxu0 0.0
    %2962 = vmatpush2.msra.mxu0 0.0
    %2963 = vmatprep.subr.mxu0 0.0
    %2964 = vmatpush2.msra.mxu0 0.0
    %2965 = vmatprep.subr.mxu0 0.0
    %2966 = vmatpush2.msra.mxu0 0.0
    %2967 = vmatprep.subr.mxu0 0.0
    %2968 = vmatpush2.msra.mxu0 0.0
    %2969 = vmatprep.subr.mxu0 0.0
    %2970 = vmatpush2.msra.mxu0 0.0
    %2971 = vmatprep.subr.mxu0 0.0
    %2972 = vmatpush2.msra.mxu0 0.0
    %2973 = vmatprep.subr.mxu0 0.0
    %2974 = vmatpush2.msra.mxu0 0.0
    %2975 = vmatprep.subr.mxu0 0.0
    %2976 = vmatpush2.msra.mxu0 0.0
    %2977 = vmatprep.subr.mxu0 0.0
    %2978 = vmatpush2.msra.mxu0 0.0
    %2979 = vmatprep.mubr.f32.mxu0 0.0
    %2980 = vmatmul.mubr.f32.gmra.mxu0 %v2910
    %v2981 = vpop.f32.mrf.mxu0
    %v2982 = vadd.f32 0.0, %v2981
    %v2983 = vpop.f32.mrf.mxu0
    %2984 = vmatprep.mubr.f32.mxu0 0.0
    %2985 = vmatmul.mubr.f32.gmra.mxu0 %v2913
    %v2986 = vpop.f32.mrf.mxu0
    %v2987 = vadd.f32 0.0, %v2986
    %v2988 = vpop.f32.mrf.mxu0
    %2989 = vdwg.mxu0
    %v2991 = vsel %vm335, %v2982, 0
    %v2994 = vsel %vm335, %v2987, 0
    %2996 = vmatprep.subr.mxu0 0.0
    %2997 = vmatpush1.msra.mxu0 0.0
    %2998 = vmatprep.subr.mxu0 0.0
    %2999 = vmatpush1.msra.mxu0 0.0
    %3000 = vmatprep.subr.mxu0 0.0
    %3001 = vmatpush1.msra.mxu0 0.0
    %3002 = vmatprep.subr.mxu0 0.0
    %3003 = vmatpush1.msra.mxu0 0.0
    %3004 = vmatprep.subr.mxu0 0.0
    %3005 = vmatpush1.msra.mxu0 0.0
    %3006 = vmatprep.subr.mxu0 0.0
    %3007 = vmatpush1.msra.mxu0 0.0
    %3008 = vmatprep.subr.mxu0 0.0
    %3009 = vmatpush1.msra.mxu0 0.0
    %3010 = vmatprep.subr.mxu0 0.0
    %3011 = vmatpush1.msra.mxu0 0.0
    %3012 = vmatprep.subr.mxu0 0.0
    %3013 = vmatpush1.msra.mxu0 0.0
    %3014 = vmatprep.subr.mxu0 0.0
    %3015 = vmatpush1.msra.mxu0 0.0
    %3016 = vmatprep.subr.mxu0 0.0
    %3017 = vmatpush1.msra.mxu0 0.0
    %3018 = vmatprep.subr.mxu0 0.0
    %3019 = vmatpush1.msra.mxu0 0.0
    %3020 = vmatprep.subr.mxu0 0.0
    %3021 = vmatpush1.msra.mxu0 0.0
    %3022 = vmatprep.subr.mxu0 0.0
    %3023 = vmatpush1.msra.mxu0 0.0
    %3024 = vmatprep.subr.mxu0 0.0
    %3025 = vmatpush1.msra.mxu0 0.0
    %3026 = vmatprep.subr.mxu0 0.0
    %3027 = vmatpush1.msra.mxu0 %v1918
    %3028 = vmatprep.subr.mxu0 0.0
    %3029 = vmatpush2.msra.mxu0 0.0
    %3030 = vmatprep.subr.mxu0 0.0
    %3031 = vmatpush2.msra.mxu0 0.0
    %3032 = vmatprep.subr.mxu0 0.0
    %3033 = vmatpush2.msra.mxu0 0.0
    %3034 = vmatprep.subr.mxu0 0.0
    %3035 = vmatpush2.msra.mxu0 0.0
    %3036 = vmatprep.subr.mxu0 0.0
    %3037 = vmatpush2.msra.mxu0 0.0
    %3038 = vmatprep.subr.mxu0 0.0
    %3039 = vmatpush2.msra.mxu0 0.0
    %3040 = vmatprep.subr.mxu0 0.0
    %3041 = vmatpush2.msra.mxu0 0.0
    %3042 = vmatprep.subr.mxu0 0.0
    %3043 = vmatpush2.msra.mxu0 0.0
    %3044 = vmatprep.subr.mxu0 0.0
    %3045 = vmatpush2.msra.mxu0 0.0
    %3046 = vmatprep.subr.mxu0 0.0
    %3047 = vmatpush2.msra.mxu0 0.0
    %3048 = vmatprep.subr.mxu0 0.0
    %3049 = vmatpush2.msra.mxu0 0.0
    %3050 = vmatprep.subr.mxu0 0.0
    %3051 = vmatpush2.msra.mxu0 0.0
    %3052 = vmatprep.subr.mxu0 0.0
    %3053 = vmatpush2.msra.mxu0 0.0
    %3054 = vmatprep.subr.mxu0 0.0
    %3055 = vmatpush2.msra.mxu0 0.0
    %3056 = vmatprep.subr.mxu0 0.0
    %3057 = vmatpush2.msra.mxu0 0.0
    %3058 = vmatprep.subr.mxu0 0.0
    %3059 = vmatpush2.msra.mxu0 0.0
    %3060 = vmatprep.mubr.f32.mxu0 0.0
    %3061 = vmatmul.mubr.f32.gmra.mxu0 %v2991
    %v3062 = vpop.f32.mrf.mxu0
    %v3063 = vadd.f32 0.0, %v3062
    %v3064 = vpop.f32.mrf.mxu0
    %3065 = vmatprep.mubr.f32.mxu0 0.0
    %3066 = vmatmul.mubr.f32.gmra.mxu0 %v2994
    %v3067 = vpop.f32.mrf.mxu0
    %v3068 = vadd.f32 0.0, %v3067
    %v3069 = vpop.f32.mrf.mxu0
    %3070 = vdwg.mxu0
    %v3071 = vadd.f32 %v2784, %v3063
    %v3072 = vadd.f32 %v2785, %v3068
    %v3073 = vadd.f32 %v3071, %v1772
    %v3074 = vadd.f32 %v3072, %v1773
    %s3075 = scalar_lea.vmem %s11, 1
    %v3076 = vld [vmem:[%s3075] sm:$0x1]
    %s3077 = scalar_lea.vmem %s12, 1
    %v3078 = vld [vmem:[%s3077] sm:$0x1]
    %v3079 = vsel %vm188, %v3073, 0.0
    %3080 = vadd.xlane.f32.xlu0 %v3079
    %v3081 = vpop.xlane.xlu0 %3080
    %v3082 = vsel %vm188, %v3074, 0.0
    %3083 = vadd.xlane.f32.xlu0 %v3082
    %v3084 = vpop.xlane.xlu0 %3083
    %v3085 = vmul.f32 %v3081, %v195
    %v3086 = vmul.f32 %v3084, %v195
    %v3087 = vsub.f32 %v3073, %v3085
    %v3088 = vsub.f32 %v3074, %v3086
    %v3089 = vmul.f32 %v3087, %v3087
    %v3090 = vmul.f32 %v3088, %v3088
    %v3091 = vsel %vm188, %v3089, 0.0
    %3092 = vadd.xlane.f32.xlu0 %v3091
    %v3093 = vpop.xlane.xlu0 %3092
    %v3094 = vsel %vm188, %v3090, 0.0
    %3095 = vadd.xlane.f32.xlu0 %v3094
    %v3096 = vpop.xlane.xlu0 %3095
    %v3097 = vmul.f32 %v3093, %v195
    %v3098 = vmul.f32 %v3096, %v195
    %v3099 = vadd.f32 %v3097, 1e-05
    %v3100 = vadd.f32 %v3098, 1e-05
    %v3101 = vrsqrt.pop %v3099
    %v3102 = vrsqrt.pop %v3100
    %v3103 = vmul.f32 %v3087, %v3101
    %v3104 = vmul.f32 %v3088, %v3102
    %v3106 = vlaneseq
    %v3107 = vshrl.u32 %v3106, 7
    %v3108 = vsub.s32 0, %v3107
    %v3109 = vrot.slane %v3076, %v3108
    %v3111 = vmul.f32 %v3103, %v3109
    %v3112 = vmul.f32 %v3104, %v3109
    %v3114 = vlaneseq
    %v3115 = vshrl.u32 %v3114, 7
    %v3116 = vsub.s32 0, %v3115
    %v3117 = vrot.slane %v3078, %v3116
    %v3119 = vadd.f32 %v3111, %v3117
    %v3120 = vadd.f32 %v3112, %v3117
    %s3121 = scalar_lea.vmem %s13, 32
    %v3122 = vld [vmem:[%s3121] sm:$0xff]
    %v3123 = vld [vmem:[%s3121 + $0x8] sm:$0xff]
    %v3124 = vld [vmem:[%s3121 + $0x10] sm:$0xff]
    %v3125 = vld [vmem:[%s3121 + $0x18] sm:$0xff]
    %s3126 = scalar_lea.vmem %s14, 1
    %v3127 = vld [vmem:[%s3126] sm:$0x1]
    %v3129 = vlaneseq
    %v3130 = vshrl.u32 %v3129, 7
    %v3131 = vsub.s32 0, %v3130
    %v3132 = vrot.slane %v3127, %v3131
    %v3135 = vsel %vm188, %v3119, 0
    %v3138 = vsel %vm188, %v3120, 0
    %3140 = vmatprep.subr.mxu0 0.0
    %3141 = vmatpush1.msra.mxu0 0.0
    %3142 = vmatprep.subr.mxu0 0.0
    %3143 = vmatpush1.msra.mxu0 0.0
    %3144 = vmatprep.subr.mxu0 0.0
    %3145 = vmatpush1.msra.mxu0 0.0
    %3146 = vmatprep.subr.mxu0 0.0
    %3147 = vmatpush1.msra.mxu0 0.0
    %3148 = vmatprep.subr.mxu0 0.0
    %3149 = vmatpush1.msra.mxu0 0.0
    %3150 = vmatprep.subr.mxu0 0.0
    %3151 = vmatpush1.msra.mxu0 0.0
    %3152 = vmatprep.subr.mxu0 0.0
    %3153 = vmatpush1.msra.mxu0 0.0
    %3154 = vmatprep.subr.mxu0 0.0
    %3155 = vmatpush1.msra.mxu0 0.0
    %3156 = vmatprep.subr.mxu0 0.0
    %3157 = vmatpush1.msra.mxu0 0.0
    %3158 = vmatprep.subr.mxu0 0.0
    %3159 = vmatpush1.msra.mxu0 0.0
    %3160 = vmatprep.subr.mxu0 0.0
    %3161 = vmatpush1.msra.mxu0 0.0
    %3162 = vmatprep.subr.mxu0 0.0
    %3163 = vmatpush1.msra.mxu0 0.0
    %3164 = vmatprep.subr.mxu0 0.0
    %3165 = vmatpush1.msra.mxu0 %v3125
    %3166 = vmatprep.subr.mxu0 0.0
    %3167 = vmatpush1.msra.mxu0 %v3124
    %3168 = vmatprep.subr.mxu0 0.0
    %3169 = vmatpush1.msra.mxu0 %v3123
    %3170 = vmatprep.subr.mxu0 0.0
    %3171 = vmatpush1.msra.mxu0 %v3122
    %3172 = vmatprep.subr.mxu0 0.0
    %3173 = vmatpush2.msra.mxu0 0.0
    %3174 = vmatprep.subr.mxu0 0.0
    %3175 = vmatpush2.msra.mxu0 0.0
    %3176 = vmatprep.subr.mxu0 0.0
    %3177 = vmatpush2.msra.mxu0 0.0
    %3178 = vmatprep.subr.mxu0 0.0
    %3179 = vmatpush2.msra.mxu0 0.0
    %3180 = vmatprep.subr.mxu0 0.0
    %3181 = vmatpush2.msra.mxu0 0.0
    %3182 = vmatprep.subr.mxu0 0.0
    %3183 = vmatpush2.msra.mxu0 0.0
    %3184 = vmatprep.subr.mxu0 0.0
    %3185 = vmatpush2.msra.mxu0 0.0
    %3186 = vmatprep.subr.mxu0 0.0
    %3187 = vmatpush2.msra.mxu0 0.0
    %3188 = vmatprep.subr.mxu0 0.0
    %3189 = vmatpush2.msra.mxu0 0.0
    %3190 = vmatprep.subr.mxu0 0.0
    %3191 = vmatpush2.msra.mxu0 0.0
    %3192 = vmatprep.subr.mxu0 0.0
    %3193 = vmatpush2.msra.mxu0 0.0
    %3194 = vmatprep.subr.mxu0 0.0
    %3195 = vmatpush2.msra.mxu0 0.0
    %3196 = vmatprep.subr.mxu0 0.0
    %3197 = vmatpush2.msra.mxu0 0.0
    %3198 = vmatprep.subr.mxu0 0.0
    %3199 = vmatpush2.msra.mxu0 0.0
    %3200 = vmatprep.subr.mxu0 0.0
    %3201 = vmatpush2.msra.mxu0 0.0
    %3202 = vmatprep.subr.mxu0 0.0
    %3203 = vmatpush2.msra.mxu0 0.0
    %3204 = vmatprep.mubr.f32.mxu0 0.0
    %3205 = vmatmul.mubr.f32.gmra.mxu0 %v3135
    %v3206 = vpop.f32.mrf.mxu0
    %v3207 = vadd.f32 %v3132, %v3206
    %v3208 = vpop.f32.mrf.mxu0
    %3209 = vmatprep.mubr.f32.mxu0 0.0
    %3210 = vmatmul.mubr.f32.gmra.mxu0 %v3138
    %v3211 = vpop.f32.mrf.mxu0
    %v3212 = vadd.f32 %v3132, %v3211
    %v3213 = vpop.f32.mrf.mxu0
    %3214 = vdwg.mxu0
    %v3215 = vmul.f32 %v3207, 0.5
    %v3216 = vmul.f32 %v3212, 0.5
    %v3217 = vmul.f32 %v3207, 0.70710677
    %v3218 = vmul.f32 %v3212, 0.70710677
    %v3219 = vand.u32 2147483647, %v3217
    %v3220 = vand.u32 2147483647, %v3218
    %v3221 = vmul.f32 %v3219, 0.3275911
    %v3222 = vmul.f32 %v3220, 0.3275911
    %v3223 = vadd.f32 %v3221, 1.0
    %v3224 = vadd.f32 %v3222, 1.0
    %v3225 = vrcp.pop %v3223
    %v3226 = vmul.f32 1.0, %v3225
    %v3227 = vrcp.pop %v3224
    %v3228 = vmul.f32 1.0, %v3227
    %v3229 = vmul.f32 %v3226, 1.0614054
    %v3230 = vmul.f32 %v3228, 1.0614054
    %v3231 = vadd.f32 %v3229, -1.4531521
    %v3232 = vadd.f32 %v3230, -1.4531521
    %v3233 = vmul.f32 %v3231, %v3226
    %v3234 = vmul.f32 %v3232, %v3228
    %v3235 = vadd.f32 %v3233, 1.4214138
    %v3236 = vadd.f32 %v3234, 1.4214138
    %v3237 = vmul.f32 %v3235, %v3226
    %v3238 = vmul.f32 %v3236, %v3228
    %v3239 = vadd.f32 %v3237, -0.28449672
    %v3240 = vadd.f32 %v3238, -0.28449672
    %v3241 = vmul.f32 %v3239, %v3226
    %v3242 = vmul.f32 %v3240, %v3228
    %v3243 = vadd.f32 %v3241, 0.2548296
    %v3244 = vadd.f32 %v3242, 0.2548296
    %v3245 = vmul.f32 %v3243, %v3226
    %v3246 = vmul.f32 %v3244, %v3228
    %v3247 = vsub.f32 0.0, %v3219
    %v3248 = vsub.f32 0.0, %v3220
    %v3249 = vmul.f32 %v3247, %v3219
    %v3250 = vmul.f32 %v3248, %v3220
    %v3251 = vmul.f32 %v3249, 1.442695
    %v3252 = vpow.pop %v3251
    %v3253 = vmul.f32 %v3250, 1.442695
    %v3254 = vpow.pop %v3253
    %v3255 = vmul.f32 %v3245, %v3252
    %v3256 = vmul.f32 %v3246, %v3254
    %v3257 = vsub.f32 1.0, %v3255
    %v3258 = vsub.f32 1.0, %v3256
    %vm3259 = vcmp.ge.f32.partialorder %v3217, 0.0
    %vm3260 = vcmp.ge.f32.partialorder %v3218, 0.0
    %v3261 = vsub.f32 0.0, %v3257
    %v3262 = vsub.f32 0.0, %v3258
    %v3263 = vsel %vm3259, %v3257, %v3261
    %v3264 = vsel %vm3260, %v3258, %v3262
    %v3265 = vadd.f32 %v3263, 1.0
    %v3266 = vadd.f32 %v3264, 1.0
    %v3267 = vmul.f32 %v3215, %v3265
    %v3268 = vmul.f32 %v3216, %v3266
    %s3269 = scalar_lea.vmem %s15, 64
    %v3270 = vld [vmem:[%s3269] sm:$0xff]
    %v3271 = vld [vmem:[%s3269 + $0x8] sm:$0xff]
    %v3272 = vld [vmem:[%s3269 + $0x10] sm:$0xff]
    %v3273 = vld [vmem:[%s3269 + $0x18] sm:$0xff]
    %v3274 = vld [vmem:[%s3269 + $0x20] sm:$0xff]
    %v3275 = vld [vmem:[%s3269 + $0x28] sm:$0xff]
    %v3276 = vld [vmem:[%s3269 + $0x30] sm:$0xff]
    %v3277 = vld [vmem:[%s3269 + $0x38] sm:$0xff]
    %s3278 = scalar_lea.vmem %s16, 1
    %v3279 = vld [vmem:[%s3278] sm:$0x1]
    %v3281 = vlaneseq
    %v3282 = vshrl.u32 %v3281, 7
    %v3283 = vsub.s32 0, %v3282
    %v3284 = vrot.slane %v3279, %v3283
    %v3287 = vsel %vm1690, %v3267, 0
    %v3290 = vsel %vm1690, %v3268, 0
    %3292 = vmatprep.subr.mxu0 0.0
    %3293 = vmatpush1.msra.mxu0 0.0
    %3294 = vmatprep.subr.mxu0 0.0
    %3295 = vmatpush1.msra.mxu0 0.0
    %3296 = vmatprep.subr.mxu0 0.0
    %3297 = vmatpush1.msra.mxu0 0.0
    %3298 = vmatprep.subr.mxu0 0.0
    %3299 = vmatpush1.msra.mxu0 0.0
    %3300 = vmatprep.subr.mxu0 0.0
    %3301 = vmatpush1.msra.mxu0 0.0
    %3302 = vmatprep.subr.mxu0 0.0
    %3303 = vmatpush1.msra.mxu0 0.0
    %3304 = vmatprep.subr.mxu0 0.0
    %3305 = vmatpush1.msra.mxu0 0.0
    %3306 = vmatprep.subr.mxu0 0.0
    %3307 = vmatpush1.msra.mxu0 0.0
    %3308 = vmatprep.subr.mxu0 0.0
    %3309 = vmatpush1.msra.mxu0 %v3277
    %3310 = vmatprep.subr.mxu0 0.0
    %3311 = vmatpush1.msra.mxu0 %v3276
    %3312 = vmatprep.subr.mxu0 0.0
    %3313 = vmatpush1.msra.mxu0 %v3275
    %3314 = vmatprep.subr.mxu0 0.0
    %3315 = vmatpush1.msra.mxu0 %v3274
    %3316 = vmatprep.subr.mxu0 0.0
    %3317 = vmatpush1.msra.mxu0 %v3273
    %3318 = vmatprep.subr.mxu0 0.0
    %3319 = vmatpush1.msra.mxu0 %v3272
    %3320 = vmatprep.subr.mxu0 0.0
    %3321 = vmatpush1.msra.mxu0 %v3271
    %3322 = vmatprep.subr.mxu0 0.0
    %3323 = vmatpush1.msra.mxu0 %v3270
    %3324 = vmatprep.subr.mxu0 0.0
    %3325 = vmatpush2.msra.mxu0 0.0
    %3326 = vmatprep.subr.mxu0 0.0
    %3327 = vmatpush2.msra.mxu0 0.0
    %3328 = vmatprep.subr.mxu0 0.0
    %3329 = vmatpush2.msra.mxu0 0.0
    %3330 = vmatprep.subr.mxu0 0.0
    %3331 = vmatpush2.msra.mxu0 0.0
    %3332 = vmatprep.subr.mxu0 0.0
    %3333 = vmatpush2.msra.mxu0 0.0
    %3334 = vmatprep.subr.mxu0 0.0
    %3335 = vmatpush2.msra.mxu0 0.0
    %3336 = vmatprep.subr.mxu0 0.0
    %3337 = vmatpush2.msra.mxu0 0.0
    %3338 = vmatprep.subr.mxu0 0.0
    %3339 = vmatpush2.msra.mxu0 0.0
    %3340 = vmatprep.subr.mxu0 0.0
    %3341 = vmatpush2.msra.mxu0 0.0
    %3342 = vmatprep.subr.mxu0 0.0
    %3343 = vmatpush2.msra.mxu0 0.0
    %3344 = vmatprep.subr.mxu0 0.0
    %3345 = vmatpush2.msra.mxu0 0.0
    %3346 = vmatprep.subr.mxu0 0.0
    %3347 = vmatpush2.msra.mxu0 0.0
    %3348 = vmatprep.subr.mxu0 0.0
    %3349 = vmatpush2.msra.mxu0 0.0
    %3350 = vmatprep.subr.mxu0 0.0
    %3351 = vmatpush2.msra.mxu0 0.0
    %3352 = vmatprep.subr.mxu0 0.0
    %3353 = vmatpush2.msra.mxu0 0.0
    %3354 = vmatprep.subr.mxu0 0.0
    %3355 = vmatpush2.msra.mxu0 0.0
    %3356 = vmatprep.mubr.f32.mxu0 0.0
    %3357 = vmatmul.mubr.f32.gmra.mxu0 %v3287
    %v3358 = vpop.f32.mrf.mxu0
    %v3359 = vadd.f32 %v3284, %v3358
    %v3360 = vpop.f32.mrf.mxu0
    %3361 = vmatprep.mubr.f32.mxu0 0.0
    %3362 = vmatmul.mubr.f32.gmra.mxu0 %v3290
    %v3363 = vpop.f32.mrf.mxu0
    %v3364 = vadd.f32 %v3284, %v3363
    %v3365 = vpop.f32.mrf.mxu0
    %3366 = vdwg.mxu0
    %v3367 = vadd.f32 %v3359, %v3073
    %v3368 = vadd.f32 %v3364, %v3074
    %v3369 = vld [vmem:[%s3] sm:$0x3]
    %v3371 = vsel %vm423, %v3369, 0
    %3373 = vmatprep.subr.mxu0 0.0
    %3374 = vmatpush1.msra.mxu0 0.0
    %3375 = vmatprep.subr.mxu0 0.0
    %3376 = vmatpush1.msra.mxu0 0.0
    %3377 = vmatprep.subr.mxu0 0.0
    %3378 = vmatpush1.msra.mxu0 0.0
    %3379 = vmatprep.subr.mxu0 0.0
    %3380 = vmatpush1.msra.mxu0 0.0
    %3381 = vmatprep.subr.mxu0 0.0
    %3382 = vmatpush1.msra.mxu0 0.0
    %3383 = vmatprep.subr.mxu0 0.0
    %3384 = vmatpush1.msra.mxu0 0.0
    %3385 = vmatprep.subr.mxu0 0.0
    %3386 = vmatpush1.msra.mxu0 0.0
    %3387 = vmatprep.subr.mxu0 0.0
    %3388 = vmatpush1.msra.mxu0 0.0
    %3389 = vmatprep.subr.mxu0 0.0
    %3390 = vmatpush1.msra.mxu0 0.0
    %3391 = vmatprep.subr.mxu0 0.0
    %3392 = vmatpush1.msra.mxu0 0.0
    %3393 = vmatprep.subr.mxu0 0.0
    %3394 = vmatpush1.msra.mxu0 0.0
    %3395 = vmatprep.subr.mxu0 0.0
    %3396 = vmatpush1.msra.mxu0 0.0
    %3397 = vmatprep.subr.mxu0 0.0
    %3398 = vmatpush1.msra.mxu0 0.0
    %3399 = vmatprep.subr.mxu0 0.0
    %3400 = vmatpush1.msra.mxu0 0.0
    %3401 = vmatprep.subr.mxu0 0.0
    %3402 = vmatpush1.msra.mxu0 %v3368
    %3403 = vmatprep.subr.mxu0 0.0
    %3404 = vmatpush1.msra.mxu0 %v3367
    %3405 = vmatprep.subr.mxu0 0.0
    %3406 = vmatpush2.msra.mxu0 0.0
    %3407 = vmatprep.subr.mxu0 0.0
    %3408 = vmatpush2.msra.mxu0 0.0
    %3409 = vmatprep.subr.mxu0 0.0
    %3410 = vmatpush2.msra.mxu0 0.0
    %3411 = vmatprep.subr.mxu0 0.0
    %3412 = vmatpush2.msra.mxu0 0.0
    %3413 = vmatprep.subr.mxu0 0.0
    %3414 = vmatpush2.msra.mxu0 0.0
    %3415 = vmatprep.subr.mxu0 0.0
    %3416 = vmatpush2.msra.mxu0 0.0
    %3417 = vmatprep.subr.mxu0 0.0
    %3418 = vmatpush2.msra.mxu0 0.0
    %3419 = vmatprep.subr.mxu0 0.0
    %3420 = vmatpush2.msra.mxu0 0.0
    %3421 = vmatprep.subr.mxu0 0.0
    %3422 = vmatpush2.msra.mxu0 0.0
    %3423 = vmatprep.subr.mxu0 0.0
    %3424 = vmatpush2.msra.mxu0 0.0
    %3425 = vmatprep.subr.mxu0 0.0
    %3426 = vmatpush2.msra.mxu0 0.0
    %3427 = vmatprep.subr.mxu0 0.0
    %3428 = vmatpush2.msra.mxu0 0.0
    %3429 = vmatprep.subr.mxu0 0.0
    %3430 = vmatpush2.msra.mxu0 0.0
    %3431 = vmatprep.subr.mxu0 0.0
    %3432 = vmatpush2.msra.mxu0 0.0
    %3433 = vmatprep.subr.mxu0 0.0
    %3434 = vmatpush2.msra.mxu0 0.0
    %3435 = vmatprep.subr.mxu0 0.0
    %3436 = vmatpush2.msra.mxu0 0.0
    %3437 = vmatprep.mubr.f32.mxu0 0.0
    %3438 = vmatmul.mubr.f32.gmra.mxu0 %v3371
    %v3439 = vpop.f32.mrf.mxu0
    %v3440 = vadd.f32 0.0, %v3439
    %v3441 = vpop.f32.mrf.mxu0
    %3442 = vdwg.mxu0
    %v3443 = vld [vmem:[%s17] sm:$0x1]
    %v3444 = vld [vmem:[%s18] sm:$0x1]
    %vm3445 = vcmask 254976
    %v3446 = vsel %vm3445, %v3440, 0.0
    %3447 = vadd.xlane.f32.xlu0 %v3446
    %v3448 = vpop.xlane.xlu0 %3447
    %v3449 = vmul.f32 %v3448, %v195
    %v3450 = vsub.f32 %v3440, %v3449
    %v3451 = vmul.f32 %v3450, %v3450
    %v3452 = vsel %vm3445, %v3451, 0.0
    %3453 = vadd.xlane.f32.xlu0 %v3452
    %v3454 = vpop.xlane.xlu0 %3453
    %v3455 = vmul.f32 %v3454, %v195
    %v3456 = vadd.f32 %v3455, 1e-05
    %v3457 = vrsqrt.pop %v3456
    %v3458 = vmul.f32 %v3450, %v3457
    %v3460 = vlaneseq
    %v3461 = vshrl.u32 %v3460, 7
    %v3462 = vsub.s32 0, %v3461
    %v3463 = vrot.slane %v3443, %v3462
    %v3465 = vmul.f32 %v3458, %v3463
    %v3467 = vlaneseq
    %v3468 = vshrl.u32 %v3467, 7
    %v3469 = vsub.s32 0, %v3468
    %v3470 = vrot.slane %v3444, %v3469
    %v3472 = vadd.f32 %v3465, %v3470
    %v3473 = vld [vmem:[%s19] sm:$0xff]
    %v3474 = vld [vmem:[%s19 + $0x8] sm:$0xff]
    %v3475 = vld [vmem:[%s19 + $0x10] sm:$0xff]
    %v3476 = vld [vmem:[%s19 + $0x18] sm:$0xff]
    %v3477 = vld [vmem:[%s20] sm:$0x1]
    %v3479 = vlaneseq
    %v3480 = vshrl.u32 %v3479, 7
    %v3481 = vsub.s32 0, %v3480
    %v3482 = vrot.slane %v3477, %v3481
    %v3485 = vsel %vm188, %v3472, 0
    %3487 = vmatprep.subr.mxu0 0.0
    %3488 = vmatpush1.msra.mxu0 0.0
    %3489 = vmatprep.subr.mxu0 0.0
    %3490 = vmatpush1.msra.mxu0 0.0
    %3491 = vmatprep.subr.mxu0 0.0
    %3492 = vmatpush1.msra.mxu0 0.0
    %3493 = vmatprep.subr.mxu0 0.0
    %3494 = vmatpush1.msra.mxu0 0.0
    %3495 = vmatprep.subr.mxu0 0.0
    %3496 = vmatpush1.msra.mxu0 0.0
    %3497 = vmatprep.subr.mxu0 0.0
    %3498 = vmatpush1.msra.mxu0 0.0
    %3499 = vmatprep.subr.mxu0 0.0
    %3500 = vmatpush1.msra.mxu0 0.0
    %3501 = vmatprep.subr.mxu0 0.0
    %3502 = vmatpush1.msra.mxu0 0.0
    %3503 = vmatprep.subr.mxu0 0.0
    %3504 = vmatpush1.msra.mxu0 0.0
    %3505 = vmatprep.subr.mxu0 0.0
    %3506 = vmatpush1.msra.mxu0 0.0
    %3507 = vmatprep.subr.mxu0 0.0
    %3508 = vmatpush1.msra.mxu0 0.0
    %3509 = vmatprep.subr.mxu0 0.0
    %3510 = vmatpush1.msra.mxu0 0.0
    %3511 = vmatprep.subr.mxu0 0.0
    %3512 = vmatpush1.msra.mxu0 %v3476
    %3513 = vmatprep.subr.mxu0 0.0
    %3514 = vmatpush1.msra.mxu0 %v3475
    %3515 = vmatprep.subr.mxu0 0.0
    %3516 = vmatpush1.msra.mxu0 %v3474
    %3517 = vmatprep.subr.mxu0 0.0
    %3518 = vmatpush1.msra.mxu0 %v3473
    %3519 = vmatprep.subr.mxu0 0.0
    %3520 = vmatpush2.msra.mxu0 0.0
    %3521 = vmatprep.subr.mxu0 0.0
    %3522 = vmatpush2.msra.mxu0 0.0
    %3523 = vmatprep.subr.mxu0 0.0
    %3524 = vmatpush2.msra.mxu0 0.0
    %3525 = vmatprep.subr.mxu0 0.0
    %3526 = vmatpush2.msra.mxu0 0.0
    %3527 = vmatprep.subr.mxu0 0.0
    %3528 = vmatpush2.msra.mxu0 0.0
    %3529 = vmatprep.subr.mxu0 0.0
    %3530 = vmatpush2.msra.mxu0 0.0
    %3531 = vmatprep.subr.mxu0 0.0
    %3532 = vmatpush2.msra.mxu0 0.0
    %3533 = vmatprep.subr.mxu0 0.0
    %3534 = vmatpush2.msra.mxu0 0.0
    %3535 = vmatprep.subr.mxu0 0.0
    %3536 = vmatpush2.msra.mxu0 0.0
    %3537 = vmatprep.subr.mxu0 0.0
    %3538 = vmatpush2.msra.mxu0 0.0
    %3539 = vmatprep.subr.mxu0 0.0
    %3540 = vmatpush2.msra.mxu0 0.0
    %3541 = vmatprep.subr.mxu0 0.0
    %3542 = vmatpush2.msra.mxu0 0.0
    %3543 = vmatprep.subr.mxu0 0.0
    %3544 = vmatpush2.msra.mxu0 0.0
    %3545 = vmatprep.subr.mxu0 0.0
    %3546 = vmatpush2.msra.mxu0 0.0
    %3547 = vmatprep.subr.mxu0 0.0
    %3548 = vmatpush2.msra.mxu0 0.0
    %3549 = vmatprep.subr.mxu0 0.0
    %3550 = vmatpush2.msra.mxu0 0.0
    %3551 = vmatprep.mubr.f32.mxu0 0.0
    %3552 = vmatmul.mubr.f32.gmra.mxu0 %v3485
    %v3553 = vpop.f32.mrf.mxu0
    %v3554 = vadd.f32 %v3482, %v3553
    %v3555 = vpop.f32.mrf.mxu0
    %3556 = vdwg.mxu0
    %vm3557 = vcmask 74752
    %3558 = vst.msk [vmem:[#allocation2] sm:$0x3] %vm3557, %v3554
    // Predicated region
    $region86: #{vit_forward.1} parent=1 // pred_check
      _
    $region87: #{vit_forward.1} parent=1 // pred_check_branch
      %3560 = sbr.rel (0) target = $region89
    $region88: #{vit_forward.1} parent=1 // pred_region
      %s3562 = ssub.s32 32, 32
      %3563 = vsyncadd [#allocation3], %s3562
      %s3565 = sshll.u32 [#allocation2], 4
      %s3566 = int_to_ptr.vmem [resolvable:$true] %s3565
      %3568 = dma.vmem_to_hbm [thread:$0]  %s3566, 32, %s21, [#allocation3]
    $region89: #{vit_forward.1} parent=1 // pred_fallthru
      _
    // Predicated region
    $region90: #{vit_forward.1} parent=1 // pred_check
      _
    $region91: #{vit_forward.1} parent=1 // pred_check_branch
      %3570 = sbr.rel (0) target = $region93
    $region92: #{vit_forward.1} parent=1 // pred_region
      %3571 = dma.done [#allocation3], 32
    $region93: #{vit_forward.1} parent=1 // pred_fallthru
      _
    %3572 = vsyncpa [#allocation3], 1

</llo_original>
